<compile_context>
chip_gen: v7x
topology: tpu7x:2x2x1
jax: 0.10.0
libtpu: 0.0.40
codegen_flags: <defaults>
</compile_context>

<pallas_src>
import functools

import jax
import jax.numpy as jnp
from jax.experimental import pallas as pl
from jax.experimental.pallas import tpu as pltpu


def _round_up(x, m):
    return ((x + m - 1) // m) * m


# ----------------------------------------------------------------------------
# Fused kernel: stacked GRU layers + Linear + Softmax, single invocation.
# Gate math matches torch.nn.GRU (r, z, n order); bhn stays inside r*(...).
# ----------------------------------------------------------------------------
def _fused_gru_kernel(*refs, num_layers, T, B, Hp):
    """refs layout:
         x_ref (T*B, Dp)
         per layer: wi (Dp|Hp, 3*Hp), wh (Hp, 3*Hp), bi3 (1, 3*Hp), bhn (1, Hp)
         wc (Hp, O), bc (1, O)
         out_ref (B, O)
         scratch: gi_scr (T*B, 3*Hp), ya_scr (T*B, Hp), yb_scr (T*B, Hp)
    """
    x_ref = refs[0]
    idx = 1
    layers = []
    for _ in range(num_layers):
        layers.append(refs[idx:idx + 4])
        idx += 4
    wc_ref, bc_ref = refs[idx], refs[idx + 1]
    out_ref = refs[idx + 2]
    gi_scr, ya_scr, yb_scr = refs[idx + 3], refs[idx + 4], refs[idx + 5]

    h_last = None
    for layer in range(num_layers):
        wi_ref, wh_ref, bi_ref, bhn_ref = layers[layer]
        if layer == 0:
            x_in = x_ref[...]                                   # (T*B, Dp)
        else:
            x_in = (ya_scr if layer % 2 == 1 else yb_scr)[...]  # (T*B, Hp)

        # Hoisted input projection: all T timesteps in ONE fused MXU matmul.
        gi_scr[...] = (jnp.dot(x_in, wi_ref[...],
                               preferred_element_type=jnp.float32)
                       + bi_ref[...])

        wh = wh_ref[...]                                  # (Hp, 3*Hp) fused hidden weights
        # Hoist the (1,Hp)->(B,Hp) broadcast out of the time loop.
        bhn_b = jnp.broadcast_to(bhn_ref[...], (B, Hp))
        is_last = layer == num_layers - 1
        y_ref = None if is_last else (ya_scr if layer % 2 == 0 else yb_scr)

        def step(t, h, wh=wh, bhn_b=bhn_b, y_ref=y_ref):
            row = pl.multiple_of(t * B, 8)                      # B padded to 8 sublanes
            gi = gi_scr[pl.ds(row, B), :]                       # (B, 3*Hp), lane-aligned
            gh = jnp.dot(h, wh, preferred_element_type=jnp.float32)  # (B, 3*Hp)
            # Each gate block starts on a 128-lane boundary (Hp % 128 == 0).
            r = jax.nn.sigmoid(gi[:, 0:Hp] + gh[:, 0:Hp])
            z = jax.nn.sigmoid(gi[:, Hp:2 * Hp] + gh[:, Hp:2 * Hp])
            n = jnp.tanh(gi[:, 2 * Hp:3 * Hp] + r * (gh[:, 2 * Hp:3 * Hp] + bhn_b))
            h_new = (1.0 - z) * n + z * h
            if y_ref is not None:
                y_ref[pl.ds(row, B), :] = h_new                 # lane-dense VMEM store
            return h_new

        h0 = jnp.zeros((B, Hp), jnp.float32)
        h_last = jax.lax.fori_loop(0, T, step, h0, unroll=min(T, 8))

    # Fused classifier head: Linear + Softmax on the final hidden state.
    logits = (jnp.dot(h_last, wc_ref[...], preferred_element_type=jnp.float32)
              + bc_ref[...])
    m = jnp.max(logits, axis=-1, keepdims=True)
    e = jnp.exp(logits - m)
    out_ref[...] = e / jnp.sum(e, axis=-1, keepdims=True)


# ----------------------------------------------------------------------------
# One-time parameter packing: transpose, fuse r/z/n, pre-sum r/z biases, and
# zero-pad every gate block to Hp (multiple of 128 lanes).
# ----------------------------------------------------------------------------
def pack_params(gru_params, cls_w, cls_b):
    H = gru_params[0]["whr"].shape[0]
    D0 = gru_params[0]["wir"].shape[1]
    Hp = _round_up(max(H, 128), 128)
    Dp = _round_up(max(D0, 8), 8)

    layers = []
    for li, p in enumerate(gru_params):
        d_in = p["wir"].shape[1]
        d_in_p = Dp if li == 0 else Hp
        wi = jnp.zeros((d_in_p, 3 * Hp), jnp.float32)
        wh = jnp.zeros((Hp, 3 * Hp), jnp.float32)
        for g, (wn, hn) in enumerate([("wir", "whr"), ("wiz", "whz"), ("win", "whn")]):
            wi = wi.at[:d_in, g * Hp:g * Hp + H].set(p[wn].T)
            wh = wh.at[:H, g * Hp:g * Hp + H].set(p[hn].T)
        bi3 = jnp.zeros((1, 3 * Hp), jnp.float32)
        bi3 = bi3.at[0, 0:H].set(p["bir"] + p["bhr"])
        bi3 = bi3.at[0, Hp:Hp + H].set(p["biz"] + p["bhz"])
        bi3 = bi3.at[0, 2 * Hp:2 * Hp + H].set(p["bin"])
        bhn = jnp.zeros((1, Hp), jnp.float32).at[0, :H].set(p["bhn"])
        layers.append((wi, wh, bi3, bhn))

    O = cls_w.shape[0]
    wc = jnp.zeros((Hp, O), jnp.float32).at[:H, :].set(cls_w.T)
    bc = cls_b[None, :]
    return layers, wc, bc


# ----------------------------------------------------------------------------
# Forward wrapper (one pallas_call for the full model).
# ----------------------------------------------------------------------------
@jax.jit
def baseline_gru_forward(x_btd, packed_layers, wc, bc):
    """x_btd: (B, T, D) batch_first, like the PyTorch module. Returns (B, O)."""
    B, T, D = x_btd.shape
    Hp, O = wc.shape
    Dp = packed_layers[0][0].shape[0]
    Bp = max(8, _round_up(B, 8))             # pad batch to full sublanes
    num_layers = len(packed_layers)

    x_tbd = jnp.transpose(x_btd, (1, 0, 2)).astype(jnp.float32)   # time-major (T, B, D)
    x2 = jnp.pad(x_tbd, ((0, 0), (0, Bp - B), (0, Dp - D))).reshape(T * Bp, Dp)

    flat = [x2]
    in_specs = [pl.BlockSpec(x2.shape, lambda: (0, 0))]
    for tensors in packed_layers:
        for a in tensors:
            flat.append(a)
            in_specs.append(pl.BlockSpec(a.shape, lambda: (0, 0)))
    flat += [wc, bc]
    in_specs += [pl.BlockSpec(wc.shape, lambda: (0, 0)),
                 pl.BlockSpec(bc.shape, lambda: (0, 0))]

    # Size the scoped VMEM limit from the actual footprint; cap below v7x's
    # 64 MiB physical VMEM (v5e/v6e default scoped limits are only 16/32 MiB).
    scratch_bytes = (T * Bp * 3 * Hp + 2 * T * Bp * Hp) * 4
    input_bytes = sum(int(a.size) * 4 for a in flat) + Bp * O * 4
    vmem_limit = int(min(max(2 * (scratch_bytes + input_bytes) + (4 << 20), 32 << 20),
                         56 << 20))

    kernel = functools.partial(_fused_gru_kernel,
                               num_layers=num_layers, T=T, B=Bp, Hp=Hp)
    probs = pl.pallas_call(
        kernel,
        out_shape=jax.ShapeDtypeStruct((Bp, O), jnp.float32),
        in_specs=in_specs,
        out_specs=pl.BlockSpec((Bp, O), lambda: (0, 0)),
        scratch_shapes=[pltpu.VMEM((T * Bp, 3 * Hp), jnp.float32),
                        pltpu.VMEM((T * Bp, Hp), jnp.float32),
                        pltpu.VMEM((T * Bp, Hp), jnp.float32)],
        compiler_params=pltpu.CompilerParams(vmem_limit_bytes=vmem_limit),
    )(*flat)
    return probs[:B]


# ----------------------------------------------------------------------------
# Deterministic parameter init (shapes match nn.GRU / nn.Linear).
# ----------------------------------------------------------------------------
def init_params(key, input_size, hidden_size, num_layers, output_size):
    scale = 1.0 / jnp.sqrt(hidden_size)
    gru_params = []
    for layer in range(num_layers):
        d_in = input_size if layer == 0 else hidden_size
        names = ["wir", "wiz", "win", "whr", "whz", "whn",
                 "bir", "biz", "bin", "bhr", "bhz", "bhn"]
        shapes = [(hidden_size, d_in)] * 3 + [(hidden_size, hidden_size)] * 3 \
               + [(hidden_size,)] * 6
        p = {}
        for name, shape in zip(names, shapes):
            key, sub = jax.random.split(key)
            p[name] = jax.random.uniform(sub, shape, jnp.float32, -scale, scale)
        gru_params.append(p)
    key, k1, k2 = jax.random.split(key, 3)
    cls_w = jax.random.uniform(k1, (output_size, hidden_size), jnp.float32,
                               -scale, scale)
    cls_b = jax.random.uniform(k2, (output_size,), jnp.float32, -scale, scale)
    return gru_params, cls_w, cls_b


# ----------------------------------------------------------------------------
# Pure-JAX reference (same math) for a sanity check.
# ----------------------------------------------------------------------------
def reference_forward(x_btd, gru_params, cls_w, cls_b):
    x_seq = jnp.transpose(x_btd, (1, 0, 2))
    h_last = None
    for p in gru_params:
        B = x_seq.shape[1]
        H = p["whr"].shape[0]
        h = jnp.zeros((B, H), jnp.float32)
        ys = []
        for t in range(x_seq.shape[0]):
            xt = x_seq[t]
            r = jax.nn.sigmoid(xt @ p["wir"].T + p["bir"] + h @ p["whr"].T + p["bhr"])
            z = jax.nn.sigmoid(xt @ p["wiz"].T + p["biz"] + h @ p["whz"].T + p["bhz"])
            n = jnp.tanh(xt @ p["win"].T + p["bin"] + r * (h @ p["whn"].T + p["bhn"]))
            h = (1.0 - z) * n + z * h
            ys.append(h)
        x_seq = jnp.stack(ys, axis=0)
        h_last = h
    logits = h_last @ cls_w.T + cls_b
    return jax.nn.softmax(logits, axis=-1)


if __name__ == "__main__":
    # Small shapes consistent with the module's forward: x is (batch, seq, features)
    batch, seq, input_size = 2, 8, 4
    hidden_size, num_layers, output_size = 32, 2, 5

    key = jax.random.PRNGKey(0)
    key, kx = jax.random.split(key)
    x = jax.random.normal(kx, (batch, seq, input_size), jnp.float32)

    gru_params, cls_w, cls_b = init_params(key, input_size, hidden_size,
                                           num_layers, output_size)
    packed_layers, wc, bc = pack_params(gru_params, cls_w, cls_b)

    out = baseline_gru_forward(x, packed_layers, wc, bc)
    out = jax.block_until_ready(out)

    ref = reference_forward(x, gru_params, cls_w, cls_b)
    assert out.shape == (batch, output_size)
    assert jnp.allclose(out, ref, atol=1e-5, rtol=1e-5)

    print("KERNEL_OK")
</pallas_src>

<mosaic_0001>
module attributes {stable_mosaic.version = 11 : i64} {
  func.func @_fused_gru_kernel(%arg0: memref<64x8xf32, #tpu.memory_space<vmem>>, %arg1: memref<8x384xf32, #tpu.memory_space<vmem>>, %arg2: memref<128x384xf32, #tpu.memory_space<vmem>>, %arg3: memref<1x384xf32, #tpu.memory_space<vmem>>, %arg4: memref<1x128xf32, #tpu.memory_space<vmem>>, %arg5: memref<128x384xf32, #tpu.memory_space<vmem>>, %arg6: memref<128x384xf32, #tpu.memory_space<vmem>>, %arg7: memref<1x384xf32, #tpu.memory_space<vmem>>, %arg8: memref<1x128xf32, #tpu.memory_space<vmem>>, %arg9: memref<128x5xf32, #tpu.memory_space<vmem>>, %arg10: memref<1x5xf32, #tpu.memory_space<vmem>>, %arg11: memref<8x5xf32, #tpu.memory_space<vmem>>, %arg12: memref<64x384xf32, #tpu.memory_space<vmem>>, %arg13: memref<64x128xf32, #tpu.memory_space<vmem>>, %arg14: memref<64x128xf32, #tpu.memory_space<vmem>>) attributes {dimension_semantics = [], scalar_prefetch = 0 : i64, scratch_operands = 3 : i64, tpu.core_type = #tpu.core_type<tc>} {
    %c0 = arith.constant 0 : index
    %c0_0 = arith.constant 0 : index
    %0 = vector.load %arg0[%c0, %c0_0] : memref<64x8xf32, #tpu.memory_space<vmem>>, vector<64x8xf32>
    %c0_1 = arith.constant 0 : index
    %c0_2 = arith.constant 0 : index
    %1 = vector.load %arg1[%c0_1, %c0_2] : memref<8x384xf32, #tpu.memory_space<vmem>>, vector<8x384xf32>
    %cst = arith.constant dense<0.000000e+00> : vector<64x384xf32>
    %2 = tpu.matmul %0, %1, %cst {dimension_numbers = #tpu.dot_dimension_numbers<[1], [0], [0], [1], [0, 0, 1, 1], [], []>} : vector<64x8xf32>, vector<8x384xf32>, vector<64x384xf32> -> vector<64x384xf32>
    %c0_3 = arith.constant 0 : index
    %c0_4 = arith.constant 0 : index
    %3 = vector.load %arg3[%c0_3, %c0_4] : memref<1x384xf32, #tpu.memory_space<vmem>>, vector<1x384xf32>
    %4 = vector.broadcast %3 : vector<1x384xf32> to vector<64x384xf32>
    %5 = arith.addf %2, %4 : vector<64x384xf32>
    %c0_5 = arith.constant 0 : index
    %c0_6 = arith.constant 0 : index
    %6 = vector.load %arg12[%c0_5, %c0_6] : memref<64x384xf32, #tpu.memory_space<vmem>>, vector<64x384xf32>
    tpu.vector_store %arg12[%c0_5, %c0_6], %5 {strides = array<i32>} : memref<64x384xf32, #tpu.memory_space<vmem>>, vector<64x384xf32>,
    %c0_7 = arith.constant 0 : index
    %c0_8 = arith.constant 0 : index
    %7 = vector.load %arg2[%c0_7, %c0_8] : memref<128x384xf32, #tpu.memory_space<vmem>>, vector<128x384xf32>
    %c0_9 = arith.constant 0 : index
    %c0_10 = arith.constant 0 : index
    %8 = vector.load %arg4[%c0_9, %c0_10] : memref<1x128xf32, #tpu.memory_space<vmem>>, vector<1x128xf32>
    %9 = vector.shape_cast %8 : vector<1x128xf32> to vector<1x128xf32>
    %10 = vector.broadcast %9 : vector<1x128xf32> to vector<8x128xf32>
    %cst_11 = arith.constant 0.000000e+00 : f32
    %11 = vector.broadcast %cst_11 : f32 to vector<8x128xf32>
    %c0_i32 = arith.constant 0 : i32
    %c8_i32 = arith.constant 8 : i32
    %12 = arith.muli %c0_i32, %c8_i32 : i32
    %13 = tpu.assume_multiple %12, 8 : i32
    %14 = arith.index_cast %13 : i32 to index
    %c0_12 = arith.constant 0 : index
    %15 = vector.load %arg12[%14, %c0_12] : memref<64x384xf32, #tpu.memory_space<vmem>>, vector<8x384xf32>
    %cst_13 = arith.constant dense<0.000000e+00> : vector<8x384xf32>
    %16 = tpu.matmul %11, %7, %cst_13 {dimension_numbers = #tpu.dot_dimension_numbers<[1], [0], [0], [1], [0, 0, 1, 1], [], []>} : vector<8x128xf32>, vector<128x384xf32>, vector<8x384xf32> -> vector<8x384xf32>
    %17 = vector.extract_strided_slice %15 {offsets = [0, 0], sizes = [8, 128], strides = [1, 1]} : vector<8x384xf32> to vector<8x128xf32>
    %18 = vector.extract_strided_slice %16 {offsets = [0, 0], sizes = [8, 128], strides = [1, 1]} : vector<8x384xf32> to vector<8x128xf32>
    %19 = arith.addf %17, %18 : vector<8x128xf32>
    %20 = arith.negf %19 : vector<8x128xf32>
    %21 = math.exp %20 : vector<8x128xf32>
    %cst_14 = arith.constant 1.000000e+00 : f32
    %22 = vector.broadcast %cst_14 : f32 to vector<8x128xf32>
    %23 = arith.addf %22, %21 : vector<8x128xf32>
    %24 = arith.divf %22, %23 : vector<8x128xf32>
    %25 = vector.extract_strided_slice %15 {offsets = [0, 128], sizes = [8, 128], strides = [1, 1]} : vector<8x384xf32> to vector<8x128xf32>
    %26 = vector.extract_strided_slice %16 {offsets = [0, 128], sizes = [8, 128], strides = [1, 1]} : vector<8x384xf32> to vector<8x128xf32>
    %27 = arith.addf %25, %26 : vector<8x128xf32>
    %28 = arith.negf %27 : vector<8x128xf32>
    %29 = math.exp %28 : vector<8x128xf32>
    %cst_15 = arith.constant 1.000000e+00 : f32
    %30 = vector.broadcast %cst_15 : f32 to vector<8x128xf32>
    %31 = arith.addf %30, %29 : vector<8x128xf32>
    %32 = arith.divf %30, %31 : vector<8x128xf32>
    %33 = vector.extract_strided_slice %15 {offsets = [0, 256], sizes = [8, 128], strides = [1, 1]} : vector<8x384xf32> to vector<8x128xf32>
    %34 = vector.extract_strided_slice %16 {offsets = [0, 256], sizes = [8, 128], strides = [1, 1]} : vector<8x384xf32> to vector<8x128xf32>
    %35 = arith.addf %34, %10 : vector<8x128xf32>
    %36 = arith.mulf %24, %35 : vector<8x128xf32>
    %37 = arith.addf %33, %36 : vector<8x128xf32>
    %38 = math.tanh %37 : vector<8x128xf32>
    %cst_16 = arith.constant 1.000000e+00 : f32
    %39 = vector.broadcast %cst_16 : f32 to vector<8x128xf32>
    %40 = arith.subf %39, %32 : vector<8x128xf32>
    %41 = arith.mulf %40, %38 : vector<8x128xf32>
    %42 = arith.mulf %32, %11 : vector<8x128xf32>
    %43 = arith.addf %41, %42 : vector<8x128xf32>
    %44 = arith.index_cast %13 : i32 to index
    %c0_17 = arith.constant 0 : index
    %45 = vector.load %arg13[%44, %c0_17] : memref<64x128xf32, #tpu.memory_space<vmem>>, vector<8x128xf32>
    tpu.vector_store %arg13[%44, %c0_17], %43 {strides = array<i32>} : memref<64x128xf32, #tpu.memory_space<vmem>>, vector<8x128xf32>,
    %c1_i32 = arith.constant 1 : i32
    %c8_i32_18 = arith.constant 8 : i32
    %46 = arith.muli %c1_i32, %c8_i32_18 : i32
    %47 = tpu.assume_multiple %46, 8 : i32
    %48 = arith.index_cast %47 : i32 to index
    %c0_19 = arith.constant 0 : index
    %49 = vector.load %arg12[%48, %c0_19] : memref<64x384xf32, #tpu.memory_space<vmem>>, vector<8x384xf32>
    %cst_20 = arith.constant dense<0.000000e+00> : vector<8x384xf32>
    %50 = tpu.matmul %43, %7, %cst_20 {dimension_numbers = #tpu.dot_dimension_numbers<[1], [0], [0], [1], [0, 0, 1, 1], [], []>} : vector<8x128xf32>, vector<128x384xf32>, vector<8x384xf32> -> vector<8x384xf32>
    %51 = vector.extract_strided_slice %49 {offsets = [0, 0], sizes = [8, 128], strides = [1, 1]} : vector<8x384xf32> to vector<8x128xf32>
    %52 = vector.extract_strided_slice %50 {offsets = [0, 0], sizes = [8, 128], strides = [1, 1]} : vector<8x384xf32> to vector<8x128xf32>
    %53 = arith.addf %51, %52 : vector<8x128xf32>
    %54 = arith.negf %53 : vector<8x128xf32>
    %55 = math.exp %54 : vector<8x128xf32>
    %cst_21 = arith.constant 1.000000e+00 : f32
    %56 = vector.broadcast %cst_21 : f32 to vector<8x128xf32>
    %57 = arith.addf %56, %55 : vector<8x128xf32>
    %58 = arith.divf %56, %57 : vector<8x128xf32>
    %59 = vector.extract_strided_slice %49 {offsets = [0, 128], sizes = [8, 128], strides = [1, 1]} : vector<8x384xf32> to vector<8x128xf32>
    %60 = vector.extract_strided_slice %50 {offsets = [0, 128], sizes = [8, 128], strides = [1, 1]} : vector<8x384xf32> to vector<8x128xf32>
    %61 = arith.addf %59, %60 : vector<8x128xf32>
    %62 = arith.negf %61 : vector<8x128xf32>
    %63 = math.exp %62 : vector<8x128xf32>
    %cst_22 = arith.constant 1.000000e+00 : f32
    %64 = vector.broadcast %cst_22 : f32 to vector<8x128xf32>
    %65 = arith.addf %64, %63 : vector<8x128xf32>
    %66 = arith.divf %64, %65 : vector<8x128xf32>
    %67 = vector.extract_strided_slice %49 {offsets = [0, 256], sizes = [8, 128], strides = [1, 1]} : vector<8x384xf32> to vector<8x128xf32>
    %68 = vector.extract_strided_slice %50 {offsets = [0, 256], sizes = [8, 128], strides = [1, 1]} : vector<8x384xf32> to vector<8x128xf32>
    %69 = arith.addf %68, %10 : vector<8x128xf32>
    %70 = arith.mulf %58, %69 : vector<8x128xf32>
    %71 = arith.addf %67, %70 : vector<8x128xf32>
    %72 = math.tanh %71 : vector<8x128xf32>
    %cst_23 = arith.constant 1.000000e+00 : f32
    %73 = vector.broadcast %cst_23 : f32 to vector<8x128xf32>
    %74 = arith.subf %73, %66 : vector<8x128xf32>
    %75 = arith.mulf %74, %72 : vector<8x128xf32>
    %76 = arith.mulf %66, %43 : vector<8x128xf32>
    %77 = arith.addf %75, %76 : vector<8x128xf32>
    %78 = arith.index_cast %47 : i32 to index
    %c0_24 = arith.constant 0 : index
    %79 = vector.load %arg13[%78, %c0_24] : memref<64x128xf32, #tpu.memory_space<vmem>>, vector<8x128xf32>
    tpu.vector_store %arg13[%78, %c0_24], %77 {strides = array<i32>} : memref<64x128xf32, #tpu.memory_space<vmem>>, vector<8x128xf32>,
    %c2_i32 = arith.constant 2 : i32
    %c8_i32_25 = arith.constant 8 : i32
    %80 = arith.muli %c2_i32, %c8_i32_25 : i32
    %81 = tpu.assume_multiple %80, 8 : i32
    %82 = arith.index_cast %81 : i32 to index
    %c0_26 = arith.constant 0 : index
    %83 = vector.load %arg12[%82, %c0_26] : memref<64x384xf32, #tpu.memory_space<vmem>>, vector<8x384xf32>
    %cst_27 = arith.constant dense<0.000000e+00> : vector<8x384xf32>
    %84 = tpu.matmul %77, %7, %cst_27 {dimension_numbers = #tpu.dot_dimension_numbers<[1], [0], [0], [1], [0, 0, 1, 1], [], []>} : vector<8x128xf32>, vector<128x384xf32>, vector<8x384xf32> -> vector<8x384xf32>
    %85 = vector.extract_strided_slice %83 {offsets = [0, 0], sizes = [8, 128], strides = [1, 1]} : vector<8x384xf32> to vector<8x128xf32>
    %86 = vector.extract_strided_slice %84 {offsets = [0, 0], sizes = [8, 128], strides = [1, 1]} : vector<8x384xf32> to vector<8x128xf32>
    %87 = arith.addf %85, %86 : vector<8x128xf32>
    %88 = arith.negf %87 : vector<8x128xf32>
    %89 = math.exp %88 : vector<8x128xf32>
    %cst_28 = arith.constant 1.000000e+00 : f32
    %90 = vector.broadcast %cst_28 : f32 to vector<8x128xf32>
    %91 = arith.addf %90, %89 : vector<8x128xf32>
    %92 = arith.divf %90, %91 : vector<8x128xf32>
    %93 = vector.extract_strided_slice %83 {offsets = [0, 128], sizes = [8, 128], strides = [1, 1]} : vector<8x384xf32> to vector<8x128xf32>
    %94 = vector.extract_strided_slice %84 {offsets = [0, 128], sizes = [8, 128], strides = [1, 1]} : vector<8x384xf32> to vector<8x128xf32>
    %95 = arith.addf %93, %94 : vector<8x128xf32>
    %96 = arith.negf %95 : vector<8x128xf32>
    %97 = math.exp %96 : vector<8x128xf32>
    %cst_29 = arith.constant 1.000000e+00 : f32
    %98 = vector.broadcast %cst_29 : f32 to vector<8x128xf32>
    %99 = arith.addf %98, %97 : vector<8x128xf32>
    %100 = arith.divf %98, %99 : vector<8x128xf32>
    %101 = vector.extract_strided_slice %83 {offsets = [0, 256], sizes = [8, 128], strides = [1, 1]} : vector<8x384xf32> to vector<8x128xf32>
    %102 = vector.extract_strided_slice %84 {offsets = [0, 256], sizes = [8, 128], strides = [1, 1]} : vector<8x384xf32> to vector<8x128xf32>
    %103 = arith.addf %102, %10 : vector<8x128xf32>
    %104 = arith.mulf %92, %103 : vector<8x128xf32>
    %105 = arith.addf %101, %104 : vector<8x128xf32>
    %106 = math.tanh %105 : vector<8x128xf32>
    %cst_30 = arith.constant 1.000000e+00 : f32
    %107 = vector.broadcast %cst_30 : f32 to vector<8x128xf32>
    %108 = arith.subf %107, %100 : vector<8x128xf32>
    %109 = arith.mulf %108, %106 : vector<8x128xf32>
    %110 = arith.mulf %100, %77 : vector<8x128xf32>
    %111 = arith.addf %109, %110 : vector<8x128xf32>
    %112 = arith.index_cast %81 : i32 to index
    %c0_31 = arith.constant 0 : index
    %113 = vector.load %arg13[%112, %c0_31] : memref<64x128xf32, #tpu.memory_space<vmem>>, vector<8x128xf32>
    tpu.vector_store %arg13[%112, %c0_31], %111 {strides = array<i32>} : memref<64x128xf32, #tpu.memory_space<vmem>>, vector<8x128xf32>,
    %c3_i32 = arith.constant 3 : i32
    %c8_i32_32 = arith.constant 8 : i32
    %114 = arith.muli %c3_i32, %c8_i32_32 : i32
    %115 = tpu.assume_multiple %114, 8 : i32
    %116 = arith.index_cast %115 : i32 to index
    %c0_33 = arith.constant 0 : index
    %117 = vector.load %arg12[%116, %c0_33] : memref<64x384xf32, #tpu.memory_space<vmem>>, vector<8x384xf32>
    %cst_34 = arith.constant dense<0.000000e+00> : vector<8x384xf32>
    %118 = tpu.matmul %111, %7, %cst_34 {dimension_numbers = #tpu.dot_dimension_numbers<[1], [0], [0], [1], [0, 0, 1, 1], [], []>} : vector<8x128xf32>, vector<128x384xf32>, vector<8x384xf32> -> vector<8x384xf32>
    %119 = vector.extract_strided_slice %117 {offsets = [0, 0], sizes = [8, 128], strides = [1, 1]} : vector<8x384xf32> to vector<8x128xf32>
    %120 = vector.extract_strided_slice %118 {offsets = [0, 0], sizes = [8, 128], strides = [1, 1]} : vector<8x384xf32> to vector<8x128xf32>
    %121 = arith.addf %119, %120 : vector<8x128xf32>
    %122 = arith.negf %121 : vector<8x128xf32>
    %123 = math.exp %122 : vector<8x128xf32>
    %cst_35 = arith.constant 1.000000e+00 : f32
    %124 = vector.broadcast %cst_35 : f32 to vector<8x128xf32>
    %125 = arith.addf %124, %123 : vector<8x128xf32>
    %126 = arith.divf %124, %125 : vector<8x128xf32>
    %127 = vector.extract_strided_slice %117 {offsets = [0, 128], sizes = [8, 128], strides = [1, 1]} : vector<8x384xf32> to vector<8x128xf32>
    %128 = vector.extract_strided_slice %118 {offsets = [0, 128], sizes = [8, 128], strides = [1, 1]} : vector<8x384xf32> to vector<8x128xf32>
    %129 = arith.addf %127, %128 : vector<8x128xf32>
    %130 = arith.negf %129 : vector<8x128xf32>
    %131 = math.exp %130 : vector<8x128xf32>
    %cst_36 = arith.constant 1.000000e+00 : f32
    %132 = vector.broadcast %cst_36 : f32 to vector<8x128xf32>
    %133 = arith.addf %132, %131 : vector<8x128xf32>
    %134 = arith.divf %132, %133 : vector<8x128xf32>
    %135 = vector.extract_strided_slice %117 {offsets = [0, 256], sizes = [8, 128], strides = [1, 1]} : vector<8x384xf32> to vector<8x128xf32>
    %136 = vector.extract_strided_slice %118 {offsets = [0, 256], sizes = [8, 128], strides = [1, 1]} : vector<8x384xf32> to vector<8x128xf32>
    %137 = arith.addf %136, %10 : vector<8x128xf32>
    %138 = arith.mulf %126, %137 : vector<8x128xf32>
    %139 = arith.addf %135, %138 : vector<8x128xf32>
    %140 = math.tanh %139 : vector<8x128xf32>
    %cst_37 = arith.constant 1.000000e+00 : f32
    %141 = vector.broadcast %cst_37 : f32 to vector<8x128xf32>
    %142 = arith.subf %141, %134 : vector<8x128xf32>
    %143 = arith.mulf %142, %140 : vector<8x128xf32>
    %144 = arith.mulf %134, %111 : vector<8x128xf32>
    %145 = arith.addf %143, %144 : vector<8x128xf32>
    %146 = arith.index_cast %115 : i32 to index
    %c0_38 = arith.constant 0 : index
    %147 = vector.load %arg13[%146, %c0_38] : memref<64x128xf32, #tpu.memory_space<vmem>>, vector<8x128xf32>
    tpu.vector_store %arg13[%146, %c0_38], %145 {strides = array<i32>} : memref<64x128xf32, #tpu.memory_space<vmem>>, vector<8x128xf32>,
    %c4_i32 = arith.constant 4 : i32
    %c8_i32_39 = arith.constant 8 : i32
    %148 = arith.muli %c4_i32, %c8_i32_39 : i32
    %149 = tpu.assume_multiple %148, 8 : i32
    %150 = arith.index_cast %149 : i32 to index
    %c0_40 = arith.constant 0 : index
    %151 = vector.load %arg12[%150, %c0_40] : memref<64x384xf32, #tpu.memory_space<vmem>>, vector<8x384xf32>
    %cst_41 = arith.constant dense<0.000000e+00> : vector<8x384xf32>
    %152 = tpu.matmul %145, %7, %cst_41 {dimension_numbers = #tpu.dot_dimension_numbers<[1], [0], [0], [1], [0, 0, 1, 1], [], []>} : vector<8x128xf32>, vector<128x384xf32>, vector<8x384xf32> -> vector<8x384xf32>
    %153 = vector.extract_strided_slice %151 {offsets = [0, 0], sizes = [8, 128], strides = [1, 1]} : vector<8x384xf32> to vector<8x128xf32>
    %154 = vector.extract_strided_slice %152 {offsets = [0, 0], sizes = [8, 128], strides = [1, 1]} : vector<8x384xf32> to vector<8x128xf32>
    %155 = arith.addf %153, %154 : vector<8x128xf32>
    %156 = arith.negf %155 : vector<8x128xf32>
    %157 = math.exp %156 : vector<8x128xf32>
    %cst_42 = arith.constant 1.000000e+00 : f32
    %158 = vector.broadcast %cst_42 : f32 to vector<8x128xf32>
    %159 = arith.addf %158, %157 : vector<8x128xf32>
    %160 = arith.divf %158, %159 : vector<8x128xf32>
    %161 = vector.extract_strided_slice %151 {offsets = [0, 128], sizes = [8, 128], strides = [1, 1]} : vector<8x384xf32> to vector<8x128xf32>
    %162 = vector.extract_strided_slice %152 {offsets = [0, 128], sizes = [8, 128], strides = [1, 1]} : vector<8x384xf32> to vector<8x128xf32>
    %163 = arith.addf %161, %162 : vector<8x128xf32>
    %164 = arith.negf %163 : vector<8x128xf32>
    %165 = math.exp %164 : vector<8x128xf32>
    %cst_43 = arith.constant 1.000000e+00 : f32
    %166 = vector.broadcast %cst_43 : f32 to vector<8x128xf32>
    %167 = arith.addf %166, %165 : vector<8x128xf32>
    %168 = arith.divf %166, %167 : vector<8x128xf32>
    %169 = vector.extract_strided_slice %151 {offsets = [0, 256], sizes = [8, 128], strides = [1, 1]} : vector<8x384xf32> to vector<8x128xf32>
    %170 = vector.extract_strided_slice %152 {offsets = [0, 256], sizes = [8, 128], strides = [1, 1]} : vector<8x384xf32> to vector<8x128xf32>
    %171 = arith.addf %170, %10 : vector<8x128xf32>
    %172 = arith.mulf %160, %171 : vector<8x128xf32>
    %173 = arith.addf %169, %172 : vector<8x128xf32>
    %174 = math.tanh %173 : vector<8x128xf32>
    %cst_44 = arith.constant 1.000000e+00 : f32
    %175 = vector.broadcast %cst_44 : f32 to vector<8x128xf32>
    %176 = arith.subf %175, %168 : vector<8x128xf32>
    %177 = arith.mulf %176, %174 : vector<8x128xf32>
    %178 = arith.mulf %168, %145 : vector<8x128xf32>
    %179 = arith.addf %177, %178 : vector<8x128xf32>
    %180 = arith.index_cast %149 : i32 to index
    %c0_45 = arith.constant 0 : index
    %181 = vector.load %arg13[%180, %c0_45] : memref<64x128xf32, #tpu.memory_space<vmem>>, vector<8x128xf32>
    tpu.vector_store %arg13[%180, %c0_45], %179 {strides = array<i32>} : memref<64x128xf32, #tpu.memory_space<vmem>>, vector<8x128xf32>,
    %c5_i32 = arith.constant 5 : i32
    %c8_i32_46 = arith.constant 8 : i32
    %182 = arith.muli %c5_i32, %c8_i32_46 : i32
    %183 = tpu.assume_multiple %182, 8 : i32
    %184 = arith.index_cast %183 : i32 to index
    %c0_47 = arith.constant 0 : index
    %185 = vector.load %arg12[%184, %c0_47] : memref<64x384xf32, #tpu.memory_space<vmem>>, vector<8x384xf32>
    %cst_48 = arith.constant dense<0.000000e+00> : vector<8x384xf32>
    %186 = tpu.matmul %179, %7, %cst_48 {dimension_numbers = #tpu.dot_dimension_numbers<[1], [0], [0], [1], [0, 0, 1, 1], [], []>} : vector<8x128xf32>, vector<128x384xf32>, vector<8x384xf32> -> vector<8x384xf32>
    %187 = vector.extract_strided_slice %185 {offsets = [0, 0], sizes = [8, 128], strides = [1, 1]} : vector<8x384xf32> to vector<8x128xf32>
    %188 = vector.extract_strided_slice %186 {offsets = [0, 0], sizes = [8, 128], strides = [1, 1]} : vector<8x384xf32> to vector<8x128xf32>
    %189 = arith.addf %187, %188 : vector<8x128xf32>
    %190 = arith.negf %189 : vector<8x128xf32>
    %191 = math.exp %190 : vector<8x128xf32>
    %cst_49 = arith.constant 1.000000e+00 : f32
    %192 = vector.broadcast %cst_49 : f32 to vector<8x128xf32>
    %193 = arith.addf %192, %191 : vector<8x128xf32>
    %194 = arith.divf %192, %193 : vector<8x128xf32>
    %195 = vector.extract_strided_slice %185 {offsets = [0, 128], sizes = [8, 128], strides = [1, 1]} : vector<8x384xf32> to vector<8x128xf32>
    %196 = vector.extract_strided_slice %186 {offsets = [0, 128], sizes = [8, 128], strides = [1, 1]} : vector<8x384xf32> to vector<8x128xf32>
    %197 = arith.addf %195, %196 : vector<8x128xf32>
    %198 = arith.negf %197 : vector<8x128xf32>
    %199 = math.exp %198 : vector<8x128xf32>
    %cst_50 = arith.constant 1.000000e+00 : f32
    %200 = vector.broadcast %cst_50 : f32 to vector<8x128xf32>
    %201 = arith.addf %200, %199 : vector<8x128xf32>
    %202 = arith.divf %200, %201 : vector<8x128xf32>
    %203 = vector.extract_strided_slice %185 {offsets = [0, 256], sizes = [8, 128], strides = [1, 1]} : vector<8x384xf32> to vector<8x128xf32>
    %204 = vector.extract_strided_slice %186 {offsets = [0, 256], sizes = [8, 128], strides = [1, 1]} : vector<8x384xf32> to vector<8x128xf32>
    %205 = arith.addf %204, %10 : vector<8x128xf32>
    %206 = arith.mulf %194, %205 : vector<8x128xf32>
    %207 = arith.addf %203, %206 : vector<8x128xf32>
    %208 = math.tanh %207 : vector<8x128xf32>
    %cst_51 = arith.constant 1.000000e+00 : f32
    %209 = vector.broadcast %cst_51 : f32 to vector<8x128xf32>
    %210 = arith.subf %209, %202 : vector<8x128xf32>
    %211 = arith.mulf %210, %208 : vector<8x128xf32>
    %212 = arith.mulf %202, %179 : vector<8x128xf32>
    %213 = arith.addf %211, %212 : vector<8x128xf32>
    %214 = arith.index_cast %183 : i32 to index
    %c0_52 = arith.constant 0 : index
    %215 = vector.load %arg13[%214, %c0_52] : memref<64x128xf32, #tpu.memory_space<vmem>>, vector<8x128xf32>
    tpu.vector_store %arg13[%214, %c0_52], %213 {strides = array<i32>} : memref<64x128xf32, #tpu.memory_space<vmem>>, vector<8x128xf32>,
    %c6_i32 = arith.constant 6 : i32
    %c8_i32_53 = arith.constant 8 : i32
    %216 = arith.muli %c6_i32, %c8_i32_53 : i32
    %217 = tpu.assume_multiple %216, 8 : i32
    %218 = arith.index_cast %217 : i32 to index
    %c0_54 = arith.constant 0 : index
    %219 = vector.load %arg12[%218, %c0_54] : memref<64x384xf32, #tpu.memory_space<vmem>>, vector<8x384xf32>
    %cst_55 = arith.constant dense<0.000000e+00> : vector<8x384xf32>
    %220 = tpu.matmul %213, %7, %cst_55 {dimension_numbers = #tpu.dot_dimension_numbers<[1], [0], [0], [1], [0, 0, 1, 1], [], []>} : vector<8x128xf32>, vector<128x384xf32>, vector<8x384xf32> -> vector<8x384xf32>
    %221 = vector.extract_strided_slice %219 {offsets = [0, 0], sizes = [8, 128], strides = [1, 1]} : vector<8x384xf32> to vector<8x128xf32>
    %222 = vector.extract_strided_slice %220 {offsets = [0, 0], sizes = [8, 128], strides = [1, 1]} : vector<8x384xf32> to vector<8x128xf32>
    %223 = arith.addf %221, %222 : vector<8x128xf32>
    %224 = arith.negf %223 : vector<8x128xf32>
    %225 = math.exp %224 : vector<8x128xf32>
    %cst_56 = arith.constant 1.000000e+00 : f32
    %226 = vector.broadcast %cst_56 : f32 to vector<8x128xf32>
    %227 = arith.addf %226, %225 : vector<8x128xf32>
    %228 = arith.divf %226, %227 : vector<8x128xf32>
    %229 = vector.extract_strided_slice %219 {offsets = [0, 128], sizes = [8, 128], strides = [1, 1]} : vector<8x384xf32> to vector<8x128xf32>
    %230 = vector.extract_strided_slice %220 {offsets = [0, 128], sizes = [8, 128], strides = [1, 1]} : vector<8x384xf32> to vector<8x128xf32>
    %231 = arith.addf %229, %230 : vector<8x128xf32>
    %232 = arith.negf %231 : vector<8x128xf32>
    %233 = math.exp %232 : vector<8x128xf32>
    %cst_57 = arith.constant 1.000000e+00 : f32
    %234 = vector.broadcast %cst_57 : f32 to vector<8x128xf32>
    %235 = arith.addf %234, %233 : vector<8x128xf32>
    %236 = arith.divf %234, %235 : vector<8x128xf32>
    %237 = vector.extract_strided_slice %219 {offsets = [0, 256], sizes = [8, 128], strides = [1, 1]} : vector<8x384xf32> to vector<8x128xf32>
    %238 = vector.extract_strided_slice %220 {offsets = [0, 256], sizes = [8, 128], strides = [1, 1]} : vector<8x384xf32> to vector<8x128xf32>
    %239 = arith.addf %238, %10 : vector<8x128xf32>
    %240 = arith.mulf %228, %239 : vector<8x128xf32>
    %241 = arith.addf %237, %240 : vector<8x128xf32>
    %242 = math.tanh %241 : vector<8x128xf32>
    %cst_58 = arith.constant 1.000000e+00 : f32
    %243 = vector.broadcast %cst_58 : f32 to vector<8x128xf32>
    %244 = arith.subf %243, %236 : vector<8x128xf32>
    %245 = arith.mulf %244, %242 : vector<8x128xf32>
    %246 = arith.mulf %236, %213 : vector<8x128xf32>
    %247 = arith.addf %245, %246 : vector<8x128xf32>
    %248 = arith.index_cast %217 : i32 to index
    %c0_59 = arith.constant 0 : index
    %249 = vector.load %arg13[%248, %c0_59] : memref<64x128xf32, #tpu.memory_space<vmem>>, vector<8x128xf32>
    tpu.vector_store %arg13[%248, %c0_59], %247 {strides = array<i32>} : memref<64x128xf32, #tpu.memory_space<vmem>>, vector<8x128xf32>,
    %c7_i32 = arith.constant 7 : i32
    %c8_i32_60 = arith.constant 8 : i32
    %250 = arith.muli %c7_i32, %c8_i32_60 : i32
    %251 = tpu.assume_multiple %250, 8 : i32
    %252 = arith.index_cast %251 : i32 to index
    %c0_61 = arith.constant 0 : index
    %253 = vector.load %arg12[%252, %c0_61] : memref<64x384xf32, #tpu.memory_space<vmem>>, vector<8x384xf32>
    %cst_62 = arith.constant dense<0.000000e+00> : vector<8x384xf32>
    %254 = tpu.matmul %247, %7, %cst_62 {dimension_numbers = #tpu.dot_dimension_numbers<[1], [0], [0], [1], [0, 0, 1, 1], [], []>} : vector<8x128xf32>, vector<128x384xf32>, vector<8x384xf32> -> vector<8x384xf32>
    %255 = vector.extract_strided_slice %253 {offsets = [0, 0], sizes = [8, 128], strides = [1, 1]} : vector<8x384xf32> to vector<8x128xf32>
    %256 = vector.extract_strided_slice %254 {offsets = [0, 0], sizes = [8, 128], strides = [1, 1]} : vector<8x384xf32> to vector<8x128xf32>
    %257 = arith.addf %255, %256 : vector<8x128xf32>
    %258 = arith.negf %257 : vector<8x128xf32>
    %259 = math.exp %258 : vector<8x128xf32>
    %cst_63 = arith.constant 1.000000e+00 : f32
    %260 = vector.broadcast %cst_63 : f32 to vector<8x128xf32>
    %261 = arith.addf %260, %259 : vector<8x128xf32>
    %262 = arith.divf %260, %261 : vector<8x128xf32>
    %263 = vector.extract_strided_slice %253 {offsets = [0, 128], sizes = [8, 128], strides = [1, 1]} : vector<8x384xf32> to vector<8x128xf32>
    %264 = vector.extract_strided_slice %254 {offsets = [0, 128], sizes = [8, 128], strides = [1, 1]} : vector<8x384xf32> to vector<8x128xf32>
    %265 = arith.addf %263, %264 : vector<8x128xf32>
    %266 = arith.negf %265 : vector<8x128xf32>
    %267 = math.exp %266 : vector<8x128xf32>
    %cst_64 = arith.constant 1.000000e+00 : f32
    %268 = vector.broadcast %cst_64 : f32 to vector<8x128xf32>
    %269 = arith.addf %268, %267 : vector<8x128xf32>
    %270 = arith.divf %268, %269 : vector<8x128xf32>
    %271 = vector.extract_strided_slice %253 {offsets = [0, 256], sizes = [8, 128], strides = [1, 1]} : vector<8x384xf32> to vector<8x128xf32>
    %272 = vector.extract_strided_slice %254 {offsets = [0, 256], sizes = [8, 128], strides = [1, 1]} : vector<8x384xf32> to vector<8x128xf32>
    %273 = arith.addf %272, %10 : vector<8x128xf32>
    %274 = arith.mulf %262, %273 : vector<8x128xf32>
    %275 = arith.addf %271, %274 : vector<8x128xf32>
    %276 = math.tanh %275 : vector<8x128xf32>
    %cst_65 = arith.constant 1.000000e+00 : f32
    %277 = vector.broadcast %cst_65 : f32 to vector<8x128xf32>
    %278 = arith.subf %277, %270 : vector<8x128xf32>
    %279 = arith.mulf %278, %276 : vector<8x128xf32>
    %280 = arith.mulf %270, %247 : vector<8x128xf32>
    %281 = arith.addf %279, %280 : vector<8x128xf32>
    %282 = arith.index_cast %251 : i32 to index
    %c0_66 = arith.constant 0 : index
    %283 = vector.load %arg13[%282, %c0_66] : memref<64x128xf32, #tpu.memory_space<vmem>>, vector<8x128xf32>
    tpu.vector_store %arg13[%282, %c0_66], %281 {strides = array<i32>} : memref<64x128xf32, #tpu.memory_space<vmem>>, vector<8x128xf32>,
    %c8_i32_67 = arith.constant 8 : i32
    %c0_68 = arith.constant 0 : index
    %c0_69 = arith.constant 0 : index
    %284 = vector.load %arg13[%c0_68, %c0_69] : memref<64x128xf32, #tpu.memory_space<vmem>>, vector<64x128xf32>
    %c0_70 = arith.constant 0 : index
    %c0_71 = arith.constant 0 : index
    %285 = vector.load %arg5[%c0_70, %c0_71] : memref<128x384xf32, #tpu.memory_space<vmem>>, vector<128x384xf32>
    %cst_72 = arith.constant dense<0.000000e+00> : vector<64x384xf32>
    %286 = tpu.matmul %284, %285, %cst_72 {dimension_numbers = #tpu.dot_dimension_numbers<[1], [0], [0], [1], [0, 0, 1, 1], [], []>} : vector<64x128xf32>, vector<128x384xf32>, vector<64x384xf32> -> vector<64x384xf32>
    %c0_73 = arith.constant 0 : index
    %c0_74 = arith.constant 0 : index
    %287 = vector.load %arg7[%c0_73, %c0_74] : memref<1x384xf32, #tpu.memory_space<vmem>>, vector<1x384xf32>
    %288 = vector.broadcast %287 : vector<1x384xf32> to vector<64x384xf32>
    %289 = arith.addf %286, %288 : vector<64x384xf32>
    %c0_75 = arith.constant 0 : index
    %c0_76 = arith.constant 0 : index
    %290 = vector.load %arg12[%c0_75, %c0_76] : memref<64x384xf32, #tpu.memory_space<vmem>>, vector<64x384xf32>
    tpu.vector_store %arg12[%c0_75, %c0_76], %289 {strides = array<i32>} : memref<64x384xf32, #tpu.memory_space<vmem>>, vector<64x384xf32>,
    %c0_77 = arith.constant 0 : index
    %c0_78 = arith.constant 0 : index
    %291 = vector.load %arg6[%c0_77, %c0_78] : memref<128x384xf32, #tpu.memory_space<vmem>>, vector<128x384xf32>
    %c0_79 = arith.constant 0 : index
    %c0_80 = arith.constant 0 : index
    %292 = vector.load %arg8[%c0_79, %c0_80] : memref<1x128xf32, #tpu.memory_space<vmem>>, vector<1x128xf32>
    %293 = vector.shape_cast %292 : vector<1x128xf32> to vector<1x128xf32>
    %294 = vector.broadcast %293 : vector<1x128xf32> to vector<8x128xf32>
    %cst_81 = arith.constant 0.000000e+00 : f32
    %295 = vector.broadcast %cst_81 : f32 to vector<8x128xf32>
    %c0_i32_82 = arith.constant 0 : i32
    %c8_i32_83 = arith.constant 8 : i32
    %296 = arith.muli %c0_i32_82, %c8_i32_83 : i32
    %297 = tpu.assume_multiple %296, 8 : i32
    %298 = arith.index_cast %297 : i32 to index
    %c0_84 = arith.constant 0 : index
    %299 = vector.load %arg12[%298, %c0_84] : memref<64x384xf32, #tpu.memory_space<vmem>>, vector<8x384xf32>
    %cst_85 = arith.constant dense<0.000000e+00> : vector<8x384xf32>
    %300 = tpu.matmul %295, %291, %cst_85 {dimension_numbers = #tpu.dot_dimension_numbers<[1], [0], [0], [1], [0, 0, 1, 1], [], []>} : vector<8x128xf32>, vector<128x384xf32>, vector<8x384xf32> -> vector<8x384xf32>
    %301 = vector.extract_strided_slice %299 {offsets = [0, 0], sizes = [8, 128], strides = [1, 1]} : vector<8x384xf32> to vector<8x128xf32>
    %302 = vector.extract_strided_slice %300 {offsets = [0, 0], sizes = [8, 128], strides = [1, 1]} : vector<8x384xf32> to vector<8x128xf32>
    %303 = arith.addf %301, %302 : vector<8x128xf32>
    %304 = arith.negf %303 : vector<8x128xf32>
    %305 = math.exp %304 : vector<8x128xf32>
    %cst_86 = arith.constant 1.000000e+00 : f32
    %306 = vector.broadcast %cst_86 : f32 to vector<8x128xf32>
    %307 = arith.addf %306, %305 : vector<8x128xf32>
    %308 = arith.divf %306, %307 : vector<8x128xf32>
    %309 = vector.extract_strided_slice %299 {offsets = [0, 128], sizes = [8, 128], strides = [1, 1]} : vector<8x384xf32> to vector<8x128xf32>
    %310 = vector.extract_strided_slice %300 {offsets = [0, 128], sizes = [8, 128], strides = [1, 1]} : vector<8x384xf32> to vector<8x128xf32>
    %311 = arith.addf %309, %310 : vector<8x128xf32>
    %312 = arith.negf %311 : vector<8x128xf32>
    %313 = math.exp %312 : vector<8x128xf32>
    %cst_87 = arith.constant 1.000000e+00 : f32
    %314 = vector.broadcast %cst_87 : f32 to vector<8x128xf32>
    %315 = arith.addf %314, %313 : vector<8x128xf32>
    %316 = arith.divf %314, %315 : vector<8x128xf32>
    %317 = vector.extract_strided_slice %299 {offsets = [0, 256], sizes = [8, 128], strides = [1, 1]} : vector<8x384xf32> to vector<8x128xf32>
    %318 = vector.extract_strided_slice %300 {offsets = [0, 256], sizes = [8, 128], strides = [1, 1]} : vector<8x384xf32> to vector<8x128xf32>
    %319 = arith.addf %318, %294 : vector<8x128xf32>
    %320 = arith.mulf %308, %319 : vector<8x128xf32>
    %321 = arith.addf %317, %320 : vector<8x128xf32>
    %322 = math.tanh %321 : vector<8x128xf32>
    %cst_88 = arith.constant 1.000000e+00 : f32
    %323 = vector.broadcast %cst_88 : f32 to vector<8x128xf32>
    %324 = arith.subf %323, %316 : vector<8x128xf32>
    %325 = arith.mulf %324, %322 : vector<8x128xf32>
    %326 = arith.mulf %316, %295 : vector<8x128xf32>
    %327 = arith.addf %325, %326 : vector<8x128xf32>
    %c1_i32_89 = arith.constant 1 : i32
    %c8_i32_90 = arith.constant 8 : i32
    %328 = arith.muli %c1_i32_89, %c8_i32_90 : i32
    %329 = tpu.assume_multiple %328, 8 : i32
    %330 = arith.index_cast %329 : i32 to index
    %c0_91 = arith.constant 0 : index
    %331 = vector.load %arg12[%330, %c0_91] : memref<64x384xf32, #tpu.memory_space<vmem>>, vector<8x384xf32>
    %cst_92 = arith.constant dense<0.000000e+00> : vector<8x384xf32>
    %332 = tpu.matmul %327, %291, %cst_92 {dimension_numbers = #tpu.dot_dimension_numbers<[1], [0], [0], [1], [0, 0, 1, 1], [], []>} : vector<8x128xf32>, vector<128x384xf32>, vector<8x384xf32> -> vector<8x384xf32>
    %333 = vector.extract_strided_slice %331 {offsets = [0, 0], sizes = [8, 128], strides = [1, 1]} : vector<8x384xf32> to vector<8x128xf32>
    %334 = vector.extract_strided_slice %332 {offsets = [0, 0], sizes = [8, 128], strides = [1, 1]} : vector<8x384xf32> to vector<8x128xf32>
    %335 = arith.addf %333, %334 : vector<8x128xf32>
    %336 = arith.negf %335 : vector<8x128xf32>
    %337 = math.exp %336 : vector<8x128xf32>
    %cst_93 = arith.constant 1.000000e+00 : f32
    %338 = vector.broadcast %cst_93 : f32 to vector<8x128xf32>
    %339 = arith.addf %338, %337 : vector<8x128xf32>
    %340 = arith.divf %338, %339 : vector<8x128xf32>
    %341 = vector.extract_strided_slice %331 {offsets = [0, 128], sizes = [8, 128], strides = [1, 1]} : vector<8x384xf32> to vector<8x128xf32>
    %342 = vector.extract_strided_slice %332 {offsets = [0, 128], sizes = [8, 128], strides = [1, 1]} : vector<8x384xf32> to vector<8x128xf32>
    %343 = arith.addf %341, %342 : vector<8x128xf32>
    %344 = arith.negf %343 : vector<8x128xf32>
    %345 = math.exp %344 : vector<8x128xf32>
    %cst_94 = arith.constant 1.000000e+00 : f32
    %346 = vector.broadcast %cst_94 : f32 to vector<8x128xf32>
    %347 = arith.addf %346, %345 : vector<8x128xf32>
    %348 = arith.divf %346, %347 : vector<8x128xf32>
    %349 = vector.extract_strided_slice %331 {offsets = [0, 256], sizes = [8, 128], strides = [1, 1]} : vector<8x384xf32> to vector<8x128xf32>
    %350 = vector.extract_strided_slice %332 {offsets = [0, 256], sizes = [8, 128], strides = [1, 1]} : vector<8x384xf32> to vector<8x128xf32>
    %351 = arith.addf %350, %294 : vector<8x128xf32>
    %352 = arith.mulf %340, %351 : vector<8x128xf32>
    %353 = arith.addf %349, %352 : vector<8x128xf32>
    %354 = math.tanh %353 : vector<8x128xf32>
    %cst_95 = arith.constant 1.000000e+00 : f32
    %355 = vector.broadcast %cst_95 : f32 to vector<8x128xf32>
    %356 = arith.subf %355, %348 : vector<8x128xf32>
    %357 = arith.mulf %356, %354 : vector<8x128xf32>
    %358 = arith.mulf %348, %327 : vector<8x128xf32>
    %359 = arith.addf %357, %358 : vector<8x128xf32>
    %c2_i32_96 = arith.constant 2 : i32
    %c8_i32_97 = arith.constant 8 : i32
    %360 = arith.muli %c2_i32_96, %c8_i32_97 : i32
    %361 = tpu.assume_multiple %360, 8 : i32
    %362 = arith.index_cast %361 : i32 to index
    %c0_98 = arith.constant 0 : index
    %363 = vector.load %arg12[%362, %c0_98] : memref<64x384xf32, #tpu.memory_space<vmem>>, vector<8x384xf32>
    %cst_99 = arith.constant dense<0.000000e+00> : vector<8x384xf32>
    %364 = tpu.matmul %359, %291, %cst_99 {dimension_numbers = #tpu.dot_dimension_numbers<[1], [0], [0], [1], [0, 0, 1, 1], [], []>} : vector<8x128xf32>, vector<128x384xf32>, vector<8x384xf32> -> vector<8x384xf32>
    %365 = vector.extract_strided_slice %363 {offsets = [0, 0], sizes = [8, 128], strides = [1, 1]} : vector<8x384xf32> to vector<8x128xf32>
    %366 = vector.extract_strided_slice %364 {offsets = [0, 0], sizes = [8, 128], strides = [1, 1]} : vector<8x384xf32> to vector<8x128xf32>
    %367 = arith.addf %365, %366 : vector<8x128xf32>
    %368 = arith.negf %367 : vector<8x128xf32>
    %369 = math.exp %368 : vector<8x128xf32>
    %cst_100 = arith.constant 1.000000e+00 : f32
    %370 = vector.broadcast %cst_100 : f32 to vector<8x128xf32>
    %371 = arith.addf %370, %369 : vector<8x128xf32>
    %372 = arith.divf %370, %371 : vector<8x128xf32>
    %373 = vector.extract_strided_slice %363 {offsets = [0, 128], sizes = [8, 128], strides = [1, 1]} : vector<8x384xf32> to vector<8x128xf32>
    %374 = vector.extract_strided_slice %364 {offsets = [0, 128], sizes = [8, 128], strides = [1, 1]} : vector<8x384xf32> to vector<8x128xf32>
    %375 = arith.addf %373, %374 : vector<8x128xf32>
    %376 = arith.negf %375 : vector<8x128xf32>
    %377 = math.exp %376 : vector<8x128xf32>
    %cst_101 = arith.constant 1.000000e+00 : f32
    %378 = vector.broadcast %cst_101 : f32 to vector<8x128xf32>
    %379 = arith.addf %378, %377 : vector<8x128xf32>
    %380 = arith.divf %378, %379 : vector<8x128xf32>
    %381 = vector.extract_strided_slice %363 {offsets = [0, 256], sizes = [8, 128], strides = [1, 1]} : vector<8x384xf32> to vector<8x128xf32>
    %382 = vector.extract_strided_slice %364 {offsets = [0, 256], sizes = [8, 128], strides = [1, 1]} : vector<8x384xf32> to vector<8x128xf32>
    %383 = arith.addf %382, %294 : vector<8x128xf32>
    %384 = arith.mulf %372, %383 : vector<8x128xf32>
    %385 = arith.addf %381, %384 : vector<8x128xf32>
    %386 = math.tanh %385 : vector<8x128xf32>
    %cst_102 = arith.constant 1.000000e+00 : f32
    %387 = vector.broadcast %cst_102 : f32 to vector<8x128xf32>
    %388 = arith.subf %387, %380 : vector<8x128xf32>
    %389 = arith.mulf %388, %386 : vector<8x128xf32>
    %390 = arith.mulf %380, %359 : vector<8x128xf32>
    %391 = arith.addf %389, %390 : vector<8x128xf32>
    %c3_i32_103 = arith.constant 3 : i32
    %c8_i32_104 = arith.constant 8 : i32
    %392 = arith.muli %c3_i32_103, %c8_i32_104 : i32
    %393 = tpu.assume_multiple %392, 8 : i32
    %394 = arith.index_cast %393 : i32 to index
    %c0_105 = arith.constant 0 : index
    %395 = vector.load %arg12[%394, %c0_105] : memref<64x384xf32, #tpu.memory_space<vmem>>, vector<8x384xf32>
    %cst_106 = arith.constant dense<0.000000e+00> : vector<8x384xf32>
    %396 = tpu.matmul %391, %291, %cst_106 {dimension_numbers = #tpu.dot_dimension_numbers<[1], [0], [0], [1], [0, 0, 1, 1], [], []>} : vector<8x128xf32>, vector<128x384xf32>, vector<8x384xf32> -> vector<8x384xf32>
    %397 = vector.extract_strided_slice %395 {offsets = [0, 0], sizes = [8, 128], strides = [1, 1]} : vector<8x384xf32> to vector<8x128xf32>
    %398 = vector.extract_strided_slice %396 {offsets = [0, 0], sizes = [8, 128], strides = [1, 1]} : vector<8x384xf32> to vector<8x128xf32>
    %399 = arith.addf %397, %398 : vector<8x128xf32>
    %400 = arith.negf %399 : vector<8x128xf32>
    %401 = math.exp %400 : vector<8x128xf32>
    %cst_107 = arith.constant 1.000000e+00 : f32
    %402 = vector.broadcast %cst_107 : f32 to vector<8x128xf32>
    %403 = arith.addf %402, %401 : vector<8x128xf32>
    %404 = arith.divf %402, %403 : vector<8x128xf32>
    %405 = vector.extract_strided_slice %395 {offsets = [0, 128], sizes = [8, 128], strides = [1, 1]} : vector<8x384xf32> to vector<8x128xf32>
    %406 = vector.extract_strided_slice %396 {offsets = [0, 128], sizes = [8, 128], strides = [1, 1]} : vector<8x384xf32> to vector<8x128xf32>
    %407 = arith.addf %405, %406 : vector<8x128xf32>
    %408 = arith.negf %407 : vector<8x128xf32>
    %409 = math.exp %408 : vector<8x128xf32>
    %cst_108 = arith.constant 1.000000e+00 : f32
    %410 = vector.broadcast %cst_108 : f32 to vector<8x128xf32>
    %411 = arith.addf %410, %409 : vector<8x128xf32>
    %412 = arith.divf %410, %411 : vector<8x128xf32>
    %413 = vector.extract_strided_slice %395 {offsets = [0, 256], sizes = [8, 128], strides = [1, 1]} : vector<8x384xf32> to vector<8x128xf32>
    %414 = vector.extract_strided_slice %396 {offsets = [0, 256], sizes = [8, 128], strides = [1, 1]} : vector<8x384xf32> to vector<8x128xf32>
    %415 = arith.addf %414, %294 : vector<8x128xf32>
    %416 = arith.mulf %404, %415 : vector<8x128xf32>
    %417 = arith.addf %413, %416 : vector<8x128xf32>
    %418 = math.tanh %417 : vector<8x128xf32>
    %cst_109 = arith.constant 1.000000e+00 : f32
    %419 = vector.broadcast %cst_109 : f32 to vector<8x128xf32>
    %420 = arith.subf %419, %412 : vector<8x128xf32>
    %421 = arith.mulf %420, %418 : vector<8x128xf32>
    %422 = arith.mulf %412, %391 : vector<8x128xf32>
    %423 = arith.addf %421, %422 : vector<8x128xf32>
    %c4_i32_110 = arith.constant 4 : i32
    %c8_i32_111 = arith.constant 8 : i32
    %424 = arith.muli %c4_i32_110, %c8_i32_111 : i32
    %425 = tpu.assume_multiple %424, 8 : i32
    %426 = arith.index_cast %425 : i32 to index
    %c0_112 = arith.constant 0 : index
    %427 = vector.load %arg12[%426, %c0_112] : memref<64x384xf32, #tpu.memory_space<vmem>>, vector<8x384xf32>
    %cst_113 = arith.constant dense<0.000000e+00> : vector<8x384xf32>
    %428 = tpu.matmul %423, %291, %cst_113 {dimension_numbers = #tpu.dot_dimension_numbers<[1], [0], [0], [1], [0, 0, 1, 1], [], []>} : vector<8x128xf32>, vector<128x384xf32>, vector<8x384xf32> -> vector<8x384xf32>
    %429 = vector.extract_strided_slice %427 {offsets = [0, 0], sizes = [8, 128], strides = [1, 1]} : vector<8x384xf32> to vector<8x128xf32>
    %430 = vector.extract_strided_slice %428 {offsets = [0, 0], sizes = [8, 128], strides = [1, 1]} : vector<8x384xf32> to vector<8x128xf32>
    %431 = arith.addf %429, %430 : vector<8x128xf32>
    %432 = arith.negf %431 : vector<8x128xf32>
    %433 = math.exp %432 : vector<8x128xf32>
    %cst_114 = arith.constant 1.000000e+00 : f32
    %434 = vector.broadcast %cst_114 : f32 to vector<8x128xf32>
    %435 = arith.addf %434, %433 : vector<8x128xf32>
    %436 = arith.divf %434, %435 : vector<8x128xf32>
    %437 = vector.extract_strided_slice %427 {offsets = [0, 128], sizes = [8, 128], strides = [1, 1]} : vector<8x384xf32> to vector<8x128xf32>
    %438 = vector.extract_strided_slice %428 {offsets = [0, 128], sizes = [8, 128], strides = [1, 1]} : vector<8x384xf32> to vector<8x128xf32>
    %439 = arith.addf %437, %438 : vector<8x128xf32>
    %440 = arith.negf %439 : vector<8x128xf32>
    %441 = math.exp %440 : vector<8x128xf32>
    %cst_115 = arith.constant 1.000000e+00 : f32
    %442 = vector.broadcast %cst_115 : f32 to vector<8x128xf32>
    %443 = arith.addf %442, %441 : vector<8x128xf32>
    %444 = arith.divf %442, %443 : vector<8x128xf32>
    %445 = vector.extract_strided_slice %427 {offsets = [0, 256], sizes = [8, 128], strides = [1, 1]} : vector<8x384xf32> to vector<8x128xf32>
    %446 = vector.extract_strided_slice %428 {offsets = [0, 256], sizes = [8, 128], strides = [1, 1]} : vector<8x384xf32> to vector<8x128xf32>
    %447 = arith.addf %446, %294 : vector<8x128xf32>
    %448 = arith.mulf %436, %447 : vector<8x128xf32>
    %449 = arith.addf %445, %448 : vector<8x128xf32>
    %450 = math.tanh %449 : vector<8x128xf32>
    %cst_116 = arith.constant 1.000000e+00 : f32
    %451 = vector.broadcast %cst_116 : f32 to vector<8x128xf32>
    %452 = arith.subf %451, %444 : vector<8x128xf32>
    %453 = arith.mulf %452, %450 : vector<8x128xf32>
    %454 = arith.mulf %444, %423 : vector<8x128xf32>
    %455 = arith.addf %453, %454 : vector<8x128xf32>
    %c5_i32_117 = arith.constant 5 : i32
    %c8_i32_118 = arith.constant 8 : i32
    %456 = arith.muli %c5_i32_117, %c8_i32_118 : i32
    %457 = tpu.assume_multiple %456, 8 : i32
    %458 = arith.index_cast %457 : i32 to index
    %c0_119 = arith.constant 0 : index
    %459 = vector.load %arg12[%458, %c0_119] : memref<64x384xf32, #tpu.memory_space<vmem>>, vector<8x384xf32>
    %cst_120 = arith.constant dense<0.000000e+00> : vector<8x384xf32>
    %460 = tpu.matmul %455, %291, %cst_120 {dimension_numbers = #tpu.dot_dimension_numbers<[1], [0], [0], [1], [0, 0, 1, 1], [], []>} : vector<8x128xf32>, vector<128x384xf32>, vector<8x384xf32> -> vector<8x384xf32>
    %461 = vector.extract_strided_slice %459 {offsets = [0, 0], sizes = [8, 128], strides = [1, 1]} : vector<8x384xf32> to vector<8x128xf32>
    %462 = vector.extract_strided_slice %460 {offsets = [0, 0], sizes = [8, 128], strides = [1, 1]} : vector<8x384xf32> to vector<8x128xf32>
    %463 = arith.addf %461, %462 : vector<8x128xf32>
    %464 = arith.negf %463 : vector<8x128xf32>
    %465 = math.exp %464 : vector<8x128xf32>
    %cst_121 = arith.constant 1.000000e+00 : f32
    %466 = vector.broadcast %cst_121 : f32 to vector<8x128xf32>
    %467 = arith.addf %466, %465 : vector<8x128xf32>
    %468 = arith.divf %466, %467 : vector<8x128xf32>
    %469 = vector.extract_strided_slice %459 {offsets = [0, 128], sizes = [8, 128], strides = [1, 1]} : vector<8x384xf32> to vector<8x128xf32>
    %470 = vector.extract_strided_slice %460 {offsets = [0, 128], sizes = [8, 128], strides = [1, 1]} : vector<8x384xf32> to vector<8x128xf32>
    %471 = arith.addf %469, %470 : vector<8x128xf32>
    %472 = arith.negf %471 : vector<8x128xf32>
    %473 = math.exp %472 : vector<8x128xf32>
    %cst_122 = arith.constant 1.000000e+00 : f32
    %474 = vector.broadcast %cst_122 : f32 to vector<8x128xf32>
    %475 = arith.addf %474, %473 : vector<8x128xf32>
    %476 = arith.divf %474, %475 : vector<8x128xf32>
    %477 = vector.extract_strided_slice %459 {offsets = [0, 256], sizes = [8, 128], strides = [1, 1]} : vector<8x384xf32> to vector<8x128xf32>
    %478 = vector.extract_strided_slice %460 {offsets = [0, 256], sizes = [8, 128], strides = [1, 1]} : vector<8x384xf32> to vector<8x128xf32>
    %479 = arith.addf %478, %294 : vector<8x128xf32>
    %480 = arith.mulf %468, %479 : vector<8x128xf32>
    %481 = arith.addf %477, %480 : vector<8x128xf32>
    %482 = math.tanh %481 : vector<8x128xf32>
    %cst_123 = arith.constant 1.000000e+00 : f32
    %483 = vector.broadcast %cst_123 : f32 to vector<8x128xf32>
    %484 = arith.subf %483, %476 : vector<8x128xf32>
    %485 = arith.mulf %484, %482 : vector<8x128xf32>
    %486 = arith.mulf %476, %455 : vector<8x128xf32>
    %487 = arith.addf %485, %486 : vector<8x128xf32>
    %c6_i32_124 = arith.constant 6 : i32
    %c8_i32_125 = arith.constant 8 : i32
    %488 = arith.muli %c6_i32_124, %c8_i32_125 : i32
    %489 = tpu.assume_multiple %488, 8 : i32
    %490 = arith.index_cast %489 : i32 to index
    %c0_126 = arith.constant 0 : index
    %491 = vector.load %arg12[%490, %c0_126] : memref<64x384xf32, #tpu.memory_space<vmem>>, vector<8x384xf32>
    %cst_127 = arith.constant dense<0.000000e+00> : vector<8x384xf32>
    %492 = tpu.matmul %487, %291, %cst_127 {dimension_numbers = #tpu.dot_dimension_numbers<[1], [0], [0], [1], [0, 0, 1, 1], [], []>} : vector<8x128xf32>, vector<128x384xf32>, vector<8x384xf32> -> vector<8x384xf32>
    %493 = vector.extract_strided_slice %491 {offsets = [0, 0], sizes = [8, 128], strides = [1, 1]} : vector<8x384xf32> to vector<8x128xf32>
    %494 = vector.extract_strided_slice %492 {offsets = [0, 0], sizes = [8, 128], strides = [1, 1]} : vector<8x384xf32> to vector<8x128xf32>
    %495 = arith.addf %493, %494 : vector<8x128xf32>
    %496 = arith.negf %495 : vector<8x128xf32>
    %497 = math.exp %496 : vector<8x128xf32>
    %cst_128 = arith.constant 1.000000e+00 : f32
    %498 = vector.broadcast %cst_128 : f32 to vector<8x128xf32>
    %499 = arith.addf %498, %497 : vector<8x128xf32>
    %500 = arith.divf %498, %499 : vector<8x128xf32>
    %501 = vector.extract_strided_slice %491 {offsets = [0, 128], sizes = [8, 128], strides = [1, 1]} : vector<8x384xf32> to vector<8x128xf32>
    %502 = vector.extract_strided_slice %492 {offsets = [0, 128], sizes = [8, 128], strides = [1, 1]} : vector<8x384xf32> to vector<8x128xf32>
    %503 = arith.addf %501, %502 : vector<8x128xf32>
    %504 = arith.negf %503 : vector<8x128xf32>
    %505 = math.exp %504 : vector<8x128xf32>
    %cst_129 = arith.constant 1.000000e+00 : f32
    %506 = vector.broadcast %cst_129 : f32 to vector<8x128xf32>
    %507 = arith.addf %506, %505 : vector<8x128xf32>
    %508 = arith.divf %506, %507 : vector<8x128xf32>
    %509 = vector.extract_strided_slice %491 {offsets = [0, 256], sizes = [8, 128], strides = [1, 1]} : vector<8x384xf32> to vector<8x128xf32>
    %510 = vector.extract_strided_slice %492 {offsets = [0, 256], sizes = [8, 128], strides = [1, 1]} : vector<8x384xf32> to vector<8x128xf32>
    %511 = arith.addf %510, %294 : vector<8x128xf32>
    %512 = arith.mulf %500, %511 : vector<8x128xf32>
    %513 = arith.addf %509, %512 : vector<8x128xf32>
    %514 = math.tanh %513 : vector<8x128xf32>
    %cst_130 = arith.constant 1.000000e+00 : f32
    %515 = vector.broadcast %cst_130 : f32 to vector<8x128xf32>
    %516 = arith.subf %515, %508 : vector<8x128xf32>
    %517 = arith.mulf %516, %514 : vector<8x128xf32>
    %518 = arith.mulf %508, %487 : vector<8x128xf32>
    %519 = arith.addf %517, %518 : vector<8x128xf32>
    %c7_i32_131 = arith.constant 7 : i32
    %c8_i32_132 = arith.constant 8 : i32
    %520 = arith.muli %c7_i32_131, %c8_i32_132 : i32
    %521 = tpu.assume_multiple %520, 8 : i32
    %522 = arith.index_cast %521 : i32 to index
    %c0_133 = arith.constant 0 : index
    %523 = vector.load %arg12[%522, %c0_133] : memref<64x384xf32, #tpu.memory_space<vmem>>, vector<8x384xf32>
    %cst_134 = arith.constant dense<0.000000e+00> : vector<8x384xf32>
    %524 = tpu.matmul %519, %291, %cst_134 {dimension_numbers = #tpu.dot_dimension_numbers<[1], [0], [0], [1], [0, 0, 1, 1], [], []>} : vector<8x128xf32>, vector<128x384xf32>, vector<8x384xf32> -> vector<8x384xf32>
    %525 = vector.extract_strided_slice %523 {offsets = [0, 0], sizes = [8, 128], strides = [1, 1]} : vector<8x384xf32> to vector<8x128xf32>
    %526 = vector.extract_strided_slice %524 {offsets = [0, 0], sizes = [8, 128], strides = [1, 1]} : vector<8x384xf32> to vector<8x128xf32>
    %527 = arith.addf %525, %526 : vector<8x128xf32>
    %528 = arith.negf %527 : vector<8x128xf32>
    %529 = math.exp %528 : vector<8x128xf32>
    %cst_135 = arith.constant 1.000000e+00 : f32
    %530 = vector.broadcast %cst_135 : f32 to vector<8x128xf32>
    %531 = arith.addf %530, %529 : vector<8x128xf32>
    %532 = arith.divf %530, %531 : vector<8x128xf32>
    %533 = vector.extract_strided_slice %523 {offsets = [0, 128], sizes = [8, 128], strides = [1, 1]} : vector<8x384xf32> to vector<8x128xf32>
    %534 = vector.extract_strided_slice %524 {offsets = [0, 128], sizes = [8, 128], strides = [1, 1]} : vector<8x384xf32> to vector<8x128xf32>
    %535 = arith.addf %533, %534 : vector<8x128xf32>
    %536 = arith.negf %535 : vector<8x128xf32>
    %537 = math.exp %536 : vector<8x128xf32>
    %cst_136 = arith.constant 1.000000e+00 : f32
    %538 = vector.broadcast %cst_136 : f32 to vector<8x128xf32>
    %539 = arith.addf %538, %537 : vector<8x128xf32>
    %540 = arith.divf %538, %539 : vector<8x128xf32>
    %541 = vector.extract_strided_slice %523 {offsets = [0, 256], sizes = [8, 128], strides = [1, 1]} : vector<8x384xf32> to vector<8x128xf32>
    %542 = vector.extract_strided_slice %524 {offsets = [0, 256], sizes = [8, 128], strides = [1, 1]} : vector<8x384xf32> to vector<8x128xf32>
    %543 = arith.addf %542, %294 : vector<8x128xf32>
    %544 = arith.mulf %532, %543 : vector<8x128xf32>
    %545 = arith.addf %541, %544 : vector<8x128xf32>
    %546 = math.tanh %545 : vector<8x128xf32>
    %cst_137 = arith.constant 1.000000e+00 : f32
    %547 = vector.broadcast %cst_137 : f32 to vector<8x128xf32>
    %548 = arith.subf %547, %540 : vector<8x128xf32>
    %549 = arith.mulf %548, %546 : vector<8x128xf32>
    %550 = arith.mulf %540, %519 : vector<8x128xf32>
    %551 = arith.addf %549, %550 : vector<8x128xf32>
    %c8_i32_138 = arith.constant 8 : i32
    %c0_139 = arith.constant 0 : index
    %c0_140 = arith.constant 0 : index
    %552 = vector.load %arg9[%c0_139, %c0_140] : memref<128x5xf32, #tpu.memory_space<vmem>>, vector<128x5xf32>
    %cst_141 = arith.constant dense<0.000000e+00> : vector<8x5xf32>
    %553 = tpu.matmul %551, %552, %cst_141 {dimension_numbers = #tpu.dot_dimension_numbers<[1], [0], [0], [1], [0, 0, 1, 1], [], []>} : vector<8x128xf32>, vector<128x5xf32>, vector<8x5xf32> -> vector<8x5xf32>
    %c0_142 = arith.constant 0 : index
    %c0_143 = arith.constant 0 : index
    %554 = vector.load %arg10[%c0_142, %c0_143] : memref<1x5xf32, #tpu.memory_space<vmem>>, vector<1x5xf32>
    %555 = vector.broadcast %554 : vector<1x5xf32> to vector<8x5xf32>
    %556 = arith.addf %553, %555 : vector<8x5xf32>
    %cst_144 = arith.constant dense<0xFF800000> : vector<8xf32>
    %557 = vector.multi_reduction <maximumf>, %556, %cst_144 [1] : vector<8x5xf32> to vector<8xf32>
    %558 = vector.shape_cast %557 : vector<8xf32> to vector<8x1xf32>
    %559 = vector.broadcast %558 : vector<8x1xf32> to vector<8x5xf32>
    %560 = arith.subf %556, %559 : vector<8x5xf32>
    %561 = math.exp %560 : vector<8x5xf32>
    %cst_145 = arith.constant dense<0.000000e+00> : vector<8xf32>
    %562 = vector.multi_reduction <add>, %561, %cst_145 [1] : vector<8x5xf32> to vector<8xf32>
    %563 = vector.shape_cast %562 : vector<8xf32> to vector<8x1xf32>
    %564 = vector.broadcast %563 : vector<8x1xf32> to vector<8x5xf32>
    %565 = arith.divf %561, %564 : vector<8x5xf32>
    %c0_146 = arith.constant 0 : index
    %c0_147 = arith.constant 0 : index
    %566 = vector.load %arg11[%c0_146, %c0_147] : memref<8x5xf32, #tpu.memory_space<vmem>>, vector<8x5xf32>
    tpu.vector_store %arg11[%c0_146, %c0_147], %565 {strides = array<i32>} : memref<8x5xf32, #tpu.memory_space<vmem>>, vector<8x5xf32>,
    return
  }
}

</mosaic_0001>

<llo_original>
// kernel: baseline_gru_forward.1
$region0: #{baseline_gru_forward.1}
  #allocation0 [shape = 'u32[]', space=smem, size = 0x4, offset = 0x4, fixed_abs, tag = 'smem constant byte address 0x4 - core index']
  #allocation1 [shape = 'u32[144,128]{1,0:T(1,128)}', space=vmem, size = 0x12000, scoped, tag = 'internal scratch']
  #allocation2 [shape = 'f32[64,384]{1,0:T(8,128)}', space=vmem, size = 0x18000, scoped, tag = 'scratch operand']
  #allocation3 [shape = 'f32[64,128]{1,0:T(8,128)}', space=vmem, size = 0x8000, scoped, tag = 'scratch operand']
  #allocation4 [shape = 'f32[64,128]{1,0:T(8,128)}', space=vmem, size = 0x8000, scoped, tag = 'scratch operand']
  %s0 = inlined_call_operand.vmem [shape: f32[64,8], index: 0, kind: input, shape index: {}]
  %s1 = inlined_call_operand.vmem [shape: f32[8,384], index: 1, kind: input, shape index: {}]
  %s2 = inlined_call_operand.hbm [shape: f32[128,384], index: 2, kind: input, shape index: {}]
  %s3 = inlined_call_operand.vmem [shape: f32[1,384], index: 3, kind: input, shape index: {}]
  %s4 = inlined_call_operand.vmem [shape: f32[1,128], index: 4, kind: input, shape index: {}]
  %s5 = inlined_call_operand.hbm [shape: f32[128,384], index: 5, kind: input, shape index: {}]
  %s6 = inlined_call_operand.hbm [shape: f32[128,384], index: 6, kind: input, shape index: {}]
  %s7 = inlined_call_operand.vmem [shape: f32[1,384], index: 7, kind: input, shape index: {}]
  %s8 = inlined_call_operand.vmem [shape: f32[1,128], index: 8, kind: input, shape index: {}]
  %s9 = inlined_call_operand.vmem [shape: f32[128,5], index: 9, kind: input, shape index: {}]
  %s10 = inlined_call_operand.vmem [shape: f32[1,5], index: 10, kind: input, shape index: {}]
  %s11 = inlined_call_operand.vmem [shape: f32[8,5], index: 11, kind: output, shape index: {}]
  %s12 = sld [smem:[#allocation0]]
  $region66: #{baseline_gru_forward.1} parent=0
    _
  %s14 = ssub.s32 1, %s12
  %s15 = scalar_select 0, %s14, %s12
  $region1: #{baseline_gru_forward.1} parent=0
    #allocation5 [shape = 'u8[196608]{0}', space=vmem, size = 0x30000, scoped, tag = 'input window, operand 2, single buffered']
    #allocation6 [shape = 's32[1]{0}', space=sflag, size = 0x4, scoped, tag = 'scoped memory for baseline_gru_forward.1']
    #allocation7 [shape = 'u8[196608]{0}', space=vmem, size = 0x30000, scoped, tag = 'input window, operand 5, single buffered']
    #allocation8 [shape = 's32[1]{0}', space=sflag, size = 0x4, scoped, tag = 'scoped memory for baseline_gru_forward.1']
    #allocation9 [shape = 'u8[196608]{0}', space=vmem, size = 0x30000, scoped, tag = 'input window, operand 6, single buffered']
    %16 = vsyncpa [#allocation6], 0
    %17 = vsyncpa [#allocation8], 0
    // Predicated region
    $region2: #{baseline_gru_forward.1} parent=1 // pred_check
      _
    $region3: #{baseline_gru_forward.1} parent=1 // pred_check_branch
      %19 = sbr.rel (0) target = $region5
    $region4: #{baseline_gru_forward.1} parent=1 // pred_region
      _
    $region5: #{baseline_gru_forward.1} parent=1 // pred_fallthru
      _
    // Predicated region
    $region6: #{baseline_gru_forward.1} parent=1 // pred_check
      _
    $region7: #{baseline_gru_forward.1} parent=1 // pred_check_branch
      %21 = sbr.rel (0) target = $region9
    $region8: #{baseline_gru_forward.1} parent=1 // pred_region
      _
    $region9: #{baseline_gru_forward.1} parent=1 // pred_fallthru
      _
    // Predicated region
    $region10: #{baseline_gru_forward.1} parent=1 // pred_check
      _
    $region11: #{baseline_gru_forward.1} parent=1 // pred_check_branch
      %23 = sbr.rel (0) target = $region13
    $region12: #{baseline_gru_forward.1} parent=1 // pred_region
      %s25 = ssub.s32 6144, 6144
      %26 = vsyncadd [#allocation6], %s25
      %s27 = sshll.u32 [#allocation5], 4
      %s28 = int_to_ptr.vmem [resolvable:$true] %s27
      %33 = dma.hbm_to_vmem [thread:$0]  %s2, 6144, %s28, [#allocation6], 384, 384, 24
    $region13: #{baseline_gru_forward.1} parent=1 // pred_fallthru
      _
    // Predicated region
    $region14: #{baseline_gru_forward.1} parent=1 // pred_check
      _
    $region15: #{baseline_gru_forward.1} parent=1 // pred_check_branch
      %35 = sbr.rel (0) target = $region17
    $region16: #{baseline_gru_forward.1} parent=1 // pred_region
      _
    $region17: #{baseline_gru_forward.1} parent=1 // pred_fallthru
      _
    // Predicated region
    $region18: #{baseline_gru_forward.1} parent=1 // pred_check
      _
    $region19: #{baseline_gru_forward.1} parent=1 // pred_check_branch
      %37 = sbr.rel (0) target = $region21
    $region20: #{baseline_gru_forward.1} parent=1 // pred_region
      _
    $region21: #{baseline_gru_forward.1} parent=1 // pred_fallthru
      _
    // Predicated region
    $region22: #{baseline_gru_forward.1} parent=1 // pred_check
      _
    $region23: #{baseline_gru_forward.1} parent=1 // pred_check_branch
      %39 = sbr.rel (0) target = $region25
    $region24: #{baseline_gru_forward.1} parent=1 // pred_region
      %s41 = ssub.s32 6144, 6144
      %42 = vsyncadd [#allocation8], %s41
      %s43 = sshll.u32 [#allocation7], 4
      %s44 = int_to_ptr.vmem [resolvable:$true] %s43
      %49 = dma.hbm_to_vmem [thread:$0]  %s5, 6144, %s44, [#allocation8], 384, 384, 24
    $region25: #{baseline_gru_forward.1} parent=1 // pred_fallthru
      _
    // Predicated region
    $region26: #{baseline_gru_forward.1} parent=1 // pred_check
      _
    $region27: #{baseline_gru_forward.1} parent=1 // pred_check_branch
      %51 = sbr.rel (0) target = $region29
    $region28: #{baseline_gru_forward.1} parent=1 // pred_region
      %s53 = ssub.s32 6144, 6144
      %54 = vsyncadd [#allocation8], %s53
      %s55 = sshll.u32 [#allocation9], 4
      %s56 = int_to_ptr.vmem [resolvable:$true] %s55
      %61 = dma.hbm_to_vmem [thread:$0]  %s6, 6144, %s56, [#allocation8], 384, 384, 24
    $region29: #{baseline_gru_forward.1} parent=1 // pred_fallthru
      _
    // Predicated region
    $region30: #{baseline_gru_forward.1} parent=1 // pred_check
      _
    $region31: #{baseline_gru_forward.1} parent=1 // pred_check_branch
      %63 = sbr.rel (0) target = $region33
    $region32: #{baseline_gru_forward.1} parent=1 // pred_region
      _
    $region33: #{baseline_gru_forward.1} parent=1 // pred_fallthru
      _
    // Predicated region
    $region34: #{baseline_gru_forward.1} parent=1 // pred_check
      _
    $region35: #{baseline_gru_forward.1} parent=1 // pred_check_branch
      %65 = sbr.rel (0) target = $region37
    $region36: #{baseline_gru_forward.1} parent=1 // pred_region
      _
    $region37: #{baseline_gru_forward.1} parent=1 // pred_fallthru
      _
    // Predicated region
    $region38: #{baseline_gru_forward.1} parent=1 // pred_check
      _
    $region39: #{baseline_gru_forward.1} parent=1 // pred_check_branch
      %67 = sbr.rel (0) target = $region41
    $region40: #{baseline_gru_forward.1} parent=1 // pred_region
      _
    $region41: #{baseline_gru_forward.1} parent=1 // pred_fallthru
      _
    // Predicated region
    $region42: #{baseline_gru_forward.1} parent=1 // pred_check
      _
    $region43: #{baseline_gru_forward.1} parent=1 // pred_check_branch
      %69 = sbr.rel (0) target = $region45
    $region44: #{baseline_gru_forward.1} parent=1 // pred_region
      _
    $region45: #{baseline_gru_forward.1} parent=1 // pred_fallthru
      _
    // Predicated region
    $region46: #{baseline_gru_forward.1} parent=1 // pred_check
      _
    $region47: #{baseline_gru_forward.1} parent=1 // pred_check_branch
      %71 = sbr.rel (0) target = $region49
    $region48: #{baseline_gru_forward.1} parent=1 // pred_region
      %72 = dma.done [#allocation6], 6144
    $region49: #{baseline_gru_forward.1} parent=1 // pred_fallthru
      _
    // Predicated region
    $region50: #{baseline_gru_forward.1} parent=1 // pred_check
      _
    $region51: #{baseline_gru_forward.1} parent=1 // pred_check_branch
      %74 = sbr.rel (0) target = $region53
    $region52: #{baseline_gru_forward.1} parent=1 // pred_region
      %75 = dma.done [#allocation8], 6144
    $region53: #{baseline_gru_forward.1} parent=1 // pred_fallthru
      _
    // Predicated region
    $region54: #{baseline_gru_forward.1} parent=1 // pred_check
      _
    $region55: #{baseline_gru_forward.1} parent=1 // pred_check_branch
      %77 = sbr.rel (0) target = $region57
    $region56: #{baseline_gru_forward.1} parent=1 // pred_region
      %78 = dma.done [#allocation8], 6144
    $region57: #{baseline_gru_forward.1} parent=1 // pred_fallthru
      _
    %v79 = vld [vmem:[%s0] sm:$0xff]
    %v80 = vld [vmem:[%s0 + $0x8] sm:$0xff]
    %v81 = vld [vmem:[%s0 + $0x10] sm:$0xff]
    %v82 = vld [vmem:[%s0 + $0x18] sm:$0xff]
    %v83 = vld [vmem:[%s0 + $0x20] sm:$0xff]
    %v84 = vld [vmem:[%s0 + $0x28] sm:$0xff]
    %v85 = vld [vmem:[%s0 + $0x30] sm:$0xff]
    %v86 = vld [vmem:[%s0 + $0x38] sm:$0xff]
    %v87 = vld [vmem:[%s1] sm:$0xff]
    %v88 = vld [vmem:[%s1 + $0x8] sm:$0xff]
    %v89 = vld [vmem:[%s1 + $0x10] sm:$0xff]
    %v90 = vld [vmem:[%s3] sm:$0x7]
    %v92 = vlaneseq
    %v93 = vshrl.u32 %v92, 7
    %v94 = vsub.s32 0, %v93
    %v95 = vrot.slane %v90, %v94
    %v96 = vlaneseq
    %v97 = vshrl.u32 %v96, 7
    %v98 = vsub.s32 1, %v97
    %v99 = vrot.slane %v90, %v98
    %v100 = vlaneseq
    %v101 = vshrl.u32 %v100, 7
    %v102 = vsub.s32 2, %v101
    %v103 = vrot.slane %v90, %v102
    %vm107 = vcmask 64512
    %v109 = vsel %vm107, %v79, 0
    %v112 = vsel %vm107, %v80, 0
    %v115 = vsel %vm107, %v81, 0
    %v118 = vsel %vm107, %v82, 0
    %v121 = vsel %vm107, %v83, 0
    %v124 = vsel %vm107, %v84, 0
    %v127 = vsel %vm107, %v85, 0
    %v130 = vsel %vm107, %v86, 0
    %132 = vmatprep.subr.mxu0 %v88
    %133 = vmatpush1.msra.mxu0 %v87
    %134 = vmatprep.subr.mxu0 0.0
    %135 = vmatpush1.msra.mxu0 0.0
    %136 = vmatprep.subr.mxu0 0.0
    %137 = vmatpush1.msra.mxu0 0.0
    %138 = vmatprep.subr.mxu0 0.0
    %139 = vmatpush1.msra.mxu0 0.0
    %140 = vmatprep.subr.mxu0 0.0
    %141 = vmatpush1.msra.mxu0 0.0
    %142 = vmatprep.subr.mxu0 0.0
    %143 = vmatpush1.msra.mxu0 0.0
    %144 = vmatprep.subr.mxu0 0.0
    %145 = vmatpush1.msra.mxu0 0.0
    %146 = vmatprep.subr.mxu0 0.0
    %147 = vmatpush1.msra.mxu0 0.0
    %148 = vmatprep.subr.mxu0 0.0
    %149 = vmatpush1.msra.mxu0 0.0
    %150 = vmatprep.subr.mxu0 0.0
    %151 = vmatpush1.msra.mxu0 0.0
    %152 = vmatprep.subr.mxu0 0.0
    %153 = vmatpush1.msra.mxu0 0.0
    %154 = vmatprep.subr.mxu0 0.0
    %155 = vmatpush1.msra.mxu0 0.0
    %156 = vmatprep.subr.mxu0 0.0
    %157 = vmatpush1.msra.mxu0 0.0
    %158 = vmatprep.subr.mxu0 0.0
    %159 = vmatpush1.msra.mxu0 0.0
    %160 = vmatprep.subr.mxu0 0.0
    %161 = vmatpush1.msra.mxu0 0.0
    %162 = vmatprep.subr.mxu0 0.0
    %163 = vmatpush1.msra.mxu0 0.0
    %164 = vmatprep.subr.mxu0 0.0
    %165 = vmatpush1.msra.mxu0 0.0
    %166 = vmatprep.subr.mxu0 0.0
    %167 = vmatpush1.msra.mxu0 0.0
    %168 = vmatprep.subr.mxu0 0.0
    %169 = vmatpush1.msra.mxu0 0.0
    %170 = vmatprep.subr.mxu0 0.0
    %171 = vmatpush1.msra.mxu0 0.0
    %172 = vmatprep.subr.mxu0 0.0
    %173 = vmatpush1.msra.mxu0 0.0
    %174 = vmatprep.subr.mxu0 0.0
    %175 = vmatpush1.msra.mxu0 0.0
    %176 = vmatprep.subr.mxu0 0.0
    %177 = vmatpush1.msra.mxu0 0.0
    %178 = vmatprep.subr.mxu0 0.0
    %179 = vmatpush1.msra.mxu0 0.0
    %180 = vmatprep.subr.mxu0 0.0
    %181 = vmatpush1.msra.mxu0 0.0
    %182 = vmatprep.subr.mxu0 0.0
    %183 = vmatpush1.msra.mxu0 0.0
    %184 = vmatprep.subr.mxu0 0.0
    %185 = vmatpush1.msra.mxu0 0.0
    %186 = vmatprep.subr.mxu0 0.0
    %187 = vmatpush1.msra.mxu0 0.0
    %188 = vmatprep.subr.mxu0 0.0
    %189 = vmatpush1.msra.mxu0 0.0
    %190 = vmatprep.subr.mxu0 0.0
    %191 = vmatpush1.msra.mxu0 0.0
    %192 = vmatprep.subr.mxu0 0.0
    %193 = vmatpush1.msra.mxu0 0.0
    %194 = vmatprep.subr.mxu0 0.0
    %195 = vmatpush1.msra.mxu0 0.0
    %196 = vmatprep.mubr.f32.mxu0 0.0
    %197 = vmatmul.mubr.f32.gmra.mrb[0].mxu0 %v109
    %v198 = vpop.f32.mrb[0].mxu0
    %v199 = vadd.f32 %v95, %v198
    %v200 = vpop.f32.mrb[0].mxu0
    %v201 = vadd.f32 %v99, %v200
    %202 = vmatprep.mubr.f32.mxu0 0.0
    %203 = vmatmul.mubr.f32.gmra.mrb[0].mxu0 %v112
    %v204 = vpop.f32.mrb[0].mxu0
    %v205 = vadd.f32 %v95, %v204
    %v206 = vpop.f32.mrb[0].mxu0
    %v207 = vadd.f32 %v99, %v206
    %208 = vmatprep.mubr.f32.mxu0 0.0
    %209 = vmatmul.mubr.f32.gmra.mrb[0].mxu0 %v115
    %v210 = vpop.f32.mrb[0].mxu0
    %v211 = vadd.f32 %v95, %v210
    %v212 = vpop.f32.mrb[0].mxu0
    %v213 = vadd.f32 %v99, %v212
    %214 = vmatprep.mubr.f32.mxu0 0.0
    %215 = vmatmul.mubr.f32.gmra.mrb[0].mxu0 %v118
    %v216 = vpop.f32.mrb[0].mxu0
    %v217 = vadd.f32 %v95, %v216
    %v218 = vpop.f32.mrb[0].mxu0
    %v219 = vadd.f32 %v99, %v218
    %220 = vmatprep.mubr.f32.mxu0 0.0
    %221 = vmatmul.mubr.f32.gmra.mrb[0].mxu0 %v121
    %v222 = vpop.f32.mrb[0].mxu0
    %v223 = vadd.f32 %v95, %v222
    %v224 = vpop.f32.mrb[0].mxu0
    %v225 = vadd.f32 %v99, %v224
    %226 = vmatprep.mubr.f32.mxu0 0.0
    %227 = vmatmul.mubr.f32.gmra.mrb[0].mxu0 %v124
    %v228 = vpop.f32.mrb[0].mxu0
    %v229 = vadd.f32 %v95, %v228
    %v230 = vpop.f32.mrb[0].mxu0
    %v231 = vadd.f32 %v99, %v230
    %232 = vmatprep.mubr.f32.mxu0 0.0
    %233 = vmatmul.mubr.f32.gmra.mrb[0].mxu0 %v127
    %v234 = vpop.f32.mrb[0].mxu0
    %v235 = vadd.f32 %v95, %v234
    %v236 = vpop.f32.mrb[0].mxu0
    %v237 = vadd.f32 %v99, %v236
    %238 = vmatprep.mubr.f32.mxu0 0.0
    %239 = vmatmul.mubr.f32.gmra.mrb[0].mxu0 %v130
    %v240 = vpop.f32.mrb[0].mxu0
    %v241 = vadd.f32 %v95, %v240
    %v242 = vpop.f32.mrb[0].mxu0
    %v243 = vadd.f32 %v99, %v242
    %244 = vdwg.mxu0
    %245 = vmatprep.subr.mxu0 0.0
    %246 = vmatpush1.msra.mxu0 %v89
    %247 = vmatprep.subr.mxu0 0.0
    %248 = vmatpush1.msra.mxu0 0.0
    %249 = vmatprep.subr.mxu0 0.0
    %250 = vmatpush1.msra.mxu0 0.0
    %251 = vmatprep.subr.mxu0 0.0
    %252 = vmatpush1.msra.mxu0 0.0
    %253 = vmatprep.subr.mxu0 0.0
    %254 = vmatpush1.msra.mxu0 0.0
    %255 = vmatprep.subr.mxu0 0.0
    %256 = vmatpush1.msra.mxu0 0.0
    %257 = vmatprep.subr.mxu0 0.0
    %258 = vmatpush1.msra.mxu0 0.0
    %259 = vmatprep.subr.mxu0 0.0
    %260 = vmatpush1.msra.mxu0 0.0
    %261 = vmatprep.subr.mxu0 0.0
    %262 = vmatpush1.msra.mxu0 0.0
    %263 = vmatprep.subr.mxu0 0.0
    %264 = vmatpush1.msra.mxu0 0.0
    %265 = vmatprep.subr.mxu0 0.0
    %266 = vmatpush1.msra.mxu0 0.0
    %267 = vmatprep.subr.mxu0 0.0
    %268 = vmatpush1.msra.mxu0 0.0
    %269 = vmatprep.subr.mxu0 0.0
    %270 = vmatpush1.msra.mxu0 0.0
    %271 = vmatprep.subr.mxu0 0.0
    %272 = vmatpush1.msra.mxu0 0.0
    %273 = vmatprep.subr.mxu0 0.0
    %274 = vmatpush1.msra.mxu0 0.0
    %275 = vmatprep.subr.mxu0 0.0
    %276 = vmatpush1.msra.mxu0 0.0
    %277 = vmatprep.subr.mxu0 0.0
    %278 = vmatpush1.msra.mxu0 0.0
    %279 = vmatprep.subr.mxu0 0.0
    %280 = vmatpush1.msra.mxu0 0.0
    %281 = vmatprep.subr.mxu0 0.0
    %282 = vmatpush1.msra.mxu0 0.0
    %283 = vmatprep.subr.mxu0 0.0
    %284 = vmatpush1.msra.mxu0 0.0
    %285 = vmatprep.subr.mxu0 0.0
    %286 = vmatpush1.msra.mxu0 0.0
    %287 = vmatprep.subr.mxu0 0.0
    %288 = vmatpush1.msra.mxu0 0.0
    %289 = vmatprep.subr.mxu0 0.0
    %290 = vmatpush1.msra.mxu0 0.0
    %291 = vmatprep.subr.mxu0 0.0
    %292 = vmatpush1.msra.mxu0 0.0
    %293 = vmatprep.subr.mxu0 0.0
    %294 = vmatpush1.msra.mxu0 0.0
    %295 = vmatprep.subr.mxu0 0.0
    %296 = vmatpush1.msra.mxu0 0.0
    %297 = vmatprep.subr.mxu0 0.0
    %298 = vmatpush1.msra.mxu0 0.0
    %299 = vmatprep.subr.mxu0 0.0
    %300 = vmatpush1.msra.mxu0 0.0
    %301 = vmatprep.subr.mxu0 0.0
    %302 = vmatpush1.msra.mxu0 0.0
    %303 = vmatprep.subr.mxu0 0.0
    %304 = vmatpush1.msra.mxu0 0.0
    %305 = vmatprep.subr.mxu0 0.0
    %306 = vmatpush1.msra.mxu0 0.0
    %307 = vmatprep.subr.mxu0 0.0
    %308 = vmatpush1.msra.mxu0 0.0
    %309 = vmatprep.mubr.f32.mxu0 0.0
    %310 = vmatmul.mubr.f32.gmra.mrb[0].mxu0 %v109
    %v311 = vpop.f32.mrb[0].mxu0
    %v312 = vadd.f32 %v103, %v311
    %v313 = vpop.f32.mrb[0].mxu0
    %314 = vmatprep.mubr.f32.mxu0 0.0
    %315 = vmatmul.mubr.f32.gmra.mrb[0].mxu0 %v112
    %v316 = vpop.f32.mrb[0].mxu0
    %v317 = vadd.f32 %v103, %v316
    %v318 = vpop.f32.mrb[0].mxu0
    %319 = vmatprep.mubr.f32.mxu0 0.0
    %320 = vmatmul.mubr.f32.gmra.mrb[0].mxu0 %v115
    %v321 = vpop.f32.mrb[0].mxu0
    %v322 = vadd.f32 %v103, %v321
    %v323 = vpop.f32.mrb[0].mxu0
    %324 = vmatprep.mubr.f32.mxu0 0.0
    %325 = vmatmul.mubr.f32.gmra.mrb[0].mxu0 %v118
    %v326 = vpop.f32.mrb[0].mxu0
    %v327 = vadd.f32 %v103, %v326
    %v328 = vpop.f32.mrb[0].mxu0
    %329 = vmatprep.mubr.f32.mxu0 0.0
    %330 = vmatmul.mubr.f32.gmra.mrb[0].mxu0 %v121
    %v331 = vpop.f32.mrb[0].mxu0
    %v332 = vadd.f32 %v103, %v331
    %v333 = vpop.f32.mrb[0].mxu0
    %334 = vmatprep.mubr.f32.mxu0 0.0
    %335 = vmatmul.mubr.f32.gmra.mrb[0].mxu0 %v124
    %v336 = vpop.f32.mrb[0].mxu0
    %v337 = vadd.f32 %v103, %v336
    %v338 = vpop.f32.mrb[0].mxu0
    %339 = vmatprep.mubr.f32.mxu0 0.0
    %340 = vmatmul.mubr.f32.gmra.mrb[0].mxu0 %v127
    %v341 = vpop.f32.mrb[0].mxu0
    %v342 = vadd.f32 %v103, %v341
    %v343 = vpop.f32.mrb[0].mxu0
    %344 = vmatprep.mubr.f32.mxu0 0.0
    %345 = vmatmul.mubr.f32.gmra.mrb[0].mxu0 %v130
    %v346 = vpop.f32.mrb[0].mxu0
    %v347 = vadd.f32 %v103, %v346
    %v348 = vpop.f32.mrb[0].mxu0
    %349 = vdwg.mxu0
    %350 = vst [vmem:[#allocation2] sm:$0xff] %v199
    %351 = vst [vmem:[#allocation2 + $0x8] sm:$0xff] %v201
    %352 = vst [vmem:[#allocation2 + $0x10] sm:$0xff] %v312
    %353 = vst [vmem:[#allocation2 + $0x18] sm:$0xff] %v205
    %354 = vst [vmem:[#allocation2 + $0x20] sm:$0xff] %v207
    %355 = vst [vmem:[#allocation2 + $0x28] sm:$0xff] %v317
    %356 = vst [vmem:[#allocation2 + $0x30] sm:$0xff] %v211
    %357 = vst [vmem:[#allocation2 + $0x38] sm:$0xff] %v213
    %358 = vst [vmem:[#allocation2 + $0x40] sm:$0xff] %v322
    %359 = vst [vmem:[#allocation2 + $0x48] sm:$0xff] %v217
    %360 = vst [vmem:[#allocation2 + $0x50] sm:$0xff] %v219
    %361 = vst [vmem:[#allocation2 + $0x58] sm:$0xff] %v327
    %362 = vst [vmem:[#allocation2 + $0x60] sm:$0xff] %v223
    %363 = vst [vmem:[#allocation2 + $0x68] sm:$0xff] %v225
    %364 = vst [vmem:[#allocation2 + $0x70] sm:$0xff] %v332
    %365 = vst [vmem:[#allocation2 + $0x78] sm:$0xff] %v229
    %366 = vst [vmem:[#allocation2 + $0x80] sm:$0xff] %v231
    %367 = vst [vmem:[#allocation2 + $0x88] sm:$0xff] %v337
    %368 = vst [vmem:[#allocation2 + $0x90] sm:$0xff] %v235
    %369 = vst [vmem:[#allocation2 + $0x98] sm:$0xff] %v237
    %370 = vst [vmem:[#allocation2 + $0xa0] sm:$0xff] %v342
    %371 = vst [vmem:[#allocation2 + $0xa8] sm:$0xff] %v241
    %372 = vst [vmem:[#allocation2 + $0xb0] sm:$0xff] %v243
    %373 = vst [vmem:[#allocation2 + $0xb8] sm:$0xff] %v347
    %v374 = vld [vmem:[#allocation5] sm:$0xff]
    %v375 = vld [vmem:[#allocation5 + $0x8] sm:$0xff]
    %v376 = vld [vmem:[#allocation5 + $0x10] sm:$0xff]
    %v377 = vld [vmem:[#allocation5 + $0x18] sm:$0xff]
    %v378 = vld [vmem:[#allocation5 + $0x20] sm:$0xff]
    %v379 = vld [vmem:[#allocation5 + $0x28] sm:$0xff]
    %v380 = vld [vmem:[#allocation5 + $0x30] sm:$0xff]
    %v381 = vld [vmem:[#allocation5 + $0x38] sm:$0xff]
    %v382 = vld [vmem:[#allocation5 + $0x40] sm:$0xff]
    %v383 = vld [vmem:[#allocation5 + $0x48] sm:$0xff]
    %v384 = vld [vmem:[#allocation5 + $0x50] sm:$0xff]
    %v385 = vld [vmem:[#allocation5 + $0x58] sm:$0xff]
    %v386 = vld [vmem:[#allocation5 + $0x60] sm:$0xff]
    %v387 = vld [vmem:[#allocation5 + $0x68] sm:$0xff]
    %v388 = vld [vmem:[#allocation5 + $0x70] sm:$0xff]
    %v389 = vld [vmem:[#allocation5 + $0x78] sm:$0xff]
    %v390 = vld [vmem:[#allocation5 + $0x80] sm:$0xff]
    %v391 = vld [vmem:[#allocation5 + $0x88] sm:$0xff]
    %v392 = vld [vmem:[#allocation5 + $0x90] sm:$0xff]
    %v393 = vld [vmem:[#allocation5 + $0x98] sm:$0xff]
    %v394 = vld [vmem:[#allocation5 + $0xa0] sm:$0xff]
    %v395 = vld [vmem:[#allocation5 + $0xa8] sm:$0xff]
    %v396 = vld [vmem:[#allocation5 + $0xb0] sm:$0xff]
    %v397 = vld [vmem:[#allocation5 + $0xb8] sm:$0xff]
    %v398 = vld [vmem:[#allocation5 + $0xc0] sm:$0xff]
    %v399 = vld [vmem:[#allocation5 + $0xc8] sm:$0xff]
    %v400 = vld [vmem:[#allocation5 + $0xd0] sm:$0xff]
    %v401 = vld [vmem:[#allocation5 + $0xd8] sm:$0xff]
    %v402 = vld [vmem:[#allocation5 + $0xe0] sm:$0xff]
    %v403 = vld [vmem:[#allocation5 + $0xe8] sm:$0xff]
    %v404 = vld [vmem:[#allocation5 + $0xf0] sm:$0xff]
    %v405 = vld [vmem:[#allocation5 + $0xf8] sm:$0xff]
    %v406 = vld [vmem:[#allocation5 + $0x100] sm:$0xff]
    %v407 = vld [vmem:[#allocation5 + $0x108] sm:$0xff]
    %v408 = vld [vmem:[#allocation5 + $0x110] sm:$0xff]
    %v409 = vld [vmem:[#allocation5 + $0x118] sm:$0xff]
    %v410 = vld [vmem:[#allocation5 + $0x120] sm:$0xff]
    %v411 = vld [vmem:[#allocation5 + $0x128] sm:$0xff]
    %v412 = vld [vmem:[#allocation5 + $0x130] sm:$0xff]
    %v413 = vld [vmem:[#allocation5 + $0x138] sm:$0xff]
    %v414 = vld [vmem:[#allocation5 + $0x140] sm:$0xff]
    %v415 = vld [vmem:[#allocation5 + $0x148] sm:$0xff]
    %v416 = vld [vmem:[#allocation5 + $0x150] sm:$0xff]
    %v417 = vld [vmem:[#allocation5 + $0x158] sm:$0xff]
    %v418 = vld [vmem:[#allocation5 + $0x160] sm:$0xff]
    %v419 = vld [vmem:[#allocation5 + $0x168] sm:$0xff]
    %v420 = vld [vmem:[#allocation5 + $0x170] sm:$0xff]
    %v421 = vld [vmem:[#allocation5 + $0x178] sm:$0xff]
    %v422 = vld [vmem:[%s4] sm:$0x1]
    %v424 = vlaneseq
    %v425 = vshrl.u32 %v424, 7
    %v426 = vsub.s32 0, %v425
    %v427 = vrot.slane %v422, %v426
    %s429 = smul.u32 0, 3
    %s430 = smul.addr %s429, 8
    %s431 = scalar_lea.vmem [#allocation2], %s430
    %v432 = vld [vmem:[%s431] sm:$0xff]
    %v433 = vld [vmem:[%s431 + $0x8] sm:$0xff]
    %v434 = vld [vmem:[%s431 + $0x10] sm:$0xff]
    %435 = vmatprep.subr.mxu0 %v375
    %436 = vmatpush1.msra.mxu0 %v374
    %437 = vmatprep.subr.mxu0 %v378
    %438 = vmatpush1.msra.mxu0 %v377
    %439 = vmatprep.subr.mxu0 %v381
    %440 = vmatpush1.msra.mxu0 %v380
    %441 = vmatprep.subr.mxu0 %v384
    %442 = vmatpush1.msra.mxu0 %v383
    %443 = vmatprep.subr.mxu0 %v387
    %444 = vmatpush1.msra.mxu0 %v386
    %445 = vmatprep.subr.mxu0 %v390
    %446 = vmatpush1.msra.mxu0 %v389
    %447 = vmatprep.subr.mxu0 %v393
    %448 = vmatpush1.msra.mxu0 %v392
    %449 = vmatprep.subr.mxu0 %v396
    %450 = vmatpush1.msra.mxu0 %v395
    %451 = vmatprep.subr.mxu0 %v399
    %452 = vmatpush1.msra.mxu0 %v398
    %453 = vmatprep.subr.mxu0 %v402
    %454 = vmatpush1.msra.mxu0 %v401
    %455 = vmatprep.subr.mxu0 %v405
    %456 = vmatpush1.msra.mxu0 %v404
    %457 = vmatprep.subr.mxu0 %v408
    %458 = vmatpush1.msra.mxu0 %v407
    %459 = vmatprep.subr.mxu0 %v411
    %460 = vmatpush1.msra.mxu0 %v410
    %461 = vmatprep.subr.mxu0 %v414
    %462 = vmatpush1.msra.mxu0 %v413
    %463 = vmatprep.subr.mxu0 %v417
    %464 = vmatpush1.msra.mxu0 %v416
    %465 = vmatprep.subr.mxu0 %v420
    %466 = vmatpush1.msra.mxu0 %v419
    %467 = vmatprep.subr.mxu0 0.0
    %468 = vmatpush1.msra.mxu0 0.0
    %469 = vmatprep.subr.mxu0 0.0
    %470 = vmatpush1.msra.mxu0 0.0
    %471 = vmatprep.subr.mxu0 0.0
    %472 = vmatpush1.msra.mxu0 0.0
    %473 = vmatprep.subr.mxu0 0.0
    %474 = vmatpush1.msra.mxu0 0.0
    %475 = vmatprep.subr.mxu0 0.0
    %476 = vmatpush1.msra.mxu0 0.0
    %477 = vmatprep.subr.mxu0 0.0
    %478 = vmatpush1.msra.mxu0 0.0
    %479 = vmatprep.subr.mxu0 0.0
    %480 = vmatpush1.msra.mxu0 0.0
    %481 = vmatprep.subr.mxu0 0.0
    %482 = vmatpush1.msra.mxu0 0.0
    %483 = vmatprep.subr.mxu0 0.0
    %484 = vmatpush1.msra.mxu0 0.0
    %485 = vmatprep.subr.mxu0 0.0
    %486 = vmatpush1.msra.mxu0 0.0
    %487 = vmatprep.subr.mxu0 0.0
    %488 = vmatpush1.msra.mxu0 0.0
    %489 = vmatprep.subr.mxu0 0.0
    %490 = vmatpush1.msra.mxu0 0.0
    %491 = vmatprep.subr.mxu0 0.0
    %492 = vmatpush1.msra.mxu0 0.0
    %493 = vmatprep.subr.mxu0 0.0
    %494 = vmatpush1.msra.mxu0 0.0
    %495 = vmatprep.subr.mxu0 0.0
    %496 = vmatpush1.msra.mxu0 0.0
    %497 = vmatprep.subr.mxu0 0.0
    %498 = vmatpush1.msra.mxu0 0.0
    %499 = vmatprep.mubr.f32.mxu0 0.0
    %500 = vmatmul.mubr.f32.gmra.mrb[0].mxu0 0.0
    %v501 = vpop.f32.mrb[0].mxu0
    %v502 = vadd.f32 0.0, %v501
    %v503 = vpop.f32.mrb[0].mxu0
    %v504 = vadd.f32 0.0, %v503
    %505 = vdwg.mxu0
    %506 = vmatprep.subr.mxu0 0.0
    %507 = vmatpush1.msra.mxu0 %v376
    %508 = vmatprep.subr.mxu0 0.0
    %509 = vmatpush1.msra.mxu0 %v379
    %510 = vmatprep.subr.mxu0 0.0
    %511 = vmatpush1.msra.mxu0 %v382
    %512 = vmatprep.subr.mxu0 0.0
    %513 = vmatpush1.msra.mxu0 %v385
    %514 = vmatprep.subr.mxu0 0.0
    %515 = vmatpush1.msra.mxu0 %v388
    %516 = vmatprep.subr.mxu0 0.0
    %517 = vmatpush1.msra.mxu0 %v391
    %518 = vmatprep.subr.mxu0 0.0
    %519 = vmatpush1.msra.mxu0 %v394
    %520 = vmatprep.subr.mxu0 0.0
    %521 = vmatpush1.msra.mxu0 %v397
    %522 = vmatprep.subr.mxu0 0.0
    %523 = vmatpush1.msra.mxu0 %v400
    %524 = vmatprep.subr.mxu0 0.0
    %525 = vmatpush1.msra.mxu0 %v403
    %526 = vmatprep.subr.mxu0 0.0
    %527 = vmatpush1.msra.mxu0 %v406
    %528 = vmatprep.subr.mxu0 0.0
    %529 = vmatpush1.msra.mxu0 %v409
    %530 = vmatprep.subr.mxu0 0.0
    %531 = vmatpush1.msra.mxu0 %v412
    %532 = vmatprep.subr.mxu0 0.0
    %533 = vmatpush1.msra.mxu0 %v415
    %534 = vmatprep.subr.mxu0 0.0
    %535 = vmatpush1.msra.mxu0 %v418
    %536 = vmatprep.subr.mxu0 0.0
    %537 = vmatpush1.msra.mxu0 %v421
    %538 = vmatprep.subr.mxu0 0.0
    %539 = vmatpush1.msra.mxu0 0.0
    %540 = vmatprep.subr.mxu0 0.0
    %541 = vmatpush1.msra.mxu0 0.0
    %542 = vmatprep.subr.mxu0 0.0
    %543 = vmatpush1.msra.mxu0 0.0
    %544 = vmatprep.subr.mxu0 0.0
    %545 = vmatpush1.msra.mxu0 0.0
    %546 = vmatprep.subr.mxu0 0.0
    %547 = vmatpush1.msra.mxu0 0.0
    %548 = vmatprep.subr.mxu0 0.0
    %549 = vmatpush1.msra.mxu0 0.0
    %550 = vmatprep.subr.mxu0 0.0
    %551 = vmatpush1.msra.mxu0 0.0
    %552 = vmatprep.subr.mxu0 0.0
    %553 = vmatpush1.msra.mxu0 0.0
    %554 = vmatprep.subr.mxu0 0.0
    %555 = vmatpush1.msra.mxu0 0.0
    %556 = vmatprep.subr.mxu0 0.0
    %557 = vmatpush1.msra.mxu0 0.0
    %558 = vmatprep.subr.mxu0 0.0
    %559 = vmatpush1.msra.mxu0 0.0
    %560 = vmatprep.subr.mxu0 0.0
    %561 = vmatpush1.msra.mxu0 0.0
    %562 = vmatprep.subr.mxu0 0.0
    %563 = vmatpush1.msra.mxu0 0.0
    %564 = vmatprep.subr.mxu0 0.0
    %565 = vmatpush1.msra.mxu0 0.0
    %566 = vmatprep.subr.mxu0 0.0
    %567 = vmatpush1.msra.mxu0 0.0
    %568 = vmatprep.subr.mxu0 0.0
    %569 = vmatpush1.msra.mxu0 0.0
    %570 = vmatprep.mubr.f32.mxu0 0.0
    %571 = vmatmul.mubr.f32.gmra.mrb[0].mxu0 0.0
    %v572 = vpop.f32.mrb[0].mxu0
    %v573 = vadd.f32 0.0, %v572
    %v574 = vpop.f32.mrb[0].mxu0
    %575 = vdwg.mxu0
    %v576 = vadd.f32 %v432, %v502
    %v577 = vxor.u32 %v576, 2147483648
    %v578 = vmul.f32 %v577, 1.442695
    %v579 = vpow.pop %v578
    %v580 = vadd.f32 %v579, 1.0
    %v581 = vrcp.pop %v580
    %v582 = vmul.f32 1.0, %v581
    %v583 = vadd.f32 %v433, %v504
    %v584 = vxor.u32 %v583, 2147483648
    %v585 = vmul.f32 %v584, 1.442695
    %v586 = vpow.pop %v585
    %v587 = vadd.f32 %v586, 1.0
    %v588 = vrcp.pop %v587
    %v589 = vmul.f32 1.0, %v588
    %v590 = vadd.f32 %v573, %v427
    %v591 = vmul.f32 %v582, %v590
    %v592 = vadd.f32 %v434, %v591
    %v593 = vtanh.pop %v592
    %v594 = vsub.f32 1.0, %v589
    %v595 = vmul.f32 %v594, %v593
    %v596 = vmul.f32 %v589, 0.0
    %v597 = vadd.f32 %v595, %v596
    %598 = vst [vmem:[#allocation3] sm:$0xff] %v597
    %s599 = smul.u32 1, 3
    %s600 = smul.addr %s599, 8
    %s601 = scalar_lea.vmem [#allocation2], %s600
    %v602 = vld [vmem:[%s601] sm:$0xff]
    %v603 = vld [vmem:[%s601 + $0x8] sm:$0xff]
    %v604 = vld [vmem:[%s601 + $0x10] sm:$0xff]
    %605 = vmatprep.subr.mxu0 %v375
    %606 = vmatpush1.msra.mxu0 %v374
    %607 = vmatprep.subr.mxu0 %v378
    %608 = vmatpush1.msra.mxu0 %v377
    %609 = vmatprep.subr.mxu0 %v381
    %610 = vmatpush1.msra.mxu0 %v380
    %611 = vmatprep.subr.mxu0 %v384
    %612 = vmatpush1.msra.mxu0 %v383
    %613 = vmatprep.subr.mxu0 %v387
    %614 = vmatpush1.msra.mxu0 %v386
    %615 = vmatprep.subr.mxu0 %v390
    %616 = vmatpush1.msra.mxu0 %v389
    %617 = vmatprep.subr.mxu0 %v393
    %618 = vmatpush1.msra.mxu0 %v392
    %619 = vmatprep.subr.mxu0 %v396
    %620 = vmatpush1.msra.mxu0 %v395
    %621 = vmatprep.subr.mxu0 %v399
    %622 = vmatpush1.msra.mxu0 %v398
    %623 = vmatprep.subr.mxu0 %v402
    %624 = vmatpush1.msra.mxu0 %v401
    %625 = vmatprep.subr.mxu0 %v405
    %626 = vmatpush1.msra.mxu0 %v404
    %627 = vmatprep.subr.mxu0 %v408
    %628 = vmatpush1.msra.mxu0 %v407
    %629 = vmatprep.subr.mxu0 %v411
    %630 = vmatpush1.msra.mxu0 %v410
    %631 = vmatprep.subr.mxu0 %v414
    %632 = vmatpush1.msra.mxu0 %v413
    %633 = vmatprep.subr.mxu0 %v417
    %634 = vmatpush1.msra.mxu0 %v416
    %635 = vmatprep.subr.mxu0 %v420
    %636 = vmatpush1.msra.mxu0 %v419
    %637 = vmatprep.subr.mxu0 0.0
    %638 = vmatpush1.msra.mxu0 0.0
    %639 = vmatprep.subr.mxu0 0.0
    %640 = vmatpush1.msra.mxu0 0.0
    %641 = vmatprep.subr.mxu0 0.0
    %642 = vmatpush1.msra.mxu0 0.0
    %643 = vmatprep.subr.mxu0 0.0
    %644 = vmatpush1.msra.mxu0 0.0
    %645 = vmatprep.subr.mxu0 0.0
    %646 = vmatpush1.msra.mxu0 0.0
    %647 = vmatprep.subr.mxu0 0.0
    %648 = vmatpush1.msra.mxu0 0.0
    %649 = vmatprep.subr.mxu0 0.0
    %650 = vmatpush1.msra.mxu0 0.0
    %651 = vmatprep.subr.mxu0 0.0
    %652 = vmatpush1.msra.mxu0 0.0
    %653 = vmatprep.subr.mxu0 0.0
    %654 = vmatpush1.msra.mxu0 0.0
    %655 = vmatprep.subr.mxu0 0.0
    %656 = vmatpush1.msra.mxu0 0.0
    %657 = vmatprep.subr.mxu0 0.0
    %658 = vmatpush1.msra.mxu0 0.0
    %659 = vmatprep.subr.mxu0 0.0
    %660 = vmatpush1.msra.mxu0 0.0
    %661 = vmatprep.subr.mxu0 0.0
    %662 = vmatpush1.msra.mxu0 0.0
    %663 = vmatprep.subr.mxu0 0.0
    %664 = vmatpush1.msra.mxu0 0.0
    %665 = vmatprep.subr.mxu0 0.0
    %666 = vmatpush1.msra.mxu0 0.0
    %667 = vmatprep.subr.mxu0 0.0
    %668 = vmatpush1.msra.mxu0 0.0
    %669 = vmatprep.mubr.f32.mxu0 0.0
    %670 = vmatmul.mubr.f32.gmra.mrb[0].mxu0 %v597
    %v671 = vpop.f32.mrb[0].mxu0
    %v672 = vadd.f32 0.0, %v671
    %v673 = vpop.f32.mrb[0].mxu0
    %v674 = vadd.f32 0.0, %v673
    %675 = vdwg.mxu0
    %676 = vmatprep.subr.mxu0 0.0
    %677 = vmatpush1.msra.mxu0 %v376
    %678 = vmatprep.subr.mxu0 0.0
    %679 = vmatpush1.msra.mxu0 %v379
    %680 = vmatprep.subr.mxu0 0.0
    %681 = vmatpush1.msra.mxu0 %v382
    %682 = vmatprep.subr.mxu0 0.0
    %683 = vmatpush1.msra.mxu0 %v385
    %684 = vmatprep.subr.mxu0 0.0
    %685 = vmatpush1.msra.mxu0 %v388
    %686 = vmatprep.subr.mxu0 0.0
    %687 = vmatpush1.msra.mxu0 %v391
    %688 = vmatprep.subr.mxu0 0.0
    %689 = vmatpush1.msra.mxu0 %v394
    %690 = vmatprep.subr.mxu0 0.0
    %691 = vmatpush1.msra.mxu0 %v397
    %692 = vmatprep.subr.mxu0 0.0
    %693 = vmatpush1.msra.mxu0 %v400
    %694 = vmatprep.subr.mxu0 0.0
    %695 = vmatpush1.msra.mxu0 %v403
    %696 = vmatprep.subr.mxu0 0.0
    %697 = vmatpush1.msra.mxu0 %v406
    %698 = vmatprep.subr.mxu0 0.0
    %699 = vmatpush1.msra.mxu0 %v409
    %700 = vmatprep.subr.mxu0 0.0
    %701 = vmatpush1.msra.mxu0 %v412
    %702 = vmatprep.subr.mxu0 0.0
    %703 = vmatpush1.msra.mxu0 %v415
    %704 = vmatprep.subr.mxu0 0.0
    %705 = vmatpush1.msra.mxu0 %v418
    %706 = vmatprep.subr.mxu0 0.0
    %707 = vmatpush1.msra.mxu0 %v421
    %708 = vmatprep.subr.mxu0 0.0
    %709 = vmatpush1.msra.mxu0 0.0
    %710 = vmatprep.subr.mxu0 0.0
    %711 = vmatpush1.msra.mxu0 0.0
    %712 = vmatprep.subr.mxu0 0.0
    %713 = vmatpush1.msra.mxu0 0.0
    %714 = vmatprep.subr.mxu0 0.0
    %715 = vmatpush1.msra.mxu0 0.0
    %716 = vmatprep.subr.mxu0 0.0
    %717 = vmatpush1.msra.mxu0 0.0
    %718 = vmatprep.subr.mxu0 0.0
    %719 = vmatpush1.msra.mxu0 0.0
    %720 = vmatprep.subr.mxu0 0.0
    %721 = vmatpush1.msra.mxu0 0.0
    %722 = vmatprep.subr.mxu0 0.0
    %723 = vmatpush1.msra.mxu0 0.0
    %724 = vmatprep.subr.mxu0 0.0
    %725 = vmatpush1.msra.mxu0 0.0
    %726 = vmatprep.subr.mxu0 0.0
    %727 = vmatpush1.msra.mxu0 0.0
    %728 = vmatprep.subr.mxu0 0.0
    %729 = vmatpush1.msra.mxu0 0.0
    %730 = vmatprep.subr.mxu0 0.0
    %731 = vmatpush1.msra.mxu0 0.0
    %732 = vmatprep.subr.mxu0 0.0
    %733 = vmatpush1.msra.mxu0 0.0
    %734 = vmatprep.subr.mxu0 0.0
    %735 = vmatpush1.msra.mxu0 0.0
    %736 = vmatprep.subr.mxu0 0.0
    %737 = vmatpush1.msra.mxu0 0.0
    %738 = vmatprep.subr.mxu0 0.0
    %739 = vmatpush1.msra.mxu0 0.0
    %740 = vmatprep.mubr.f32.mxu0 0.0
    %741 = vmatmul.mubr.f32.gmra.mrb[0].mxu0 %v597
    %v742 = vpop.f32.mrb[0].mxu0
    %v743 = vadd.f32 0.0, %v742
    %v744 = vpop.f32.mrb[0].mxu0
    %745 = vdwg.mxu0
    %v746 = vadd.f32 %v602, %v672
    %v747 = vxor.u32 %v746, 2147483648
    %v748 = vmul.f32 %v747, 1.442695
    %v749 = vpow.pop %v748
    %v750 = vadd.f32 %v749, 1.0
    %v751 = vrcp.pop %v750
    %v752 = vmul.f32 1.0, %v751
    %v753 = vadd.f32 %v603, %v674
    %v754 = vxor.u32 %v753, 2147483648
    %v755 = vmul.f32 %v754, 1.442695
    %v756 = vpow.pop %v755
    %v757 = vadd.f32 %v756, 1.0
    %v758 = vrcp.pop %v757
    %v759 = vmul.f32 1.0, %v758
    %v760 = vadd.f32 %v743, %v427
    %v761 = vmul.f32 %v752, %v760
    %v762 = vadd.f32 %v604, %v761
    %v763 = vtanh.pop %v762
    %v764 = vsub.f32 1.0, %v759
    %v765 = vmul.f32 %v764, %v763
    %v766 = vmul.f32 %v759, %v597
    %v767 = vadd.f32 %v765, %v766
    %s768 = scalar_lea.vmem [#allocation3], 8
    %769 = vst [vmem:[%s768] sm:$0xff] %v767
    %s770 = smul.u32 2, 3
    %s771 = smul.addr %s770, 8
    %s772 = scalar_lea.vmem [#allocation2], %s771
    %v773 = vld [vmem:[%s772] sm:$0xff]
    %v774 = vld [vmem:[%s772 + $0x8] sm:$0xff]
    %v775 = vld [vmem:[%s772 + $0x10] sm:$0xff]
    %776 = vmatprep.subr.mxu0 %v375
    %777 = vmatpush1.msra.mxu0 %v374
    %778 = vmatprep.subr.mxu0 %v378
    %779 = vmatpush1.msra.mxu0 %v377
    %780 = vmatprep.subr.mxu0 %v381
    %781 = vmatpush1.msra.mxu0 %v380
    %782 = vmatprep.subr.mxu0 %v384
    %783 = vmatpush1.msra.mxu0 %v383
    %784 = vmatprep.subr.mxu0 %v387
    %785 = vmatpush1.msra.mxu0 %v386
    %786 = vmatprep.subr.mxu0 %v390
    %787 = vmatpush1.msra.mxu0 %v389
    %788 = vmatprep.subr.mxu0 %v393
    %789 = vmatpush1.msra.mxu0 %v392
    %790 = vmatprep.subr.mxu0 %v396
    %791 = vmatpush1.msra.mxu0 %v395
    %792 = vmatprep.subr.mxu0 %v399
    %793 = vmatpush1.msra.mxu0 %v398
    %794 = vmatprep.subr.mxu0 %v402
    %795 = vmatpush1.msra.mxu0 %v401
    %796 = vmatprep.subr.mxu0 %v405
    %797 = vmatpush1.msra.mxu0 %v404
    %798 = vmatprep.subr.mxu0 %v408
    %799 = vmatpush1.msra.mxu0 %v407
    %800 = vmatprep.subr.mxu0 %v411
    %801 = vmatpush1.msra.mxu0 %v410
    %802 = vmatprep.subr.mxu0 %v414
    %803 = vmatpush1.msra.mxu0 %v413
    %804 = vmatprep.subr.mxu0 %v417
    %805 = vmatpush1.msra.mxu0 %v416
    %806 = vmatprep.subr.mxu0 %v420
    %807 = vmatpush1.msra.mxu0 %v419
    %808 = vmatprep.subr.mxu0 0.0
    %809 = vmatpush1.msra.mxu0 0.0
    %810 = vmatprep.subr.mxu0 0.0
    %811 = vmatpush1.msra.mxu0 0.0
    %812 = vmatprep.subr.mxu0 0.0
    %813 = vmatpush1.msra.mxu0 0.0
    %814 = vmatprep.subr.mxu0 0.0
    %815 = vmatpush1.msra.mxu0 0.0
    %816 = vmatprep.subr.mxu0 0.0
    %817 = vmatpush1.msra.mxu0 0.0
    %818 = vmatprep.subr.mxu0 0.0
    %819 = vmatpush1.msra.mxu0 0.0
    %820 = vmatprep.subr.mxu0 0.0
    %821 = vmatpush1.msra.mxu0 0.0
    %822 = vmatprep.subr.mxu0 0.0
    %823 = vmatpush1.msra.mxu0 0.0
    %824 = vmatprep.subr.mxu0 0.0
    %825 = vmatpush1.msra.mxu0 0.0
    %826 = vmatprep.subr.mxu0 0.0
    %827 = vmatpush1.msra.mxu0 0.0
    %828 = vmatprep.subr.mxu0 0.0
    %829 = vmatpush1.msra.mxu0 0.0
    %830 = vmatprep.subr.mxu0 0.0
    %831 = vmatpush1.msra.mxu0 0.0
    %832 = vmatprep.subr.mxu0 0.0
    %833 = vmatpush1.msra.mxu0 0.0
    %834 = vmatprep.subr.mxu0 0.0
    %835 = vmatpush1.msra.mxu0 0.0
    %836 = vmatprep.subr.mxu0 0.0
    %837 = vmatpush1.msra.mxu0 0.0
    %838 = vmatprep.subr.mxu0 0.0
    %839 = vmatpush1.msra.mxu0 0.0
    %840 = vmatprep.mubr.f32.mxu0 0.0
    %841 = vmatmul.mubr.f32.gmra.mrb[0].mxu0 %v767
    %v842 = vpop.f32.mrb[0].mxu0
    %v843 = vadd.f32 0.0, %v842
    %v844 = vpop.f32.mrb[0].mxu0
    %v845 = vadd.f32 0.0, %v844
    %846 = vdwg.mxu0
    %847 = vmatprep.subr.mxu0 0.0
    %848 = vmatpush1.msra.mxu0 %v376
    %849 = vmatprep.subr.mxu0 0.0
    %850 = vmatpush1.msra.mxu0 %v379
    %851 = vmatprep.subr.mxu0 0.0
    %852 = vmatpush1.msra.mxu0 %v382
    %853 = vmatprep.subr.mxu0 0.0
    %854 = vmatpush1.msra.mxu0 %v385
    %855 = vmatprep.subr.mxu0 0.0
    %856 = vmatpush1.msra.mxu0 %v388
    %857 = vmatprep.subr.mxu0 0.0
    %858 = vmatpush1.msra.mxu0 %v391
    %859 = vmatprep.subr.mxu0 0.0
    %860 = vmatpush1.msra.mxu0 %v394
    %861 = vmatprep.subr.mxu0 0.0
    %862 = vmatpush1.msra.mxu0 %v397
    %863 = vmatprep.subr.mxu0 0.0
    %864 = vmatpush1.msra.mxu0 %v400
    %865 = vmatprep.subr.mxu0 0.0
    %866 = vmatpush1.msra.mxu0 %v403
    %867 = vmatprep.subr.mxu0 0.0
    %868 = vmatpush1.msra.mxu0 %v406
    %869 = vmatprep.subr.mxu0 0.0
    %870 = vmatpush1.msra.mxu0 %v409
    %871 = vmatprep.subr.mxu0 0.0
    %872 = vmatpush1.msra.mxu0 %v412
    %873 = vmatprep.subr.mxu0 0.0
    %874 = vmatpush1.msra.mxu0 %v415
    %875 = vmatprep.subr.mxu0 0.0
    %876 = vmatpush1.msra.mxu0 %v418
    %877 = vmatprep.subr.mxu0 0.0
    %878 = vmatpush1.msra.mxu0 %v421
    %879 = vmatprep.subr.mxu0 0.0
    %880 = vmatpush1.msra.mxu0 0.0
    %881 = vmatprep.subr.mxu0 0.0
    %882 = vmatpush1.msra.mxu0 0.0
    %883 = vmatprep.subr.mxu0 0.0
    %884 = vmatpush1.msra.mxu0 0.0
    %885 = vmatprep.subr.mxu0 0.0
    %886 = vmatpush1.msra.mxu0 0.0
    %887 = vmatprep.subr.mxu0 0.0
    %888 = vmatpush1.msra.mxu0 0.0
    %889 = vmatprep.subr.mxu0 0.0
    %890 = vmatpush1.msra.mxu0 0.0
    %891 = vmatprep.subr.mxu0 0.0
    %892 = vmatpush1.msra.mxu0 0.0
    %893 = vmatprep.subr.mxu0 0.0
    %894 = vmatpush1.msra.mxu0 0.0
    %895 = vmatprep.subr.mxu0 0.0
    %896 = vmatpush1.msra.mxu0 0.0
    %897 = vmatprep.subr.mxu0 0.0
    %898 = vmatpush1.msra.mxu0 0.0
    %899 = vmatprep.subr.mxu0 0.0
    %900 = vmatpush1.msra.mxu0 0.0
    %901 = vmatprep.subr.mxu0 0.0
    %902 = vmatpush1.msra.mxu0 0.0
    %903 = vmatprep.subr.mxu0 0.0
    %904 = vmatpush1.msra.mxu0 0.0
    %905 = vmatprep.subr.mxu0 0.0
    %906 = vmatpush1.msra.mxu0 0.0
    %907 = vmatprep.subr.mxu0 0.0
    %908 = vmatpush1.msra.mxu0 0.0
    %909 = vmatprep.subr.mxu0 0.0
    %910 = vmatpush1.msra.mxu0 0.0
    %911 = vmatprep.mubr.f32.mxu0 0.0
    %912 = vmatmul.mubr.f32.gmra.mrb[0].mxu0 %v767
    %v913 = vpop.f32.mrb[0].mxu0
    %v914 = vadd.f32 0.0, %v913
    %v915 = vpop.f32.mrb[0].mxu0
    %916 = vdwg.mxu0
    %v917 = vadd.f32 %v773, %v843
    %v918 = vxor.u32 %v917, 2147483648
    %v919 = vmul.f32 %v918, 1.442695
    %v920 = vpow.pop %v919
    %v921 = vadd.f32 %v920, 1.0
    %v922 = vrcp.pop %v921
    %v923 = vmul.f32 1.0, %v922
    %v924 = vadd.f32 %v774, %v845
    %v925 = vxor.u32 %v924, 2147483648
    %v926 = vmul.f32 %v925, 1.442695
    %v927 = vpow.pop %v926
    %v928 = vadd.f32 %v927, 1.0
    %v929 = vrcp.pop %v928
    %v930 = vmul.f32 1.0, %v929
    %v931 = vadd.f32 %v914, %v427
    %v932 = vmul.f32 %v923, %v931
    %v933 = vadd.f32 %v775, %v932
    %v934 = vtanh.pop %v933
    %v935 = vsub.f32 1.0, %v930
    %v936 = vmul.f32 %v935, %v934
    %v937 = vmul.f32 %v930, %v767
    %v938 = vadd.f32 %v936, %v937
    %s939 = scalar_lea.vmem [#allocation3], 16
    %940 = vst [vmem:[%s939] sm:$0xff] %v938
    %s941 = smul.u32 3, 3
    %s942 = smul.addr %s941, 8
    %s943 = scalar_lea.vmem [#allocation2], %s942
    %v944 = vld [vmem:[%s943] sm:$0xff]
    %v945 = vld [vmem:[%s943 + $0x8] sm:$0xff]
    %v946 = vld [vmem:[%s943 + $0x10] sm:$0xff]
    %947 = vmatprep.subr.mxu0 %v375
    %948 = vmatpush1.msra.mxu0 %v374
    %949 = vmatprep.subr.mxu0 %v378
    %950 = vmatpush1.msra.mxu0 %v377
    %951 = vmatprep.subr.mxu0 %v381
    %952 = vmatpush1.msra.mxu0 %v380
    %953 = vmatprep.subr.mxu0 %v384
    %954 = vmatpush1.msra.mxu0 %v383
    %955 = vmatprep.subr.mxu0 %v387
    %956 = vmatpush1.msra.mxu0 %v386
    %957 = vmatprep.subr.mxu0 %v390
    %958 = vmatpush1.msra.mxu0 %v389
    %959 = vmatprep.subr.mxu0 %v393
    %960 = vmatpush1.msra.mxu0 %v392
    %961 = vmatprep.subr.mxu0 %v396
    %962 = vmatpush1.msra.mxu0 %v395
    %963 = vmatprep.subr.mxu0 %v399
    %964 = vmatpush1.msra.mxu0 %v398
    %965 = vmatprep.subr.mxu0 %v402
    %966 = vmatpush1.msra.mxu0 %v401
    %967 = vmatprep.subr.mxu0 %v405
    %968 = vmatpush1.msra.mxu0 %v404
    %969 = vmatprep.subr.mxu0 %v408
    %970 = vmatpush1.msra.mxu0 %v407
    %971 = vmatprep.subr.mxu0 %v411
    %972 = vmatpush1.msra.mxu0 %v410
    %973 = vmatprep.subr.mxu0 %v414
    %974 = vmatpush1.msra.mxu0 %v413
    %975 = vmatprep.subr.mxu0 %v417
    %976 = vmatpush1.msra.mxu0 %v416
    %977 = vmatprep.subr.mxu0 %v420
    %978 = vmatpush1.msra.mxu0 %v419
    %979 = vmatprep.subr.mxu0 0.0
    %980 = vmatpush1.msra.mxu0 0.0
    %981 = vmatprep.subr.mxu0 0.0
    %982 = vmatpush1.msra.mxu0 0.0
    %983 = vmatprep.subr.mxu0 0.0
    %984 = vmatpush1.msra.mxu0 0.0
    %985 = vmatprep.subr.mxu0 0.0
    %986 = vmatpush1.msra.mxu0 0.0
    %987 = vmatprep.subr.mxu0 0.0
    %988 = vmatpush1.msra.mxu0 0.0
    %989 = vmatprep.subr.mxu0 0.0
    %990 = vmatpush1.msra.mxu0 0.0
    %991 = vmatprep.subr.mxu0 0.0
    %992 = vmatpush1.msra.mxu0 0.0
    %993 = vmatprep.subr.mxu0 0.0
    %994 = vmatpush1.msra.mxu0 0.0
    %995 = vmatprep.subr.mxu0 0.0
    %996 = vmatpush1.msra.mxu0 0.0
    %997 = vmatprep.subr.mxu0 0.0
    %998 = vmatpush1.msra.mxu0 0.0
    %999 = vmatprep.subr.mxu0 0.0
    %1000 = vmatpush1.msra.mxu0 0.0
    %1001 = vmatprep.subr.mxu0 0.0
    %1002 = vmatpush1.msra.mxu0 0.0
    %1003 = vmatprep.subr.mxu0 0.0
    %1004 = vmatpush1.msra.mxu0 0.0
    %1005 = vmatprep.subr.mxu0 0.0
    %1006 = vmatpush1.msra.mxu0 0.0
    %1007 = vmatprep.subr.mxu0 0.0
    %1008 = vmatpush1.msra.mxu0 0.0
    %1009 = vmatprep.subr.mxu0 0.0
    %1010 = vmatpush1.msra.mxu0 0.0
    %1011 = vmatprep.mubr.f32.mxu0 0.0
    %1012 = vmatmul.mubr.f32.gmra.mrb[0].mxu0 %v938
    %v1013 = vpop.f32.mrb[0].mxu0
    %v1014 = vadd.f32 0.0, %v1013
    %v1015 = vpop.f32.mrb[0].mxu0
    %v1016 = vadd.f32 0.0, %v1015
    %1017 = vdwg.mxu0
    %1018 = vmatprep.subr.mxu0 0.0
    %1019 = vmatpush1.msra.mxu0 %v376
    %1020 = vmatprep.subr.mxu0 0.0
    %1021 = vmatpush1.msra.mxu0 %v379
    %1022 = vmatprep.subr.mxu0 0.0
    %1023 = vmatpush1.msra.mxu0 %v382
    %1024 = vmatprep.subr.mxu0 0.0
    %1025 = vmatpush1.msra.mxu0 %v385
    %1026 = vmatprep.subr.mxu0 0.0
    %1027 = vmatpush1.msra.mxu0 %v388
    %1028 = vmatprep.subr.mxu0 0.0
    %1029 = vmatpush1.msra.mxu0 %v391
    %1030 = vmatprep.subr.mxu0 0.0
    %1031 = vmatpush1.msra.mxu0 %v394
    %1032 = vmatprep.subr.mxu0 0.0
    %1033 = vmatpush1.msra.mxu0 %v397
    %1034 = vmatprep.subr.mxu0 0.0
    %1035 = vmatpush1.msra.mxu0 %v400
    %1036 = vmatprep.subr.mxu0 0.0
    %1037 = vmatpush1.msra.mxu0 %v403
    %1038 = vmatprep.subr.mxu0 0.0
    %1039 = vmatpush1.msra.mxu0 %v406
    %1040 = vmatprep.subr.mxu0 0.0
    %1041 = vmatpush1.msra.mxu0 %v409
    %1042 = vmatprep.subr.mxu0 0.0
    %1043 = vmatpush1.msra.mxu0 %v412
    %1044 = vmatprep.subr.mxu0 0.0
    %1045 = vmatpush1.msra.mxu0 %v415
    %1046 = vmatprep.subr.mxu0 0.0
    %1047 = vmatpush1.msra.mxu0 %v418
    %1048 = vmatprep.subr.mxu0 0.0
    %1049 = vmatpush1.msra.mxu0 %v421
    %1050 = vmatprep.subr.mxu0 0.0
    %1051 = vmatpush1.msra.mxu0 0.0
    %1052 = vmatprep.subr.mxu0 0.0
    %1053 = vmatpush1.msra.mxu0 0.0
    %1054 = vmatprep.subr.mxu0 0.0
    %1055 = vmatpush1.msra.mxu0 0.0
    %1056 = vmatprep.subr.mxu0 0.0
    %1057 = vmatpush1.msra.mxu0 0.0
    %1058 = vmatprep.subr.mxu0 0.0
    %1059 = vmatpush1.msra.mxu0 0.0
    %1060 = vmatprep.subr.mxu0 0.0
    %1061 = vmatpush1.msra.mxu0 0.0
    %1062 = vmatprep.subr.mxu0 0.0
    %1063 = vmatpush1.msra.mxu0 0.0
    %1064 = vmatprep.subr.mxu0 0.0
    %1065 = vmatpush1.msra.mxu0 0.0
    %1066 = vmatprep.subr.mxu0 0.0
    %1067 = vmatpush1.msra.mxu0 0.0
    %1068 = vmatprep.subr.mxu0 0.0
    %1069 = vmatpush1.msra.mxu0 0.0
    %1070 = vmatprep.subr.mxu0 0.0
    %1071 = vmatpush1.msra.mxu0 0.0
    %1072 = vmatprep.subr.mxu0 0.0
    %1073 = vmatpush1.msra.mxu0 0.0
    %1074 = vmatprep.subr.mxu0 0.0
    %1075 = vmatpush1.msra.mxu0 0.0
    %1076 = vmatprep.subr.mxu0 0.0
    %1077 = vmatpush1.msra.mxu0 0.0
    %1078 = vmatprep.subr.mxu0 0.0
    %1079 = vmatpush1.msra.mxu0 0.0
    %1080 = vmatprep.subr.mxu0 0.0
    %1081 = vmatpush1.msra.mxu0 0.0
    %1082 = vmatprep.mubr.f32.mxu0 0.0
    %1083 = vmatmul.mubr.f32.gmra.mrb[0].mxu0 %v938
    %v1084 = vpop.f32.mrb[0].mxu0
    %v1085 = vadd.f32 0.0, %v1084
    %v1086 = vpop.f32.mrb[0].mxu0
    %1087 = vdwg.mxu0
    %v1088 = vadd.f32 %v944, %v1014
    %v1089 = vxor.u32 %v1088, 2147483648
    %v1090 = vmul.f32 %v1089, 1.442695
    %v1091 = vpow.pop %v1090
    %v1092 = vadd.f32 %v1091, 1.0
    %v1093 = vrcp.pop %v1092
    %v1094 = vmul.f32 1.0, %v1093
    %v1095 = vadd.f32 %v945, %v1016
    %v1096 = vxor.u32 %v1095, 2147483648
    %v1097 = vmul.f32 %v1096, 1.442695
    %v1098 = vpow.pop %v1097
    %v1099 = vadd.f32 %v1098, 1.0
    %v1100 = vrcp.pop %v1099
    %v1101 = vmul.f32 1.0, %v1100
    %v1102 = vadd.f32 %v1085, %v427
    %v1103 = vmul.f32 %v1094, %v1102
    %v1104 = vadd.f32 %v946, %v1103
    %v1105 = vtanh.pop %v1104
    %v1106 = vsub.f32 1.0, %v1101
    %v1107 = vmul.f32 %v1106, %v1105
    %v1108 = vmul.f32 %v1101, %v938
    %v1109 = vadd.f32 %v1107, %v1108
    %s1110 = scalar_lea.vmem [#allocation3], 24
    %1111 = vst [vmem:[%s1110] sm:$0xff] %v1109
    %s1112 = smul.u32 4, 3
    %s1113 = smul.addr %s1112, 8
    %s1114 = scalar_lea.vmem [#allocation2], %s1113
    %v1115 = vld [vmem:[%s1114] sm:$0xff]
    %v1116 = vld [vmem:[%s1114 + $0x8] sm:$0xff]
    %v1117 = vld [vmem:[%s1114 + $0x10] sm:$0xff]
    %1118 = vmatprep.subr.mxu0 %v375
    %1119 = vmatpush1.msra.mxu0 %v374
    %1120 = vmatprep.subr.mxu0 %v378
    %1121 = vmatpush1.msra.mxu0 %v377
    %1122 = vmatprep.subr.mxu0 %v381
    %1123 = vmatpush1.msra.mxu0 %v380
    %1124 = vmatprep.subr.mxu0 %v384
    %1125 = vmatpush1.msra.mxu0 %v383
    %1126 = vmatprep.subr.mxu0 %v387
    %1127 = vmatpush1.msra.mxu0 %v386
    %1128 = vmatprep.subr.mxu0 %v390
    %1129 = vmatpush1.msra.mxu0 %v389
    %1130 = vmatprep.subr.mxu0 %v393
    %1131 = vmatpush1.msra.mxu0 %v392
    %1132 = vmatprep.subr.mxu0 %v396
    %1133 = vmatpush1.msra.mxu0 %v395
    %1134 = vmatprep.subr.mxu0 %v399
    %1135 = vmatpush1.msra.mxu0 %v398
    %1136 = vmatprep.subr.mxu0 %v402
    %1137 = vmatpush1.msra.mxu0 %v401
    %1138 = vmatprep.subr.mxu0 %v405
    %1139 = vmatpush1.msra.mxu0 %v404
    %1140 = vmatprep.subr.mxu0 %v408
    %1141 = vmatpush1.msra.mxu0 %v407
    %1142 = vmatprep.subr.mxu0 %v411
    %1143 = vmatpush1.msra.mxu0 %v410
    %1144 = vmatprep.subr.mxu0 %v414
    %1145 = vmatpush1.msra.mxu0 %v413
    %1146 = vmatprep.subr.mxu0 %v417
    %1147 = vmatpush1.msra.mxu0 %v416
    %1148 = vmatprep.subr.mxu0 %v420
    %1149 = vmatpush1.msra.mxu0 %v419
    %1150 = vmatprep.subr.mxu0 0.0
    %1151 = vmatpush1.msra.mxu0 0.0
    %1152 = vmatprep.subr.mxu0 0.0
    %1153 = vmatpush1.msra.mxu0 0.0
    %1154 = vmatprep.subr.mxu0 0.0
    %1155 = vmatpush1.msra.mxu0 0.0
    %1156 = vmatprep.subr.mxu0 0.0
    %1157 = vmatpush1.msra.mxu0 0.0
    %1158 = vmatprep.subr.mxu0 0.0
    %1159 = vmatpush1.msra.mxu0 0.0
    %1160 = vmatprep.subr.mxu0 0.0
    %1161 = vmatpush1.msra.mxu0 0.0
    %1162 = vmatprep.subr.mxu0 0.0
    %1163 = vmatpush1.msra.mxu0 0.0
    %1164 = vmatprep.subr.mxu0 0.0
    %1165 = vmatpush1.msra.mxu0 0.0
    %1166 = vmatprep.subr.mxu0 0.0
    %1167 = vmatpush1.msra.mxu0 0.0
    %1168 = vmatprep.subr.mxu0 0.0
    %1169 = vmatpush1.msra.mxu0 0.0
    %1170 = vmatprep.subr.mxu0 0.0
    %1171 = vmatpush1.msra.mxu0 0.0
    %1172 = vmatprep.subr.mxu0 0.0
    %1173 = vmatpush1.msra.mxu0 0.0
    %1174 = vmatprep.subr.mxu0 0.0
    %1175 = vmatpush1.msra.mxu0 0.0
    %1176 = vmatprep.subr.mxu0 0.0
    %1177 = vmatpush1.msra.mxu0 0.0
    %1178 = vmatprep.subr.mxu0 0.0
    %1179 = vmatpush1.msra.mxu0 0.0
    %1180 = vmatprep.subr.mxu0 0.0
    %1181 = vmatpush1.msra.mxu0 0.0
    %1182 = vmatprep.mubr.f32.mxu0 0.0
    %1183 = vmatmul.mubr.f32.gmra.mrb[0].mxu0 %v1109
    %v1184 = vpop.f32.mrb[0].mxu0
    %v1185 = vadd.f32 0.0, %v1184
    %v1186 = vpop.f32.mrb[0].mxu0
    %v1187 = vadd.f32 0.0, %v1186
    %1188 = vdwg.mxu0
    %1189 = vmatprep.subr.mxu0 0.0
    %1190 = vmatpush1.msra.mxu0 %v376
    %1191 = vmatprep.subr.mxu0 0.0
    %1192 = vmatpush1.msra.mxu0 %v379
    %1193 = vmatprep.subr.mxu0 0.0
    %1194 = vmatpush1.msra.mxu0 %v382
    %1195 = vmatprep.subr.mxu0 0.0
    %1196 = vmatpush1.msra.mxu0 %v385
    %1197 = vmatprep.subr.mxu0 0.0
    %1198 = vmatpush1.msra.mxu0 %v388
    %1199 = vmatprep.subr.mxu0 0.0
    %1200 = vmatpush1.msra.mxu0 %v391
    %1201 = vmatprep.subr.mxu0 0.0
    %1202 = vmatpush1.msra.mxu0 %v394
    %1203 = vmatprep.subr.mxu0 0.0
    %1204 = vmatpush1.msra.mxu0 %v397
    %1205 = vmatprep.subr.mxu0 0.0
    %1206 = vmatpush1.msra.mxu0 %v400
    %1207 = vmatprep.subr.mxu0 0.0
    %1208 = vmatpush1.msra.mxu0 %v403
    %1209 = vmatprep.subr.mxu0 0.0
    %1210 = vmatpush1.msra.mxu0 %v406
    %1211 = vmatprep.subr.mxu0 0.0
    %1212 = vmatpush1.msra.mxu0 %v409
    %1213 = vmatprep.subr.mxu0 0.0
    %1214 = vmatpush1.msra.mxu0 %v412
    %1215 = vmatprep.subr.mxu0 0.0
    %1216 = vmatpush1.msra.mxu0 %v415
    %1217 = vmatprep.subr.mxu0 0.0
    %1218 = vmatpush1.msra.mxu0 %v418
    %1219 = vmatprep.subr.mxu0 0.0
    %1220 = vmatpush1.msra.mxu0 %v421
    %1221 = vmatprep.subr.mxu0 0.0
    %1222 = vmatpush1.msra.mxu0 0.0
    %1223 = vmatprep.subr.mxu0 0.0
    %1224 = vmatpush1.msra.mxu0 0.0
    %1225 = vmatprep.subr.mxu0 0.0
    %1226 = vmatpush1.msra.mxu0 0.0
    %1227 = vmatprep.subr.mxu0 0.0
    %1228 = vmatpush1.msra.mxu0 0.0
    %1229 = vmatprep.subr.mxu0 0.0
    %1230 = vmatpush1.msra.mxu0 0.0
    %1231 = vmatprep.subr.mxu0 0.0
    %1232 = vmatpush1.msra.mxu0 0.0
    %1233 = vmatprep.subr.mxu0 0.0
    %1234 = vmatpush1.msra.mxu0 0.0
    %1235 = vmatprep.subr.mxu0 0.0
    %1236 = vmatpush1.msra.mxu0 0.0
    %1237 = vmatprep.subr.mxu0 0.0
    %1238 = vmatpush1.msra.mxu0 0.0
    %1239 = vmatprep.subr.mxu0 0.0
    %1240 = vmatpush1.msra.mxu0 0.0
    %1241 = vmatprep.subr.mxu0 0.0
    %1242 = vmatpush1.msra.mxu0 0.0
    %1243 = vmatprep.subr.mxu0 0.0
    %1244 = vmatpush1.msra.mxu0 0.0
    %1245 = vmatprep.subr.mxu0 0.0
    %1246 = vmatpush1.msra.mxu0 0.0
    %1247 = vmatprep.subr.mxu0 0.0
    %1248 = vmatpush1.msra.mxu0 0.0
    %1249 = vmatprep.subr.mxu0 0.0
    %1250 = vmatpush1.msra.mxu0 0.0
    %1251 = vmatprep.subr.mxu0 0.0
    %1252 = vmatpush1.msra.mxu0 0.0
    %1253 = vmatprep.mubr.f32.mxu0 0.0
    %1254 = vmatmul.mubr.f32.gmra.mrb[0].mxu0 %v1109
    %v1255 = vpop.f32.mrb[0].mxu0
    %v1256 = vadd.f32 0.0, %v1255
    %v1257 = vpop.f32.mrb[0].mxu0
    %1258 = vdwg.mxu0
    %v1259 = vadd.f32 %v1115, %v1185
    %v1260 = vxor.u32 %v1259, 2147483648
    %v1261 = vmul.f32 %v1260, 1.442695
    %v1262 = vpow.pop %v1261
    %v1263 = vadd.f32 %v1262, 1.0
    %v1264 = vrcp.pop %v1263
    %v1265 = vmul.f32 1.0, %v1264
    %v1266 = vadd.f32 %v1116, %v1187
    %v1267 = vxor.u32 %v1266, 2147483648
    %v1268 = vmul.f32 %v1267, 1.442695
    %v1269 = vpow.pop %v1268
    %v1270 = vadd.f32 %v1269, 1.0
    %v1271 = vrcp.pop %v1270
    %v1272 = vmul.f32 1.0, %v1271
    %v1273 = vadd.f32 %v1256, %v427
    %v1274 = vmul.f32 %v1265, %v1273
    %v1275 = vadd.f32 %v1117, %v1274
    %v1276 = vtanh.pop %v1275
    %v1277 = vsub.f32 1.0, %v1272
    %v1278 = vmul.f32 %v1277, %v1276
    %v1279 = vmul.f32 %v1272, %v1109
    %v1280 = vadd.f32 %v1278, %v1279
    %s1281 = scalar_lea.vmem [#allocation3], 32
    %1282 = vst [vmem:[%s1281] sm:$0xff] %v1280
    %s1283 = smul.u32 5, 3
    %s1284 = smul.addr %s1283, 8
    %s1285 = scalar_lea.vmem [#allocation2], %s1284
    %v1286 = vld [vmem:[%s1285] sm:$0xff]
    %v1287 = vld [vmem:[%s1285 + $0x8] sm:$0xff]
    %v1288 = vld [vmem:[%s1285 + $0x10] sm:$0xff]
    %1289 = vmatprep.subr.mxu0 %v375
    %1290 = vmatpush1.msra.mxu0 %v374
    %1291 = vmatprep.subr.mxu0 %v378
    %1292 = vmatpush1.msra.mxu0 %v377
    %1293 = vmatprep.subr.mxu0 %v381
    %1294 = vmatpush1.msra.mxu0 %v380
    %1295 = vmatprep.subr.mxu0 %v384
    %1296 = vmatpush1.msra.mxu0 %v383
    %1297 = vmatprep.subr.mxu0 %v387
    %1298 = vmatpush1.msra.mxu0 %v386
    %1299 = vmatprep.subr.mxu0 %v390
    %1300 = vmatpush1.msra.mxu0 %v389
    %1301 = vmatprep.subr.mxu0 %v393
    %1302 = vmatpush1.msra.mxu0 %v392
    %1303 = vmatprep.subr.mxu0 %v396
    %1304 = vmatpush1.msra.mxu0 %v395
    %1305 = vmatprep.subr.mxu0 %v399
    %1306 = vmatpush1.msra.mxu0 %v398
    %1307 = vmatprep.subr.mxu0 %v402
    %1308 = vmatpush1.msra.mxu0 %v401
    %1309 = vmatprep.subr.mxu0 %v405
    %1310 = vmatpush1.msra.mxu0 %v404
    %1311 = vmatprep.subr.mxu0 %v408
    %1312 = vmatpush1.msra.mxu0 %v407
    %1313 = vmatprep.subr.mxu0 %v411
    %1314 = vmatpush1.msra.mxu0 %v410
    %1315 = vmatprep.subr.mxu0 %v414
    %1316 = vmatpush1.msra.mxu0 %v413
    %1317 = vmatprep.subr.mxu0 %v417
    %1318 = vmatpush1.msra.mxu0 %v416
    %1319 = vmatprep.subr.mxu0 %v420
    %1320 = vmatpush1.msra.mxu0 %v419
    %1321 = vmatprep.subr.mxu0 0.0
    %1322 = vmatpush1.msra.mxu0 0.0
    %1323 = vmatprep.subr.mxu0 0.0
    %1324 = vmatpush1.msra.mxu0 0.0
    %1325 = vmatprep.subr.mxu0 0.0
    %1326 = vmatpush1.msra.mxu0 0.0
    %1327 = vmatprep.subr.mxu0 0.0
    %1328 = vmatpush1.msra.mxu0 0.0
    %1329 = vmatprep.subr.mxu0 0.0
    %1330 = vmatpush1.msra.mxu0 0.0
    %1331 = vmatprep.subr.mxu0 0.0
    %1332 = vmatpush1.msra.mxu0 0.0
    %1333 = vmatprep.subr.mxu0 0.0
    %1334 = vmatpush1.msra.mxu0 0.0
    %1335 = vmatprep.subr.mxu0 0.0
    %1336 = vmatpush1.msra.mxu0 0.0
    %1337 = vmatprep.subr.mxu0 0.0
    %1338 = vmatpush1.msra.mxu0 0.0
    %1339 = vmatprep.subr.mxu0 0.0
    %1340 = vmatpush1.msra.mxu0 0.0
    %1341 = vmatprep.subr.mxu0 0.0
    %1342 = vmatpush1.msra.mxu0 0.0
    %1343 = vmatprep.subr.mxu0 0.0
    %1344 = vmatpush1.msra.mxu0 0.0
    %1345 = vmatprep.subr.mxu0 0.0
    %1346 = vmatpush1.msra.mxu0 0.0
    %1347 = vmatprep.subr.mxu0 0.0
    %1348 = vmatpush1.msra.mxu0 0.0
    %1349 = vmatprep.subr.mxu0 0.0
    %1350 = vmatpush1.msra.mxu0 0.0
    %1351 = vmatprep.subr.mxu0 0.0
    %1352 = vmatpush1.msra.mxu0 0.0
    %1353 = vmatprep.mubr.f32.mxu0 0.0
    %1354 = vmatmul.mubr.f32.gmra.mrb[0].mxu0 %v1280
    %v1355 = vpop.f32.mrb[0].mxu0
    %v1356 = vadd.f32 0.0, %v1355
    %v1357 = vpop.f32.mrb[0].mxu0
    %v1358 = vadd.f32 0.0, %v1357
    %1359 = vdwg.mxu0
    %1360 = vmatprep.subr.mxu0 0.0
    %1361 = vmatpush1.msra.mxu0 %v376
    %1362 = vmatprep.subr.mxu0 0.0
    %1363 = vmatpush1.msra.mxu0 %v379
    %1364 = vmatprep.subr.mxu0 0.0
    %1365 = vmatpush1.msra.mxu0 %v382
    %1366 = vmatprep.subr.mxu0 0.0
    %1367 = vmatpush1.msra.mxu0 %v385
    %1368 = vmatprep.subr.mxu0 0.0
    %1369 = vmatpush1.msra.mxu0 %v388
    %1370 = vmatprep.subr.mxu0 0.0
    %1371 = vmatpush1.msra.mxu0 %v391
    %1372 = vmatprep.subr.mxu0 0.0
    %1373 = vmatpush1.msra.mxu0 %v394
    %1374 = vmatprep.subr.mxu0 0.0
    %1375 = vmatpush1.msra.mxu0 %v397
    %1376 = vmatprep.subr.mxu0 0.0
    %1377 = vmatpush1.msra.mxu0 %v400
    %1378 = vmatprep.subr.mxu0 0.0
    %1379 = vmatpush1.msra.mxu0 %v403
    %1380 = vmatprep.subr.mxu0 0.0
    %1381 = vmatpush1.msra.mxu0 %v406
    %1382 = vmatprep.subr.mxu0 0.0
    %1383 = vmatpush1.msra.mxu0 %v409
    %1384 = vmatprep.subr.mxu0 0.0
    %1385 = vmatpush1.msra.mxu0 %v412
    %1386 = vmatprep.subr.mxu0 0.0
    %1387 = vmatpush1.msra.mxu0 %v415
    %1388 = vmatprep.subr.mxu0 0.0
    %1389 = vmatpush1.msra.mxu0 %v418
    %1390 = vmatprep.subr.mxu0 0.0
    %1391 = vmatpush1.msra.mxu0 %v421
    %1392 = vmatprep.subr.mxu0 0.0
    %1393 = vmatpush1.msra.mxu0 0.0
    %1394 = vmatprep.subr.mxu0 0.0
    %1395 = vmatpush1.msra.mxu0 0.0
    %1396 = vmatprep.subr.mxu0 0.0
    %1397 = vmatpush1.msra.mxu0 0.0
    %1398 = vmatprep.subr.mxu0 0.0
    %1399 = vmatpush1.msra.mxu0 0.0
    %1400 = vmatprep.subr.mxu0 0.0
    %1401 = vmatpush1.msra.mxu0 0.0
    %1402 = vmatprep.subr.mxu0 0.0
    %1403 = vmatpush1.msra.mxu0 0.0
    %1404 = vmatprep.subr.mxu0 0.0
    %1405 = vmatpush1.msra.mxu0 0.0
    %1406 = vmatprep.subr.mxu0 0.0
    %1407 = vmatpush1.msra.mxu0 0.0
    %1408 = vmatprep.subr.mxu0 0.0
    %1409 = vmatpush1.msra.mxu0 0.0
    %1410 = vmatprep.subr.mxu0 0.0
    %1411 = vmatpush1.msra.mxu0 0.0
    %1412 = vmatprep.subr.mxu0 0.0
    %1413 = vmatpush1.msra.mxu0 0.0
    %1414 = vmatprep.subr.mxu0 0.0
    %1415 = vmatpush1.msra.mxu0 0.0
    %1416 = vmatprep.subr.mxu0 0.0
    %1417 = vmatpush1.msra.mxu0 0.0
    %1418 = vmatprep.subr.mxu0 0.0
    %1419 = vmatpush1.msra.mxu0 0.0
    %1420 = vmatprep.subr.mxu0 0.0
    %1421 = vmatpush1.msra.mxu0 0.0
    %1422 = vmatprep.subr.mxu0 0.0
    %1423 = vmatpush1.msra.mxu0 0.0
    %1424 = vmatprep.mubr.f32.mxu0 0.0
    %1425 = vmatmul.mubr.f32.gmra.mrb[0].mxu0 %v1280
    %v1426 = vpop.f32.mrb[0].mxu0
    %v1427 = vadd.f32 0.0, %v1426
    %v1428 = vpop.f32.mrb[0].mxu0
    %1429 = vdwg.mxu0
    %v1430 = vadd.f32 %v1286, %v1356
    %v1431 = vxor.u32 %v1430, 2147483648
    %v1432 = vmul.f32 %v1431, 1.442695
    %v1433 = vpow.pop %v1432
    %v1434 = vadd.f32 %v1433, 1.0
    %v1435 = vrcp.pop %v1434
    %v1436 = vmul.f32 1.0, %v1435
    %v1437 = vadd.f32 %v1287, %v1358
    %v1438 = vxor.u32 %v1437, 2147483648
    %v1439 = vmul.f32 %v1438, 1.442695
    %v1440 = vpow.pop %v1439
    %v1441 = vadd.f32 %v1440, 1.0
    %v1442 = vrcp.pop %v1441
    %v1443 = vmul.f32 1.0, %v1442
    %v1444 = vadd.f32 %v1427, %v427
    %v1445 = vmul.f32 %v1436, %v1444
    %v1446 = vadd.f32 %v1288, %v1445
    %v1447 = vtanh.pop %v1446
    %v1448 = vsub.f32 1.0, %v1443
    %v1449 = vmul.f32 %v1448, %v1447
    %v1450 = vmul.f32 %v1443, %v1280
    %v1451 = vadd.f32 %v1449, %v1450
    %s1452 = scalar_lea.vmem [#allocation3], 40
    %1453 = vst [vmem:[%s1452] sm:$0xff] %v1451
    %s1454 = smul.u32 6, 3
    %s1455 = smul.addr %s1454, 8
    %s1456 = scalar_lea.vmem [#allocation2], %s1455
    %v1457 = vld [vmem:[%s1456] sm:$0xff]
    %v1458 = vld [vmem:[%s1456 + $0x8] sm:$0xff]
    %v1459 = vld [vmem:[%s1456 + $0x10] sm:$0xff]
    %1460 = vmatprep.subr.mxu0 %v375
    %1461 = vmatpush1.msra.mxu0 %v374
    %1462 = vmatprep.subr.mxu0 %v378
    %1463 = vmatpush1.msra.mxu0 %v377
    %1464 = vmatprep.subr.mxu0 %v381
    %1465 = vmatpush1.msra.mxu0 %v380
    %1466 = vmatprep.subr.mxu0 %v384
    %1467 = vmatpush1.msra.mxu0 %v383
    %1468 = vmatprep.subr.mxu0 %v387
    %1469 = vmatpush1.msra.mxu0 %v386
    %1470 = vmatprep.subr.mxu0 %v390
    %1471 = vmatpush1.msra.mxu0 %v389
    %1472 = vmatprep.subr.mxu0 %v393
    %1473 = vmatpush1.msra.mxu0 %v392
    %1474 = vmatprep.subr.mxu0 %v396
    %1475 = vmatpush1.msra.mxu0 %v395
    %1476 = vmatprep.subr.mxu0 %v399
    %1477 = vmatpush1.msra.mxu0 %v398
    %1478 = vmatprep.subr.mxu0 %v402
    %1479 = vmatpush1.msra.mxu0 %v401
    %1480 = vmatprep.subr.mxu0 %v405
    %1481 = vmatpush1.msra.mxu0 %v404
    %1482 = vmatprep.subr.mxu0 %v408
    %1483 = vmatpush1.msra.mxu0 %v407
    %1484 = vmatprep.subr.mxu0 %v411
    %1485 = vmatpush1.msra.mxu0 %v410
    %1486 = vmatprep.subr.mxu0 %v414
    %1487 = vmatpush1.msra.mxu0 %v413
    %1488 = vmatprep.subr.mxu0 %v417
    %1489 = vmatpush1.msra.mxu0 %v416
    %1490 = vmatprep.subr.mxu0 %v420
    %1491 = vmatpush1.msra.mxu0 %v419
    %1492 = vmatprep.subr.mxu0 0.0
    %1493 = vmatpush1.msra.mxu0 0.0
    %1494 = vmatprep.subr.mxu0 0.0
    %1495 = vmatpush1.msra.mxu0 0.0
    %1496 = vmatprep.subr.mxu0 0.0
    %1497 = vmatpush1.msra.mxu0 0.0
    %1498 = vmatprep.subr.mxu0 0.0
    %1499 = vmatpush1.msra.mxu0 0.0
    %1500 = vmatprep.subr.mxu0 0.0
    %1501 = vmatpush1.msra.mxu0 0.0
    %1502 = vmatprep.subr.mxu0 0.0
    %1503 = vmatpush1.msra.mxu0 0.0
    %1504 = vmatprep.subr.mxu0 0.0
    %1505 = vmatpush1.msra.mxu0 0.0
    %1506 = vmatprep.subr.mxu0 0.0
    %1507 = vmatpush1.msra.mxu0 0.0
    %1508 = vmatprep.subr.mxu0 0.0
    %1509 = vmatpush1.msra.mxu0 0.0
    %1510 = vmatprep.subr.mxu0 0.0
    %1511 = vmatpush1.msra.mxu0 0.0
    %1512 = vmatprep.subr.mxu0 0.0
    %1513 = vmatpush1.msra.mxu0 0.0
    %1514 = vmatprep.subr.mxu0 0.0
    %1515 = vmatpush1.msra.mxu0 0.0
    %1516 = vmatprep.subr.mxu0 0.0
    %1517 = vmatpush1.msra.mxu0 0.0
    %1518 = vmatprep.subr.mxu0 0.0
    %1519 = vmatpush1.msra.mxu0 0.0
    %1520 = vmatprep.subr.mxu0 0.0
    %1521 = vmatpush1.msra.mxu0 0.0
    %1522 = vmatprep.subr.mxu0 0.0
    %1523 = vmatpush1.msra.mxu0 0.0
    %1524 = vmatprep.mubr.f32.mxu0 0.0
    %1525 = vmatmul.mubr.f32.gmra.mrb[0].mxu0 %v1451
    %v1526 = vpop.f32.mrb[0].mxu0
    %v1527 = vadd.f32 0.0, %v1526
    %v1528 = vpop.f32.mrb[0].mxu0
    %v1529 = vadd.f32 0.0, %v1528
    %1530 = vdwg.mxu0
    %1531 = vmatprep.subr.mxu0 0.0
    %1532 = vmatpush1.msra.mxu0 %v376
    %1533 = vmatprep.subr.mxu0 0.0
    %1534 = vmatpush1.msra.mxu0 %v379
    %1535 = vmatprep.subr.mxu0 0.0
    %1536 = vmatpush1.msra.mxu0 %v382
    %1537 = vmatprep.subr.mxu0 0.0
    %1538 = vmatpush1.msra.mxu0 %v385
    %1539 = vmatprep.subr.mxu0 0.0
    %1540 = vmatpush1.msra.mxu0 %v388
    %1541 = vmatprep.subr.mxu0 0.0
    %1542 = vmatpush1.msra.mxu0 %v391
    %1543 = vmatprep.subr.mxu0 0.0
    %1544 = vmatpush1.msra.mxu0 %v394
    %1545 = vmatprep.subr.mxu0 0.0
    %1546 = vmatpush1.msra.mxu0 %v397
    %1547 = vmatprep.subr.mxu0 0.0
    %1548 = vmatpush1.msra.mxu0 %v400
    %1549 = vmatprep.subr.mxu0 0.0
    %1550 = vmatpush1.msra.mxu0 %v403
    %1551 = vmatprep.subr.mxu0 0.0
    %1552 = vmatpush1.msra.mxu0 %v406
    %1553 = vmatprep.subr.mxu0 0.0
    %1554 = vmatpush1.msra.mxu0 %v409
    %1555 = vmatprep.subr.mxu0 0.0
    %1556 = vmatpush1.msra.mxu0 %v412
    %1557 = vmatprep.subr.mxu0 0.0
    %1558 = vmatpush1.msra.mxu0 %v415
    %1559 = vmatprep.subr.mxu0 0.0
    %1560 = vmatpush1.msra.mxu0 %v418
    %1561 = vmatprep.subr.mxu0 0.0
    %1562 = vmatpush1.msra.mxu0 %v421
    %1563 = vmatprep.subr.mxu0 0.0
    %1564 = vmatpush1.msra.mxu0 0.0
    %1565 = vmatprep.subr.mxu0 0.0
    %1566 = vmatpush1.msra.mxu0 0.0
    %1567 = vmatprep.subr.mxu0 0.0
    %1568 = vmatpush1.msra.mxu0 0.0
    %1569 = vmatprep.subr.mxu0 0.0
    %1570 = vmatpush1.msra.mxu0 0.0
    %1571 = vmatprep.subr.mxu0 0.0
    %1572 = vmatpush1.msra.mxu0 0.0
    %1573 = vmatprep.subr.mxu0 0.0
    %1574 = vmatpush1.msra.mxu0 0.0
    %1575 = vmatprep.subr.mxu0 0.0
    %1576 = vmatpush1.msra.mxu0 0.0
    %1577 = vmatprep.subr.mxu0 0.0
    %1578 = vmatpush1.msra.mxu0 0.0
    %1579 = vmatprep.subr.mxu0 0.0
    %1580 = vmatpush1.msra.mxu0 0.0
    %1581 = vmatprep.subr.mxu0 0.0
    %1582 = vmatpush1.msra.mxu0 0.0
    %1583 = vmatprep.subr.mxu0 0.0
    %1584 = vmatpush1.msra.mxu0 0.0
    %1585 = vmatprep.subr.mxu0 0.0
    %1586 = vmatpush1.msra.mxu0 0.0
    %1587 = vmatprep.subr.mxu0 0.0
    %1588 = vmatpush1.msra.mxu0 0.0
    %1589 = vmatprep.subr.mxu0 0.0
    %1590 = vmatpush1.msra.mxu0 0.0
    %1591 = vmatprep.subr.mxu0 0.0
    %1592 = vmatpush1.msra.mxu0 0.0
    %1593 = vmatprep.subr.mxu0 0.0
    %1594 = vmatpush1.msra.mxu0 0.0
    %1595 = vmatprep.mubr.f32.mxu0 0.0
    %1596 = vmatmul.mubr.f32.gmra.mrb[0].mxu0 %v1451
    %v1597 = vpop.f32.mrb[0].mxu0
    %v1598 = vadd.f32 0.0, %v1597
    %v1599 = vpop.f32.mrb[0].mxu0
    %1600 = vdwg.mxu0
    %v1601 = vadd.f32 %v1457, %v1527
    %v1602 = vxor.u32 %v1601, 2147483648
    %v1603 = vmul.f32 %v1602, 1.442695
    %v1604 = vpow.pop %v1603
    %v1605 = vadd.f32 %v1604, 1.0
    %v1606 = vrcp.pop %v1605
    %v1607 = vmul.f32 1.0, %v1606
    %v1608 = vadd.f32 %v1458, %v1529
    %v1609 = vxor.u32 %v1608, 2147483648
    %v1610 = vmul.f32 %v1609, 1.442695
    %v1611 = vpow.pop %v1610
    %v1612 = vadd.f32 %v1611, 1.0
    %v1613 = vrcp.pop %v1612
    %v1614 = vmul.f32 1.0, %v1613
    %v1615 = vadd.f32 %v1598, %v427
    %v1616 = vmul.f32 %v1607, %v1615
    %v1617 = vadd.f32 %v1459, %v1616
    %v1618 = vtanh.pop %v1617
    %v1619 = vsub.f32 1.0, %v1614
    %v1620 = vmul.f32 %v1619, %v1618
    %v1621 = vmul.f32 %v1614, %v1451
    %v1622 = vadd.f32 %v1620, %v1621
    %s1623 = scalar_lea.vmem [#allocation3], 48
    %1624 = vst [vmem:[%s1623] sm:$0xff] %v1622
    %s1625 = smul.u32 7, 3
    %s1626 = smul.addr %s1625, 8
    %s1627 = scalar_lea.vmem [#allocation2], %s1626
    %v1628 = vld [vmem:[%s1627] sm:$0xff]
    %v1629 = vld [vmem:[%s1627 + $0x8] sm:$0xff]
    %v1630 = vld [vmem:[%s1627 + $0x10] sm:$0xff]
    %1631 = vmatprep.subr.mxu0 %v375
    %1632 = vmatpush1.msra.mxu0 %v374
    %1633 = vmatprep.subr.mxu0 %v378
    %1634 = vmatpush1.msra.mxu0 %v377
    %1635 = vmatprep.subr.mxu0 %v381
    %1636 = vmatpush1.msra.mxu0 %v380
    %1637 = vmatprep.subr.mxu0 %v384
    %1638 = vmatpush1.msra.mxu0 %v383
    %1639 = vmatprep.subr.mxu0 %v387
    %1640 = vmatpush1.msra.mxu0 %v386
    %1641 = vmatprep.subr.mxu0 %v390
    %1642 = vmatpush1.msra.mxu0 %v389
    %1643 = vmatprep.subr.mxu0 %v393
    %1644 = vmatpush1.msra.mxu0 %v392
    %1645 = vmatprep.subr.mxu0 %v396
    %1646 = vmatpush1.msra.mxu0 %v395
    %1647 = vmatprep.subr.mxu0 %v399
    %1648 = vmatpush1.msra.mxu0 %v398
    %1649 = vmatprep.subr.mxu0 %v402
    %1650 = vmatpush1.msra.mxu0 %v401
    %1651 = vmatprep.subr.mxu0 %v405
    %1652 = vmatpush1.msra.mxu0 %v404
    %1653 = vmatprep.subr.mxu0 %v408
    %1654 = vmatpush1.msra.mxu0 %v407
    %1655 = vmatprep.subr.mxu0 %v411
    %1656 = vmatpush1.msra.mxu0 %v410
    %1657 = vmatprep.subr.mxu0 %v414
    %1658 = vmatpush1.msra.mxu0 %v413
    %1659 = vmatprep.subr.mxu0 %v417
    %1660 = vmatpush1.msra.mxu0 %v416
    %1661 = vmatprep.subr.mxu0 %v420
    %1662 = vmatpush1.msra.mxu0 %v419
    %1663 = vmatprep.subr.mxu0 0.0
    %1664 = vmatpush1.msra.mxu0 0.0
    %1665 = vmatprep.subr.mxu0 0.0
    %1666 = vmatpush1.msra.mxu0 0.0
    %1667 = vmatprep.subr.mxu0 0.0
    %1668 = vmatpush1.msra.mxu0 0.0
    %1669 = vmatprep.subr.mxu0 0.0
    %1670 = vmatpush1.msra.mxu0 0.0
    %1671 = vmatprep.subr.mxu0 0.0
    %1672 = vmatpush1.msra.mxu0 0.0
    %1673 = vmatprep.subr.mxu0 0.0
    %1674 = vmatpush1.msra.mxu0 0.0
    %1675 = vmatprep.subr.mxu0 0.0
    %1676 = vmatpush1.msra.mxu0 0.0
    %1677 = vmatprep.subr.mxu0 0.0
    %1678 = vmatpush1.msra.mxu0 0.0
    %1679 = vmatprep.subr.mxu0 0.0
    %1680 = vmatpush1.msra.mxu0 0.0
    %1681 = vmatprep.subr.mxu0 0.0
    %1682 = vmatpush1.msra.mxu0 0.0
    %1683 = vmatprep.subr.mxu0 0.0
    %1684 = vmatpush1.msra.mxu0 0.0
    %1685 = vmatprep.subr.mxu0 0.0
    %1686 = vmatpush1.msra.mxu0 0.0
    %1687 = vmatprep.subr.mxu0 0.0
    %1688 = vmatpush1.msra.mxu0 0.0
    %1689 = vmatprep.subr.mxu0 0.0
    %1690 = vmatpush1.msra.mxu0 0.0
    %1691 = vmatprep.subr.mxu0 0.0
    %1692 = vmatpush1.msra.mxu0 0.0
    %1693 = vmatprep.subr.mxu0 0.0
    %1694 = vmatpush1.msra.mxu0 0.0
    %1695 = vmatprep.mubr.f32.mxu0 0.0
    %1696 = vmatmul.mubr.f32.gmra.mrb[0].mxu0 %v1622
    %v1697 = vpop.f32.mrb[0].mxu0
    %v1698 = vadd.f32 0.0, %v1697
    %v1699 = vpop.f32.mrb[0].mxu0
    %v1700 = vadd.f32 0.0, %v1699
    %1701 = vdwg.mxu0
    %1702 = vmatprep.subr.mxu0 0.0
    %1703 = vmatpush1.msra.mxu0 %v376
    %1704 = vmatprep.subr.mxu0 0.0
    %1705 = vmatpush1.msra.mxu0 %v379
    %1706 = vmatprep.subr.mxu0 0.0
    %1707 = vmatpush1.msra.mxu0 %v382
    %1708 = vmatprep.subr.mxu0 0.0
    %1709 = vmatpush1.msra.mxu0 %v385
    %1710 = vmatprep.subr.mxu0 0.0
    %1711 = vmatpush1.msra.mxu0 %v388
    %1712 = vmatprep.subr.mxu0 0.0
    %1713 = vmatpush1.msra.mxu0 %v391
    %1714 = vmatprep.subr.mxu0 0.0
    %1715 = vmatpush1.msra.mxu0 %v394
    %1716 = vmatprep.subr.mxu0 0.0
    %1717 = vmatpush1.msra.mxu0 %v397
    %1718 = vmatprep.subr.mxu0 0.0
    %1719 = vmatpush1.msra.mxu0 %v400
    %1720 = vmatprep.subr.mxu0 0.0
    %1721 = vmatpush1.msra.mxu0 %v403
    %1722 = vmatprep.subr.mxu0 0.0
    %1723 = vmatpush1.msra.mxu0 %v406
    %1724 = vmatprep.subr.mxu0 0.0
    %1725 = vmatpush1.msra.mxu0 %v409
    %1726 = vmatprep.subr.mxu0 0.0
    %1727 = vmatpush1.msra.mxu0 %v412
    %1728 = vmatprep.subr.mxu0 0.0
    %1729 = vmatpush1.msra.mxu0 %v415
    %1730 = vmatprep.subr.mxu0 0.0
    %1731 = vmatpush1.msra.mxu0 %v418
    %1732 = vmatprep.subr.mxu0 0.0
    %1733 = vmatpush1.msra.mxu0 %v421
    %1734 = vmatprep.subr.mxu0 0.0
    %1735 = vmatpush1.msra.mxu0 0.0
    %1736 = vmatprep.subr.mxu0 0.0
    %1737 = vmatpush1.msra.mxu0 0.0
    %1738 = vmatprep.subr.mxu0 0.0
    %1739 = vmatpush1.msra.mxu0 0.0
    %1740 = vmatprep.subr.mxu0 0.0
    %1741 = vmatpush1.msra.mxu0 0.0
    %1742 = vmatprep.subr.mxu0 0.0
    %1743 = vmatpush1.msra.mxu0 0.0
    %1744 = vmatprep.subr.mxu0 0.0
    %1745 = vmatpush1.msra.mxu0 0.0
    %1746 = vmatprep.subr.mxu0 0.0
    %1747 = vmatpush1.msra.mxu0 0.0
    %1748 = vmatprep.subr.mxu0 0.0
    %1749 = vmatpush1.msra.mxu0 0.0
    %1750 = vmatprep.subr.mxu0 0.0
    %1751 = vmatpush1.msra.mxu0 0.0
    %1752 = vmatprep.subr.mxu0 0.0
    %1753 = vmatpush1.msra.mxu0 0.0
    %1754 = vmatprep.subr.mxu0 0.0
    %1755 = vmatpush1.msra.mxu0 0.0
    %1756 = vmatprep.subr.mxu0 0.0
    %1757 = vmatpush1.msra.mxu0 0.0
    %1758 = vmatprep.subr.mxu0 0.0
    %1759 = vmatpush1.msra.mxu0 0.0
    %1760 = vmatprep.subr.mxu0 0.0
    %1761 = vmatpush1.msra.mxu0 0.0
    %1762 = vmatprep.subr.mxu0 0.0
    %1763 = vmatpush1.msra.mxu0 0.0
    %1764 = vmatprep.subr.mxu0 0.0
    %1765 = vmatpush1.msra.mxu0 0.0
    %1766 = vmatprep.mubr.f32.mxu0 0.0
    %1767 = vmatmul.mubr.f32.gmra.mrb[0].mxu0 %v1622
    %v1768 = vpop.f32.mrb[0].mxu0
    %v1769 = vadd.f32 0.0, %v1768
    %v1770 = vpop.f32.mrb[0].mxu0
    %1771 = vdwg.mxu0
    %v1772 = vadd.f32 %v1628, %v1698
    %v1773 = vxor.u32 %v1772, 2147483648
    %v1774 = vmul.f32 %v1773, 1.442695
    %v1775 = vpow.pop %v1774
    %v1776 = vadd.f32 %v1775, 1.0
    %v1777 = vrcp.pop %v1776
    %v1778 = vmul.f32 1.0, %v1777
    %v1779 = vadd.f32 %v1629, %v1700
    %v1780 = vxor.u32 %v1779, 2147483648
    %v1781 = vmul.f32 %v1780, 1.442695
    %v1782 = vpow.pop %v1781
    %v1783 = vadd.f32 %v1782, 1.0
    %v1784 = vrcp.pop %v1783
    %v1785 = vmul.f32 1.0, %v1784
    %v1786 = vadd.f32 %v1769, %v427
    %v1787 = vmul.f32 %v1778, %v1786
    %v1788 = vadd.f32 %v1630, %v1787
    %v1789 = vtanh.pop %v1788
    %v1790 = vsub.f32 1.0, %v1785
    %v1791 = vmul.f32 %v1790, %v1789
    %v1792 = vmul.f32 %v1785, %v1622
    %v1793 = vadd.f32 %v1791, %v1792
    %s1794 = scalar_lea.vmem [#allocation3], 56
    %1795 = vst [vmem:[%s1794] sm:$0xff] %v1793
    %v1796 = vld [vmem:[#allocation3] sm:$0xff]
    %v1797 = vld [vmem:[#allocation3 + $0x8] sm:$0xff]
    %v1798 = vld [vmem:[#allocation3 + $0x10] sm:$0xff]
    %v1799 = vld [vmem:[#allocation3 + $0x18] sm:$0xff]
    %v1800 = vld [vmem:[#allocation3 + $0x20] sm:$0xff]
    %v1801 = vld [vmem:[#allocation3 + $0x28] sm:$0xff]
    %v1802 = vld [vmem:[#allocation3 + $0x30] sm:$0xff]
    %v1803 = vld [vmem:[#allocation3 + $0x38] sm:$0xff]
    %v1804 = vld [vmem:[#allocation7] sm:$0xff]
    %v1805 = vld [vmem:[#allocation7 + $0x8] sm:$0xff]
    %v1806 = vld [vmem:[#allocation7 + $0x10] sm:$0xff]
    %v1807 = vld [vmem:[#allocation7 + $0x18] sm:$0xff]
    %v1808 = vld [vmem:[#allocation7 + $0x20] sm:$0xff]
    %v1809 = vld [vmem:[#allocation7 + $0x28] sm:$0xff]
    %v1810 = vld [vmem:[#allocation7 + $0x30] sm:$0xff]
    %v1811 = vld [vmem:[#allocation7 + $0x38] sm:$0xff]
    %v1812 = vld [vmem:[#allocation7 + $0x40] sm:$0xff]
    %v1813 = vld [vmem:[#allocation7 + $0x48] sm:$0xff]
    %v1814 = vld [vmem:[#allocation7 + $0x50] sm:$0xff]
    %v1815 = vld [vmem:[#allocation7 + $0x58] sm:$0xff]
    %v1816 = vld [vmem:[#allocation7 + $0x60] sm:$0xff]
    %v1817 = vld [vmem:[#allocation7 + $0x68] sm:$0xff]
    %v1818 = vld [vmem:[#allocation7 + $0x70] sm:$0xff]
    %v1819 = vld [vmem:[#allocation7 + $0x78] sm:$0xff]
    %v1820 = vld [vmem:[#allocation7 + $0x80] sm:$0xff]
    %v1821 = vld [vmem:[#allocation7 + $0x88] sm:$0xff]
    %v1822 = vld [vmem:[#allocation7 + $0x90] sm:$0xff]
    %v1823 = vld [vmem:[#allocation7 + $0x98] sm:$0xff]
    %v1824 = vld [vmem:[#allocation7 + $0xa0] sm:$0xff]
    %v1825 = vld [vmem:[#allocation7 + $0xa8] sm:$0xff]
    %v1826 = vld [vmem:[#allocation7 + $0xb0] sm:$0xff]
    %v1827 = vld [vmem:[#allocation7 + $0xb8] sm:$0xff]
    %v1828 = vld [vmem:[#allocation7 + $0xc0] sm:$0xff]
    %v1829 = vld [vmem:[#allocation7 + $0xc8] sm:$0xff]
    %v1830 = vld [vmem:[#allocation7 + $0xd0] sm:$0xff]
    %v1831 = vld [vmem:[#allocation7 + $0xd8] sm:$0xff]
    %v1832 = vld [vmem:[#allocation7 + $0xe0] sm:$0xff]
    %v1833 = vld [vmem:[#allocation7 + $0xe8] sm:$0xff]
    %v1834 = vld [vmem:[#allocation7 + $0xf0] sm:$0xff]
    %v1835 = vld [vmem:[#allocation7 + $0xf8] sm:$0xff]
    %v1836 = vld [vmem:[#allocation7 + $0x100] sm:$0xff]
    %v1837 = vld [vmem:[#allocation7 + $0x108] sm:$0xff]
    %v1838 = vld [vmem:[#allocation7 + $0x110] sm:$0xff]
    %v1839 = vld [vmem:[#allocation7 + $0x118] sm:$0xff]
    %v1840 = vld [vmem:[#allocation7 + $0x120] sm:$0xff]
    %v1841 = vld [vmem:[#allocation7 + $0x128] sm:$0xff]
    %v1842 = vld [vmem:[#allocation7 + $0x130] sm:$0xff]
    %v1843 = vld [vmem:[#allocation7 + $0x138] sm:$0xff]
    %v1844 = vld [vmem:[#allocation7 + $0x140] sm:$0xff]
    %v1845 = vld [vmem:[#allocation7 + $0x148] sm:$0xff]
    %v1846 = vld [vmem:[#allocation7 + $0x150] sm:$0xff]
    %v1847 = vld [vmem:[#allocation7 + $0x158] sm:$0xff]
    %v1848 = vld [vmem:[#allocation7 + $0x160] sm:$0xff]
    %v1849 = vld [vmem:[#allocation7 + $0x168] sm:$0xff]
    %v1850 = vld [vmem:[#allocation7 + $0x170] sm:$0xff]
    %v1851 = vld [vmem:[#allocation7 + $0x178] sm:$0xff]
    %v1852 = vld [vmem:[%s7] sm:$0x7]
    %v1854 = vlaneseq
    %v1855 = vshrl.u32 %v1854, 7
    %v1856 = vsub.s32 0, %v1855
    %v1857 = vrot.slane %v1852, %v1856
    %v1858 = vlaneseq
    %v1859 = vshrl.u32 %v1858, 7
    %v1860 = vsub.s32 1, %v1859
    %v1861 = vrot.slane %v1852, %v1860
    %v1862 = vlaneseq
    %v1863 = vshrl.u32 %v1862, 7
    %v1864 = vsub.s32 2, %v1863
    %v1865 = vrot.slane %v1852, %v1864
    %1869 = vmatprep.subr.mxu0 %v1805
    %1870 = vmatpush1.msra.mxu0 %v1804
    %1871 = vmatprep.subr.mxu0 %v1808
    %1872 = vmatpush1.msra.mxu0 %v1807
    %1873 = vmatprep.subr.mxu0 %v1811
    %1874 = vmatpush1.msra.mxu0 %v1810
    %1875 = vmatprep.subr.mxu0 %v1814
    %1876 = vmatpush1.msra.mxu0 %v1813
    %1877 = vmatprep.subr.mxu0 %v1817
    %1878 = vmatpush1.msra.mxu0 %v1816
    %1879 = vmatprep.subr.mxu0 %v1820
    %1880 = vmatpush1.msra.mxu0 %v1819
    %1881 = vmatprep.subr.mxu0 %v1823
    %1882 = vmatpush1.msra.mxu0 %v1822
    %1883 = vmatprep.subr.mxu0 %v1826
    %1884 = vmatpush1.msra.mxu0 %v1825
    %1885 = vmatprep.subr.mxu0 %v1829
    %1886 = vmatpush1.msra.mxu0 %v1828
    %1887 = vmatprep.subr.mxu0 %v1832
    %1888 = vmatpush1.msra.mxu0 %v1831
    %1889 = vmatprep.subr.mxu0 %v1835
    %1890 = vmatpush1.msra.mxu0 %v1834
    %1891 = vmatprep.subr.mxu0 %v1838
    %1892 = vmatpush1.msra.mxu0 %v1837
    %1893 = vmatprep.subr.mxu0 %v1841
    %1894 = vmatpush1.msra.mxu0 %v1840
    %1895 = vmatprep.subr.mxu0 %v1844
    %1896 = vmatpush1.msra.mxu0 %v1843
    %1897 = vmatprep.subr.mxu0 %v1847
    %1898 = vmatpush1.msra.mxu0 %v1846
    %1899 = vmatprep.subr.mxu0 %v1850
    %1900 = vmatpush1.msra.mxu0 %v1849
    %1901 = vmatprep.subr.mxu0 0.0
    %1902 = vmatpush1.msra.mxu0 0.0
    %1903 = vmatprep.subr.mxu0 0.0
    %1904 = vmatpush1.msra.mxu0 0.0
    %1905 = vmatprep.subr.mxu0 0.0
    %1906 = vmatpush1.msra.mxu0 0.0
    %1907 = vmatprep.subr.mxu0 0.0
    %1908 = vmatpush1.msra.mxu0 0.0
    %1909 = vmatprep.subr.mxu0 0.0
    %1910 = vmatpush1.msra.mxu0 0.0
    %1911 = vmatprep.subr.mxu0 0.0
    %1912 = vmatpush1.msra.mxu0 0.0
    %1913 = vmatprep.subr.mxu0 0.0
    %1914 = vmatpush1.msra.mxu0 0.0
    %1915 = vmatprep.subr.mxu0 0.0
    %1916 = vmatpush1.msra.mxu0 0.0
    %1917 = vmatprep.subr.mxu0 0.0
    %1918 = vmatpush1.msra.mxu0 0.0
    %1919 = vmatprep.subr.mxu0 0.0
    %1920 = vmatpush1.msra.mxu0 0.0
    %1921 = vmatprep.subr.mxu0 0.0
    %1922 = vmatpush1.msra.mxu0 0.0
    %1923 = vmatprep.subr.mxu0 0.0
    %1924 = vmatpush1.msra.mxu0 0.0
    %1925 = vmatprep.subr.mxu0 0.0
    %1926 = vmatpush1.msra.mxu0 0.0
    %1927 = vmatprep.subr.mxu0 0.0
    %1928 = vmatpush1.msra.mxu0 0.0
    %1929 = vmatprep.subr.mxu0 0.0
    %1930 = vmatpush1.msra.mxu0 0.0
    %1931 = vmatprep.subr.mxu0 0.0
    %1932 = vmatpush1.msra.mxu0 0.0
    %1933 = vmatprep.mubr.f32.mxu0 0.0
    %1934 = vmatmul.mubr.f32.gmra.mrb[0].mxu0 %v1796
    %v1935 = vpop.f32.mrb[0].mxu0
    %v1936 = vadd.f32 %v1857, %v1935
    %v1937 = vpop.f32.mrb[0].mxu0
    %v1938 = vadd.f32 %v1861, %v1937
    %1939 = vmatprep.mubr.f32.mxu0 0.0
    %1940 = vmatmul.mubr.f32.gmra.mrb[0].mxu0 %v1797
    %v1941 = vpop.f32.mrb[0].mxu0
    %v1942 = vadd.f32 %v1857, %v1941
    %v1943 = vpop.f32.mrb[0].mxu0
    %v1944 = vadd.f32 %v1861, %v1943
    %1945 = vmatprep.mubr.f32.mxu0 0.0
    %1946 = vmatmul.mubr.f32.gmra.mrb[0].mxu0 %v1798
    %v1947 = vpop.f32.mrb[0].mxu0
    %v1948 = vadd.f32 %v1857, %v1947
    %v1949 = vpop.f32.mrb[0].mxu0
    %v1950 = vadd.f32 %v1861, %v1949
    %1951 = vmatprep.mubr.f32.mxu0 0.0
    %1952 = vmatmul.mubr.f32.gmra.mrb[0].mxu0 %v1799
    %v1953 = vpop.f32.mrb[0].mxu0
    %v1954 = vadd.f32 %v1857, %v1953
    %v1955 = vpop.f32.mrb[0].mxu0
    %v1956 = vadd.f32 %v1861, %v1955
    %1957 = vmatprep.mubr.f32.mxu0 0.0
    %1958 = vmatmul.mubr.f32.gmra.mrb[0].mxu0 %v1800
    %v1959 = vpop.f32.mrb[0].mxu0
    %v1960 = vadd.f32 %v1857, %v1959
    %v1961 = vpop.f32.mrb[0].mxu0
    %v1962 = vadd.f32 %v1861, %v1961
    %1963 = vmatprep.mubr.f32.mxu0 0.0
    %1964 = vmatmul.mubr.f32.gmra.mrb[0].mxu0 %v1801
    %v1965 = vpop.f32.mrb[0].mxu0
    %v1966 = vadd.f32 %v1857, %v1965
    %v1967 = vpop.f32.mrb[0].mxu0
    %v1968 = vadd.f32 %v1861, %v1967
    %1969 = vmatprep.mubr.f32.mxu0 0.0
    %1970 = vmatmul.mubr.f32.gmra.mrb[0].mxu0 %v1802
    %v1971 = vpop.f32.mrb[0].mxu0
    %v1972 = vadd.f32 %v1857, %v1971
    %v1973 = vpop.f32.mrb[0].mxu0
    %v1974 = vadd.f32 %v1861, %v1973
    %1975 = vmatprep.mubr.f32.mxu0 0.0
    %1976 = vmatmul.mubr.f32.gmra.mrb[0].mxu0 %v1803
    %v1977 = vpop.f32.mrb[0].mxu0
    %v1978 = vadd.f32 %v1857, %v1977
    %v1979 = vpop.f32.mrb[0].mxu0
    %v1980 = vadd.f32 %v1861, %v1979
    %1981 = vdwg.mxu0
    %1982 = vmatprep.subr.mxu0 0.0
    %1983 = vmatpush1.msra.mxu0 %v1806
    %1984 = vmatprep.subr.mxu0 0.0
    %1985 = vmatpush1.msra.mxu0 %v1809
    %1986 = vmatprep.subr.mxu0 0.0
    %1987 = vmatpush1.msra.mxu0 %v1812
    %1988 = vmatprep.subr.mxu0 0.0
    %1989 = vmatpush1.msra.mxu0 %v1815
    %1990 = vmatprep.subr.mxu0 0.0
    %1991 = vmatpush1.msra.mxu0 %v1818
    %1992 = vmatprep.subr.mxu0 0.0
    %1993 = vmatpush1.msra.mxu0 %v1821
    %1994 = vmatprep.subr.mxu0 0.0
    %1995 = vmatpush1.msra.mxu0 %v1824
    %1996 = vmatprep.subr.mxu0 0.0
    %1997 = vmatpush1.msra.mxu0 %v1827
    %1998 = vmatprep.subr.mxu0 0.0
    %1999 = vmatpush1.msra.mxu0 %v1830
    %2000 = vmatprep.subr.mxu0 0.0
    %2001 = vmatpush1.msra.mxu0 %v1833
    %2002 = vmatprep.subr.mxu0 0.0
    %2003 = vmatpush1.msra.mxu0 %v1836
    %2004 = vmatprep.subr.mxu0 0.0
    %2005 = vmatpush1.msra.mxu0 %v1839
    %2006 = vmatprep.subr.mxu0 0.0
    %2007 = vmatpush1.msra.mxu0 %v1842
    %2008 = vmatprep.subr.mxu0 0.0
    %2009 = vmatpush1.msra.mxu0 %v1845
    %2010 = vmatprep.subr.mxu0 0.0
    %2011 = vmatpush1.msra.mxu0 %v1848
    %2012 = vmatprep.subr.mxu0 0.0
    %2013 = vmatpush1.msra.mxu0 %v1851
    %2014 = vmatprep.subr.mxu0 0.0
    %2015 = vmatpush1.msra.mxu0 0.0
    %2016 = vmatprep.subr.mxu0 0.0
    %2017 = vmatpush1.msra.mxu0 0.0
    %2018 = vmatprep.subr.mxu0 0.0
    %2019 = vmatpush1.msra.mxu0 0.0
    %2020 = vmatprep.subr.mxu0 0.0
    %2021 = vmatpush1.msra.mxu0 0.0
    %2022 = vmatprep.subr.mxu0 0.0
    %2023 = vmatpush1.msra.mxu0 0.0
    %2024 = vmatprep.subr.mxu0 0.0
    %2025 = vmatpush1.msra.mxu0 0.0
    %2026 = vmatprep.subr.mxu0 0.0
    %2027 = vmatpush1.msra.mxu0 0.0
    %2028 = vmatprep.subr.mxu0 0.0
    %2029 = vmatpush1.msra.mxu0 0.0
    %2030 = vmatprep.subr.mxu0 0.0
    %2031 = vmatpush1.msra.mxu0 0.0
    %2032 = vmatprep.subr.mxu0 0.0
    %2033 = vmatpush1.msra.mxu0 0.0
    %2034 = vmatprep.subr.mxu0 0.0
    %2035 = vmatpush1.msra.mxu0 0.0
    %2036 = vmatprep.subr.mxu0 0.0
    %2037 = vmatpush1.msra.mxu0 0.0
    %2038 = vmatprep.subr.mxu0 0.0
    %2039 = vmatpush1.msra.mxu0 0.0
    %2040 = vmatprep.subr.mxu0 0.0
    %2041 = vmatpush1.msra.mxu0 0.0
    %2042 = vmatprep.subr.mxu0 0.0
    %2043 = vmatpush1.msra.mxu0 0.0
    %2044 = vmatprep.subr.mxu0 0.0
    %2045 = vmatpush1.msra.mxu0 0.0
    %2046 = vmatprep.mubr.f32.mxu0 0.0
    %2047 = vmatmul.mubr.f32.gmra.mrb[0].mxu0 %v1796
    %v2048 = vpop.f32.mrb[0].mxu0
    %v2049 = vadd.f32 %v1865, %v2048
    %v2050 = vpop.f32.mrb[0].mxu0
    %2051 = vmatprep.mubr.f32.mxu0 0.0
    %2052 = vmatmul.mubr.f32.gmra.mrb[0].mxu0 %v1797
    %v2053 = vpop.f32.mrb[0].mxu0
    %v2054 = vadd.f32 %v1865, %v2053
    %v2055 = vpop.f32.mrb[0].mxu0
    %2056 = vmatprep.mubr.f32.mxu0 0.0
    %2057 = vmatmul.mubr.f32.gmra.mrb[0].mxu0 %v1798
    %v2058 = vpop.f32.mrb[0].mxu0
    %v2059 = vadd.f32 %v1865, %v2058
    %v2060 = vpop.f32.mrb[0].mxu0
    %2061 = vmatprep.mubr.f32.mxu0 0.0
    %2062 = vmatmul.mubr.f32.gmra.mrb[0].mxu0 %v1799
    %v2063 = vpop.f32.mrb[0].mxu0
    %v2064 = vadd.f32 %v1865, %v2063
    %v2065 = vpop.f32.mrb[0].mxu0
    %2066 = vmatprep.mubr.f32.mxu0 0.0
    %2067 = vmatmul.mubr.f32.gmra.mrb[0].mxu0 %v1800
    %v2068 = vpop.f32.mrb[0].mxu0
    %v2069 = vadd.f32 %v1865, %v2068
    %v2070 = vpop.f32.mrb[0].mxu0
    %2071 = vmatprep.mubr.f32.mxu0 0.0
    %2072 = vmatmul.mubr.f32.gmra.mrb[0].mxu0 %v1801
    %v2073 = vpop.f32.mrb[0].mxu0
    %v2074 = vadd.f32 %v1865, %v2073
    %v2075 = vpop.f32.mrb[0].mxu0
    %2076 = vmatprep.mubr.f32.mxu0 0.0
    %2077 = vmatmul.mubr.f32.gmra.mrb[0].mxu0 %v1802
    %v2078 = vpop.f32.mrb[0].mxu0
    %v2079 = vadd.f32 %v1865, %v2078
    %v2080 = vpop.f32.mrb[0].mxu0
    %2081 = vmatprep.mubr.f32.mxu0 0.0
    %2082 = vmatmul.mubr.f32.gmra.mrb[0].mxu0 %v1803
    %v2083 = vpop.f32.mrb[0].mxu0
    %v2084 = vadd.f32 %v1865, %v2083
    %v2085 = vpop.f32.mrb[0].mxu0
    %2086 = vdwg.mxu0
    %2087 = vst [vmem:[#allocation2] sm:$0xff] %v1936
    %2088 = vst [vmem:[#allocation2 + $0x8] sm:$0xff] %v1938
    %2089 = vst [vmem:[#allocation2 + $0x10] sm:$0xff] %v2049
    %2090 = vst [vmem:[#allocation2 + $0x18] sm:$0xff] %v1942
    %2091 = vst [vmem:[#allocation2 + $0x20] sm:$0xff] %v1944
    %2092 = vst [vmem:[#allocation2 + $0x28] sm:$0xff] %v2054
    %2093 = vst [vmem:[#allocation2 + $0x30] sm:$0xff] %v1948
    %2094 = vst [vmem:[#allocation2 + $0x38] sm:$0xff] %v1950
    %2095 = vst [vmem:[#allocation2 + $0x40] sm:$0xff] %v2059
    %2096 = vst [vmem:[#allocation2 + $0x48] sm:$0xff] %v1954
    %2097 = vst [vmem:[#allocation2 + $0x50] sm:$0xff] %v1956
    %2098 = vst [vmem:[#allocation2 + $0x58] sm:$0xff] %v2064
    %2099 = vst [vmem:[#allocation2 + $0x60] sm:$0xff] %v1960
    %2100 = vst [vmem:[#allocation2 + $0x68] sm:$0xff] %v1962
    %2101 = vst [vmem:[#allocation2 + $0x70] sm:$0xff] %v2069
    %2102 = vst [vmem:[#allocation2 + $0x78] sm:$0xff] %v1966
    %2103 = vst [vmem:[#allocation2 + $0x80] sm:$0xff] %v1968
    %2104 = vst [vmem:[#allocation2 + $0x88] sm:$0xff] %v2074
    %2105 = vst [vmem:[#allocation2 + $0x90] sm:$0xff] %v1972
    %2106 = vst [vmem:[#allocation2 + $0x98] sm:$0xff] %v1974
    %2107 = vst [vmem:[#allocation2 + $0xa0] sm:$0xff] %v2079
    %2108 = vst [vmem:[#allocation2 + $0xa8] sm:$0xff] %v1978
    %2109 = vst [vmem:[#allocation2 + $0xb0] sm:$0xff] %v1980
    %2110 = vst [vmem:[#allocation2 + $0xb8] sm:$0xff] %v2084
    %v2111 = vld [vmem:[#allocation9] sm:$0xff]
    %v2112 = vld [vmem:[#allocation9 + $0x8] sm:$0xff]
    %v2113 = vld [vmem:[#allocation9 + $0x10] sm:$0xff]
    %v2114 = vld [vmem:[#allocation9 + $0x18] sm:$0xff]
    %v2115 = vld [vmem:[#allocation9 + $0x20] sm:$0xff]
    %v2116 = vld [vmem:[#allocation9 + $0x28] sm:$0xff]
    %v2117 = vld [vmem:[#allocation9 + $0x30] sm:$0xff]
    %v2118 = vld [vmem:[#allocation9 + $0x38] sm:$0xff]
    %v2119 = vld [vmem:[#allocation9 + $0x40] sm:$0xff]
    %v2120 = vld [vmem:[#allocation9 + $0x48] sm:$0xff]
    %v2121 = vld [vmem:[#allocation9 + $0x50] sm:$0xff]
    %v2122 = vld [vmem:[#allocation9 + $0x58] sm:$0xff]
    %v2123 = vld [vmem:[#allocation9 + $0x60] sm:$0xff]
    %v2124 = vld [vmem:[#allocation9 + $0x68] sm:$0xff]
    %v2125 = vld [vmem:[#allocation9 + $0x70] sm:$0xff]
    %v2126 = vld [vmem:[#allocation9 + $0x78] sm:$0xff]
    %v2127 = vld [vmem:[#allocation9 + $0x80] sm:$0xff]
    %v2128 = vld [vmem:[#allocation9 + $0x88] sm:$0xff]
    %v2129 = vld [vmem:[#allocation9 + $0x90] sm:$0xff]
    %v2130 = vld [vmem:[#allocation9 + $0x98] sm:$0xff]
    %v2131 = vld [vmem:[#allocation9 + $0xa0] sm:$0xff]
    %v2132 = vld [vmem:[#allocation9 + $0xa8] sm:$0xff]
    %v2133 = vld [vmem:[#allocation9 + $0xb0] sm:$0xff]
    %v2134 = vld [vmem:[#allocation9 + $0xb8] sm:$0xff]
    %v2135 = vld [vmem:[#allocation9 + $0xc0] sm:$0xff]
    %v2136 = vld [vmem:[#allocation9 + $0xc8] sm:$0xff]
    %v2137 = vld [vmem:[#allocation9 + $0xd0] sm:$0xff]
    %v2138 = vld [vmem:[#allocation9 + $0xd8] sm:$0xff]
    %v2139 = vld [vmem:[#allocation9 + $0xe0] sm:$0xff]
    %v2140 = vld [vmem:[#allocation9 + $0xe8] sm:$0xff]
    %v2141 = vld [vmem:[#allocation9 + $0xf0] sm:$0xff]
    %v2142 = vld [vmem:[#allocation9 + $0xf8] sm:$0xff]
    %v2143 = vld [vmem:[#allocation9 + $0x100] sm:$0xff]
    %v2144 = vld [vmem:[#allocation9 + $0x108] sm:$0xff]
    %v2145 = vld [vmem:[#allocation9 + $0x110] sm:$0xff]
    %v2146 = vld [vmem:[#allocation9 + $0x118] sm:$0xff]
    %v2147 = vld [vmem:[#allocation9 + $0x120] sm:$0xff]
    %v2148 = vld [vmem:[#allocation9 + $0x128] sm:$0xff]
    %v2149 = vld [vmem:[#allocation9 + $0x130] sm:$0xff]
    %v2150 = vld [vmem:[#allocation9 + $0x138] sm:$0xff]
    %v2151 = vld [vmem:[#allocation9 + $0x140] sm:$0xff]
    %v2152 = vld [vmem:[#allocation9 + $0x148] sm:$0xff]
    %v2153 = vld [vmem:[#allocation9 + $0x150] sm:$0xff]
    %v2154 = vld [vmem:[#allocation9 + $0x158] sm:$0xff]
    %v2155 = vld [vmem:[#allocation9 + $0x160] sm:$0xff]
    %v2156 = vld [vmem:[#allocation9 + $0x168] sm:$0xff]
    %v2157 = vld [vmem:[#allocation9 + $0x170] sm:$0xff]
    %v2158 = vld [vmem:[#allocation9 + $0x178] sm:$0xff]
    %v2159 = vld [vmem:[%s8] sm:$0x1]
    %v2161 = vlaneseq
    %v2162 = vshrl.u32 %v2161, 7
    %v2163 = vsub.s32 0, %v2162
    %v2164 = vrot.slane %v2159, %v2163
    %v2166 = vld [vmem:[%s431] sm:$0xff]
    %v2167 = vld [vmem:[%s431 + $0x8] sm:$0xff]
    %v2168 = vld [vmem:[%s431 + $0x10] sm:$0xff]
    %2169 = vmatprep.subr.mxu0 %v2112
    %2170 = vmatpush1.msra.mxu0 %v2111
    %2171 = vmatprep.subr.mxu0 %v2115
    %2172 = vmatpush1.msra.mxu0 %v2114
    %2173 = vmatprep.subr.mxu0 %v2118
    %2174 = vmatpush1.msra.mxu0 %v2117
    %2175 = vmatprep.subr.mxu0 %v2121
    %2176 = vmatpush1.msra.mxu0 %v2120
    %2177 = vmatprep.subr.mxu0 %v2124
    %2178 = vmatpush1.msra.mxu0 %v2123
    %2179 = vmatprep.subr.mxu0 %v2127
    %2180 = vmatpush1.msra.mxu0 %v2126
    %2181 = vmatprep.subr.mxu0 %v2130
    %2182 = vmatpush1.msra.mxu0 %v2129
    %2183 = vmatprep.subr.mxu0 %v2133
    %2184 = vmatpush1.msra.mxu0 %v2132
    %2185 = vmatprep.subr.mxu0 %v2136
    %2186 = vmatpush1.msra.mxu0 %v2135
    %2187 = vmatprep.subr.mxu0 %v2139
    %2188 = vmatpush1.msra.mxu0 %v2138
    %2189 = vmatprep.subr.mxu0 %v2142
    %2190 = vmatpush1.msra.mxu0 %v2141
    %2191 = vmatprep.subr.mxu0 %v2145
    %2192 = vmatpush1.msra.mxu0 %v2144
    %2193 = vmatprep.subr.mxu0 %v2148
    %2194 = vmatpush1.msra.mxu0 %v2147
    %2195 = vmatprep.subr.mxu0 %v2151
    %2196 = vmatpush1.msra.mxu0 %v2150
    %2197 = vmatprep.subr.mxu0 %v2154
    %2198 = vmatpush1.msra.mxu0 %v2153
    %2199 = vmatprep.subr.mxu0 %v2157
    %2200 = vmatpush1.msra.mxu0 %v2156
    %2201 = vmatprep.subr.mxu0 0.0
    %2202 = vmatpush1.msra.mxu0 0.0
    %2203 = vmatprep.subr.mxu0 0.0
    %2204 = vmatpush1.msra.mxu0 0.0
    %2205 = vmatprep.subr.mxu0 0.0
    %2206 = vmatpush1.msra.mxu0 0.0
    %2207 = vmatprep.subr.mxu0 0.0
    %2208 = vmatpush1.msra.mxu0 0.0
    %2209 = vmatprep.subr.mxu0 0.0
    %2210 = vmatpush1.msra.mxu0 0.0
    %2211 = vmatprep.subr.mxu0 0.0
    %2212 = vmatpush1.msra.mxu0 0.0
    %2213 = vmatprep.subr.mxu0 0.0
    %2214 = vmatpush1.msra.mxu0 0.0
    %2215 = vmatprep.subr.mxu0 0.0
    %2216 = vmatpush1.msra.mxu0 0.0
    %2217 = vmatprep.subr.mxu0 0.0
    %2218 = vmatpush1.msra.mxu0 0.0
    %2219 = vmatprep.subr.mxu0 0.0
    %2220 = vmatpush1.msra.mxu0 0.0
    %2221 = vmatprep.subr.mxu0 0.0
    %2222 = vmatpush1.msra.mxu0 0.0
    %2223 = vmatprep.subr.mxu0 0.0
    %2224 = vmatpush1.msra.mxu0 0.0
    %2225 = vmatprep.subr.mxu0 0.0
    %2226 = vmatpush1.msra.mxu0 0.0
    %2227 = vmatprep.subr.mxu0 0.0
    %2228 = vmatpush1.msra.mxu0 0.0
    %2229 = vmatprep.subr.mxu0 0.0
    %2230 = vmatpush1.msra.mxu0 0.0
    %2231 = vmatprep.subr.mxu0 0.0
    %2232 = vmatpush1.msra.mxu0 0.0
    %2233 = vmatprep.mubr.f32.mxu0 0.0
    %2234 = vmatmul.mubr.f32.gmra.mrb[0].mxu0 0.0
    %v2235 = vpop.f32.mrb[0].mxu0
    %v2236 = vadd.f32 0.0, %v2235
    %v2237 = vpop.f32.mrb[0].mxu0
    %v2238 = vadd.f32 0.0, %v2237
    %2239 = vdwg.mxu0
    %2240 = vmatprep.subr.mxu0 0.0
    %2241 = vmatpush1.msra.mxu0 %v2113
    %2242 = vmatprep.subr.mxu0 0.0
    %2243 = vmatpush1.msra.mxu0 %v2116
    %2244 = vmatprep.subr.mxu0 0.0
    %2245 = vmatpush1.msra.mxu0 %v2119
    %2246 = vmatprep.subr.mxu0 0.0
    %2247 = vmatpush1.msra.mxu0 %v2122
    %2248 = vmatprep.subr.mxu0 0.0
    %2249 = vmatpush1.msra.mxu0 %v2125
    %2250 = vmatprep.subr.mxu0 0.0
    %2251 = vmatpush1.msra.mxu0 %v2128
    %2252 = vmatprep.subr.mxu0 0.0
    %2253 = vmatpush1.msra.mxu0 %v2131
    %2254 = vmatprep.subr.mxu0 0.0
    %2255 = vmatpush1.msra.mxu0 %v2134
    %2256 = vmatprep.subr.mxu0 0.0
    %2257 = vmatpush1.msra.mxu0 %v2137
    %2258 = vmatprep.subr.mxu0 0.0
    %2259 = vmatpush1.msra.mxu0 %v2140
    %2260 = vmatprep.subr.mxu0 0.0
    %2261 = vmatpush1.msra.mxu0 %v2143
    %2262 = vmatprep.subr.mxu0 0.0
    %2263 = vmatpush1.msra.mxu0 %v2146
    %2264 = vmatprep.subr.mxu0 0.0
    %2265 = vmatpush1.msra.mxu0 %v2149
    %2266 = vmatprep.subr.mxu0 0.0
    %2267 = vmatpush1.msra.mxu0 %v2152
    %2268 = vmatprep.subr.mxu0 0.0
    %2269 = vmatpush1.msra.mxu0 %v2155
    %2270 = vmatprep.subr.mxu0 0.0
    %2271 = vmatpush1.msra.mxu0 %v2158
    %2272 = vmatprep.subr.mxu0 0.0
    %2273 = vmatpush1.msra.mxu0 0.0
    %2274 = vmatprep.subr.mxu0 0.0
    %2275 = vmatpush1.msra.mxu0 0.0
    %2276 = vmatprep.subr.mxu0 0.0
    %2277 = vmatpush1.msra.mxu0 0.0
    %2278 = vmatprep.subr.mxu0 0.0
    %2279 = vmatpush1.msra.mxu0 0.0
    %2280 = vmatprep.subr.mxu0 0.0
    %2281 = vmatpush1.msra.mxu0 0.0
    %2282 = vmatprep.subr.mxu0 0.0
    %2283 = vmatpush1.msra.mxu0 0.0
    %2284 = vmatprep.subr.mxu0 0.0
    %2285 = vmatpush1.msra.mxu0 0.0
    %2286 = vmatprep.subr.mxu0 0.0
    %2287 = vmatpush1.msra.mxu0 0.0
    %2288 = vmatprep.subr.mxu0 0.0
    %2289 = vmatpush1.msra.mxu0 0.0
    %2290 = vmatprep.subr.mxu0 0.0
    %2291 = vmatpush1.msra.mxu0 0.0
    %2292 = vmatprep.subr.mxu0 0.0
    %2293 = vmatpush1.msra.mxu0 0.0
    %2294 = vmatprep.subr.mxu0 0.0
    %2295 = vmatpush1.msra.mxu0 0.0
    %2296 = vmatprep.subr.mxu0 0.0
    %2297 = vmatpush1.msra.mxu0 0.0
    %2298 = vmatprep.subr.mxu0 0.0
    %2299 = vmatpush1.msra.mxu0 0.0
    %2300 = vmatprep.subr.mxu0 0.0
    %2301 = vmatpush1.msra.mxu0 0.0
    %2302 = vmatprep.subr.mxu0 0.0
    %2303 = vmatpush1.msra.mxu0 0.0
    %2304 = vmatprep.mubr.f32.mxu0 0.0
    %2305 = vmatmul.mubr.f32.gmra.mrb[0].mxu0 0.0
    %v2306 = vpop.f32.mrb[0].mxu0
    %v2307 = vadd.f32 0.0, %v2306
    %v2308 = vpop.f32.mrb[0].mxu0
    %2309 = vdwg.mxu0
    %v2310 = vadd.f32 %v2166, %v2236
    %v2311 = vxor.u32 %v2310, 2147483648
    %v2312 = vmul.f32 %v2311, 1.442695
    %v2313 = vpow.pop %v2312
    %v2314 = vadd.f32 %v2313, 1.0
    %v2315 = vrcp.pop %v2314
    %v2316 = vmul.f32 1.0, %v2315
    %v2317 = vadd.f32 %v2167, %v2238
    %v2318 = vxor.u32 %v2317, 2147483648
    %v2319 = vmul.f32 %v2318, 1.442695
    %v2320 = vpow.pop %v2319
    %v2321 = vadd.f32 %v2320, 1.0
    %v2322 = vrcp.pop %v2321
    %v2323 = vmul.f32 1.0, %v2322
    %v2324 = vadd.f32 %v2307, %v2164
    %v2325 = vmul.f32 %v2316, %v2324
    %v2326 = vadd.f32 %v2168, %v2325
    %v2327 = vtanh.pop %v2326
    %v2328 = vsub.f32 1.0, %v2323
    %v2329 = vmul.f32 %v2328, %v2327
    %v2330 = vmul.f32 %v2323, 0.0
    %v2331 = vadd.f32 %v2329, %v2330
    %v2332 = vld [vmem:[%s601] sm:$0xff]
    %v2333 = vld [vmem:[%s601 + $0x8] sm:$0xff]
    %v2334 = vld [vmem:[%s601 + $0x10] sm:$0xff]
    %2335 = vmatprep.subr.mxu0 %v2112
    %2336 = vmatpush1.msra.mxu0 %v2111
    %2337 = vmatprep.subr.mxu0 %v2115
    %2338 = vmatpush1.msra.mxu0 %v2114
    %2339 = vmatprep.subr.mxu0 %v2118
    %2340 = vmatpush1.msra.mxu0 %v2117
    %2341 = vmatprep.subr.mxu0 %v2121
    %2342 = vmatpush1.msra.mxu0 %v2120
    %2343 = vmatprep.subr.mxu0 %v2124
    %2344 = vmatpush1.msra.mxu0 %v2123
    %2345 = vmatprep.subr.mxu0 %v2127
    %2346 = vmatpush1.msra.mxu0 %v2126
    %2347 = vmatprep.subr.mxu0 %v2130
    %2348 = vmatpush1.msra.mxu0 %v2129
    %2349 = vmatprep.subr.mxu0 %v2133
    %2350 = vmatpush1.msra.mxu0 %v2132
    %2351 = vmatprep.subr.mxu0 %v2136
    %2352 = vmatpush1.msra.mxu0 %v2135
    %2353 = vmatprep.subr.mxu0 %v2139
    %2354 = vmatpush1.msra.mxu0 %v2138
    %2355 = vmatprep.subr.mxu0 %v2142
    %2356 = vmatpush1.msra.mxu0 %v2141
    %2357 = vmatprep.subr.mxu0 %v2145
    %2358 = vmatpush1.msra.mxu0 %v2144
    %2359 = vmatprep.subr.mxu0 %v2148
    %2360 = vmatpush1.msra.mxu0 %v2147
    %2361 = vmatprep.subr.mxu0 %v2151
    %2362 = vmatpush1.msra.mxu0 %v2150
    %2363 = vmatprep.subr.mxu0 %v2154
    %2364 = vmatpush1.msra.mxu0 %v2153
    %2365 = vmatprep.subr.mxu0 %v2157
    %2366 = vmatpush1.msra.mxu0 %v2156
    %2367 = vmatprep.subr.mxu0 0.0
    %2368 = vmatpush1.msra.mxu0 0.0
    %2369 = vmatprep.subr.mxu0 0.0
    %2370 = vmatpush1.msra.mxu0 0.0
    %2371 = vmatprep.subr.mxu0 0.0
    %2372 = vmatpush1.msra.mxu0 0.0
    %2373 = vmatprep.subr.mxu0 0.0
    %2374 = vmatpush1.msra.mxu0 0.0
    %2375 = vmatprep.subr.mxu0 0.0
    %2376 = vmatpush1.msra.mxu0 0.0
    %2377 = vmatprep.subr.mxu0 0.0
    %2378 = vmatpush1.msra.mxu0 0.0
    %2379 = vmatprep.subr.mxu0 0.0
    %2380 = vmatpush1.msra.mxu0 0.0
    %2381 = vmatprep.subr.mxu0 0.0
    %2382 = vmatpush1.msra.mxu0 0.0
    %2383 = vmatprep.subr.mxu0 0.0
    %2384 = vmatpush1.msra.mxu0 0.0
    %2385 = vmatprep.subr.mxu0 0.0
    %2386 = vmatpush1.msra.mxu0 0.0
    %2387 = vmatprep.subr.mxu0 0.0
    %2388 = vmatpush1.msra.mxu0 0.0
    %2389 = vmatprep.subr.mxu0 0.0
    %2390 = vmatpush1.msra.mxu0 0.0
    %2391 = vmatprep.subr.mxu0 0.0
    %2392 = vmatpush1.msra.mxu0 0.0
    %2393 = vmatprep.subr.mxu0 0.0
    %2394 = vmatpush1.msra.mxu0 0.0
    %2395 = vmatprep.subr.mxu0 0.0
    %2396 = vmatpush1.msra.mxu0 0.0
    %2397 = vmatprep.subr.mxu0 0.0
    %2398 = vmatpush1.msra.mxu0 0.0
    %2399 = vmatprep.mubr.f32.mxu0 0.0
    %2400 = vmatmul.mubr.f32.gmra.mrb[0].mxu0 %v2331
    %v2401 = vpop.f32.mrb[0].mxu0
    %v2402 = vadd.f32 0.0, %v2401
    %v2403 = vpop.f32.mrb[0].mxu0
    %v2404 = vadd.f32 0.0, %v2403
    %2405 = vdwg.mxu0
    %2406 = vmatprep.subr.mxu0 0.0
    %2407 = vmatpush1.msra.mxu0 %v2113
    %2408 = vmatprep.subr.mxu0 0.0
    %2409 = vmatpush1.msra.mxu0 %v2116
    %2410 = vmatprep.subr.mxu0 0.0
    %2411 = vmatpush1.msra.mxu0 %v2119
    %2412 = vmatprep.subr.mxu0 0.0
    %2413 = vmatpush1.msra.mxu0 %v2122
    %2414 = vmatprep.subr.mxu0 0.0
    %2415 = vmatpush1.msra.mxu0 %v2125
    %2416 = vmatprep.subr.mxu0 0.0
    %2417 = vmatpush1.msra.mxu0 %v2128
    %2418 = vmatprep.subr.mxu0 0.0
    %2419 = vmatpush1.msra.mxu0 %v2131
    %2420 = vmatprep.subr.mxu0 0.0
    %2421 = vmatpush1.msra.mxu0 %v2134
    %2422 = vmatprep.subr.mxu0 0.0
    %2423 = vmatpush1.msra.mxu0 %v2137
    %2424 = vmatprep.subr.mxu0 0.0
    %2425 = vmatpush1.msra.mxu0 %v2140
    %2426 = vmatprep.subr.mxu0 0.0
    %2427 = vmatpush1.msra.mxu0 %v2143
    %2428 = vmatprep.subr.mxu0 0.0
    %2429 = vmatpush1.msra.mxu0 %v2146
    %2430 = vmatprep.subr.mxu0 0.0
    %2431 = vmatpush1.msra.mxu0 %v2149
    %2432 = vmatprep.subr.mxu0 0.0
    %2433 = vmatpush1.msra.mxu0 %v2152
    %2434 = vmatprep.subr.mxu0 0.0
    %2435 = vmatpush1.msra.mxu0 %v2155
    %2436 = vmatprep.subr.mxu0 0.0
    %2437 = vmatpush1.msra.mxu0 %v2158
    %2438 = vmatprep.subr.mxu0 0.0
    %2439 = vmatpush1.msra.mxu0 0.0
    %2440 = vmatprep.subr.mxu0 0.0
    %2441 = vmatpush1.msra.mxu0 0.0
    %2442 = vmatprep.subr.mxu0 0.0
    %2443 = vmatpush1.msra.mxu0 0.0
    %2444 = vmatprep.subr.mxu0 0.0
    %2445 = vmatpush1.msra.mxu0 0.0
    %2446 = vmatprep.subr.mxu0 0.0
    %2447 = vmatpush1.msra.mxu0 0.0
    %2448 = vmatprep.subr.mxu0 0.0
    %2449 = vmatpush1.msra.mxu0 0.0
    %2450 = vmatprep.subr.mxu0 0.0
    %2451 = vmatpush1.msra.mxu0 0.0
    %2452 = vmatprep.subr.mxu0 0.0
    %2453 = vmatpush1.msra.mxu0 0.0
    %2454 = vmatprep.subr.mxu0 0.0
    %2455 = vmatpush1.msra.mxu0 0.0
    %2456 = vmatprep.subr.mxu0 0.0
    %2457 = vmatpush1.msra.mxu0 0.0
    %2458 = vmatprep.subr.mxu0 0.0
    %2459 = vmatpush1.msra.mxu0 0.0
    %2460 = vmatprep.subr.mxu0 0.0
    %2461 = vmatpush1.msra.mxu0 0.0
    %2462 = vmatprep.subr.mxu0 0.0
    %2463 = vmatpush1.msra.mxu0 0.0
    %2464 = vmatprep.subr.mxu0 0.0
    %2465 = vmatpush1.msra.mxu0 0.0
    %2466 = vmatprep.subr.mxu0 0.0
    %2467 = vmatpush1.msra.mxu0 0.0
    %2468 = vmatprep.subr.mxu0 0.0
    %2469 = vmatpush1.msra.mxu0 0.0
    %2470 = vmatprep.mubr.f32.mxu0 0.0
    %2471 = vmatmul.mubr.f32.gmra.mrb[0].mxu0 %v2331
    %v2472 = vpop.f32.mrb[0].mxu0
    %v2473 = vadd.f32 0.0, %v2472
    %v2474 = vpop.f32.mrb[0].mxu0
    %2475 = vdwg.mxu0
    %v2476 = vadd.f32 %v2332, %v2402
    %v2477 = vxor.u32 %v2476, 2147483648
    %v2478 = vmul.f32 %v2477, 1.442695
    %v2479 = vpow.pop %v2478
    %v2480 = vadd.f32 %v2479, 1.0
    %v2481 = vrcp.pop %v2480
    %v2482 = vmul.f32 1.0, %v2481
    %v2483 = vadd.f32 %v2333, %v2404
    %v2484 = vxor.u32 %v2483, 2147483648
    %v2485 = vmul.f32 %v2484, 1.442695
    %v2486 = vpow.pop %v2485
    %v2487 = vadd.f32 %v2486, 1.0
    %v2488 = vrcp.pop %v2487
    %v2489 = vmul.f32 1.0, %v2488
    %v2490 = vadd.f32 %v2473, %v2164
    %v2491 = vmul.f32 %v2482, %v2490
    %v2492 = vadd.f32 %v2334, %v2491
    %v2493 = vtanh.pop %v2492
    %v2494 = vsub.f32 1.0, %v2489
    %v2495 = vmul.f32 %v2494, %v2493
    %v2496 = vmul.f32 %v2489, %v2331
    %v2497 = vadd.f32 %v2495, %v2496
    %v2498 = vld [vmem:[%s772] sm:$0xff]
    %v2499 = vld [vmem:[%s772 + $0x8] sm:$0xff]
    %v2500 = vld [vmem:[%s772 + $0x10] sm:$0xff]
    %2501 = vmatprep.subr.mxu0 %v2112
    %2502 = vmatpush1.msra.mxu0 %v2111
    %2503 = vmatprep.subr.mxu0 %v2115
    %2504 = vmatpush1.msra.mxu0 %v2114
    %2505 = vmatprep.subr.mxu0 %v2118
    %2506 = vmatpush1.msra.mxu0 %v2117
    %2507 = vmatprep.subr.mxu0 %v2121
    %2508 = vmatpush1.msra.mxu0 %v2120
    %2509 = vmatprep.subr.mxu0 %v2124
    %2510 = vmatpush1.msra.mxu0 %v2123
    %2511 = vmatprep.subr.mxu0 %v2127
    %2512 = vmatpush1.msra.mxu0 %v2126
    %2513 = vmatprep.subr.mxu0 %v2130
    %2514 = vmatpush1.msra.mxu0 %v2129
    %2515 = vmatprep.subr.mxu0 %v2133
    %2516 = vmatpush1.msra.mxu0 %v2132
    %2517 = vmatprep.subr.mxu0 %v2136
    %2518 = vmatpush1.msra.mxu0 %v2135
    %2519 = vmatprep.subr.mxu0 %v2139
    %2520 = vmatpush1.msra.mxu0 %v2138
    %2521 = vmatprep.subr.mxu0 %v2142
    %2522 = vmatpush1.msra.mxu0 %v2141
    %2523 = vmatprep.subr.mxu0 %v2145
    %2524 = vmatpush1.msra.mxu0 %v2144
    %2525 = vmatprep.subr.mxu0 %v2148
    %2526 = vmatpush1.msra.mxu0 %v2147
    %2527 = vmatprep.subr.mxu0 %v2151
    %2528 = vmatpush1.msra.mxu0 %v2150
    %2529 = vmatprep.subr.mxu0 %v2154
    %2530 = vmatpush1.msra.mxu0 %v2153
    %2531 = vmatprep.subr.mxu0 %v2157
    %2532 = vmatpush1.msra.mxu0 %v2156
    %2533 = vmatprep.subr.mxu0 0.0
    %2534 = vmatpush1.msra.mxu0 0.0
    %2535 = vmatprep.subr.mxu0 0.0
    %2536 = vmatpush1.msra.mxu0 0.0
    %2537 = vmatprep.subr.mxu0 0.0
    %2538 = vmatpush1.msra.mxu0 0.0
    %2539 = vmatprep.subr.mxu0 0.0
    %2540 = vmatpush1.msra.mxu0 0.0
    %2541 = vmatprep.subr.mxu0 0.0
    %2542 = vmatpush1.msra.mxu0 0.0
    %2543 = vmatprep.subr.mxu0 0.0
    %2544 = vmatpush1.msra.mxu0 0.0
    %2545 = vmatprep.subr.mxu0 0.0
    %2546 = vmatpush1.msra.mxu0 0.0
    %2547 = vmatprep.subr.mxu0 0.0
    %2548 = vmatpush1.msra.mxu0 0.0
    %2549 = vmatprep.subr.mxu0 0.0
    %2550 = vmatpush1.msra.mxu0 0.0
    %2551 = vmatprep.subr.mxu0 0.0
    %2552 = vmatpush1.msra.mxu0 0.0
    %2553 = vmatprep.subr.mxu0 0.0
    %2554 = vmatpush1.msra.mxu0 0.0
    %2555 = vmatprep.subr.mxu0 0.0
    %2556 = vmatpush1.msra.mxu0 0.0
    %2557 = vmatprep.subr.mxu0 0.0
    %2558 = vmatpush1.msra.mxu0 0.0
    %2559 = vmatprep.subr.mxu0 0.0
    %2560 = vmatpush1.msra.mxu0 0.0
    %2561 = vmatprep.subr.mxu0 0.0
    %2562 = vmatpush1.msra.mxu0 0.0
    %2563 = vmatprep.subr.mxu0 0.0
    %2564 = vmatpush1.msra.mxu0 0.0
    %2565 = vmatprep.mubr.f32.mxu0 0.0
    %2566 = vmatmul.mubr.f32.gmra.mrb[0].mxu0 %v2497
    %v2567 = vpop.f32.mrb[0].mxu0
    %v2568 = vadd.f32 0.0, %v2567
    %v2569 = vpop.f32.mrb[0].mxu0
    %v2570 = vadd.f32 0.0, %v2569
    %2571 = vdwg.mxu0
    %2572 = vmatprep.subr.mxu0 0.0
    %2573 = vmatpush1.msra.mxu0 %v2113
    %2574 = vmatprep.subr.mxu0 0.0
    %2575 = vmatpush1.msra.mxu0 %v2116
    %2576 = vmatprep.subr.mxu0 0.0
    %2577 = vmatpush1.msra.mxu0 %v2119
    %2578 = vmatprep.subr.mxu0 0.0
    %2579 = vmatpush1.msra.mxu0 %v2122
    %2580 = vmatprep.subr.mxu0 0.0
    %2581 = vmatpush1.msra.mxu0 %v2125
    %2582 = vmatprep.subr.mxu0 0.0
    %2583 = vmatpush1.msra.mxu0 %v2128
    %2584 = vmatprep.subr.mxu0 0.0
    %2585 = vmatpush1.msra.mxu0 %v2131
    %2586 = vmatprep.subr.mxu0 0.0
    %2587 = vmatpush1.msra.mxu0 %v2134
    %2588 = vmatprep.subr.mxu0 0.0
    %2589 = vmatpush1.msra.mxu0 %v2137
    %2590 = vmatprep.subr.mxu0 0.0
    %2591 = vmatpush1.msra.mxu0 %v2140
    %2592 = vmatprep.subr.mxu0 0.0
    %2593 = vmatpush1.msra.mxu0 %v2143
    %2594 = vmatprep.subr.mxu0 0.0
    %2595 = vmatpush1.msra.mxu0 %v2146
    %2596 = vmatprep.subr.mxu0 0.0
    %2597 = vmatpush1.msra.mxu0 %v2149
    %2598 = vmatprep.subr.mxu0 0.0
    %2599 = vmatpush1.msra.mxu0 %v2152
    %2600 = vmatprep.subr.mxu0 0.0
    %2601 = vmatpush1.msra.mxu0 %v2155
    %2602 = vmatprep.subr.mxu0 0.0
    %2603 = vmatpush1.msra.mxu0 %v2158
    %2604 = vmatprep.subr.mxu0 0.0
    %2605 = vmatpush1.msra.mxu0 0.0
    %2606 = vmatprep.subr.mxu0 0.0
    %2607 = vmatpush1.msra.mxu0 0.0
    %2608 = vmatprep.subr.mxu0 0.0
    %2609 = vmatpush1.msra.mxu0 0.0
    %2610 = vmatprep.subr.mxu0 0.0
    %2611 = vmatpush1.msra.mxu0 0.0
    %2612 = vmatprep.subr.mxu0 0.0
    %2613 = vmatpush1.msra.mxu0 0.0
    %2614 = vmatprep.subr.mxu0 0.0
    %2615 = vmatpush1.msra.mxu0 0.0
    %2616 = vmatprep.subr.mxu0 0.0
    %2617 = vmatpush1.msra.mxu0 0.0
    %2618 = vmatprep.subr.mxu0 0.0
    %2619 = vmatpush1.msra.mxu0 0.0
    %2620 = vmatprep.subr.mxu0 0.0
    %2621 = vmatpush1.msra.mxu0 0.0
    %2622 = vmatprep.subr.mxu0 0.0
    %2623 = vmatpush1.msra.mxu0 0.0
    %2624 = vmatprep.subr.mxu0 0.0
    %2625 = vmatpush1.msra.mxu0 0.0
    %2626 = vmatprep.subr.mxu0 0.0
    %2627 = vmatpush1.msra.mxu0 0.0
    %2628 = vmatprep.subr.mxu0 0.0
    %2629 = vmatpush1.msra.mxu0 0.0
    %2630 = vmatprep.subr.mxu0 0.0
    %2631 = vmatpush1.msra.mxu0 0.0
    %2632 = vmatprep.subr.mxu0 0.0
    %2633 = vmatpush1.msra.mxu0 0.0
    %2634 = vmatprep.subr.mxu0 0.0
    %2635 = vmatpush1.msra.mxu0 0.0
    %2636 = vmatprep.mubr.f32.mxu0 0.0
    %2637 = vmatmul.mubr.f32.gmra.mrb[0].mxu0 %v2497
    %v2638 = vpop.f32.mrb[0].mxu0
    %v2639 = vadd.f32 0.0, %v2638
    %v2640 = vpop.f32.mrb[0].mxu0
    %2641 = vdwg.mxu0
    %v2642 = vadd.f32 %v2498, %v2568
    %v2643 = vxor.u32 %v2642, 2147483648
    %v2644 = vmul.f32 %v2643, 1.442695
    %v2645 = vpow.pop %v2644
    %v2646 = vadd.f32 %v2645, 1.0
    %v2647 = vrcp.pop %v2646
    %v2648 = vmul.f32 1.0, %v2647
    %v2649 = vadd.f32 %v2499, %v2570
    %v2650 = vxor.u32 %v2649, 2147483648
    %v2651 = vmul.f32 %v2650, 1.442695
    %v2652 = vpow.pop %v2651
    %v2653 = vadd.f32 %v2652, 1.0
    %v2654 = vrcp.pop %v2653
    %v2655 = vmul.f32 1.0, %v2654
    %v2656 = vadd.f32 %v2639, %v2164
    %v2657 = vmul.f32 %v2648, %v2656
    %v2658 = vadd.f32 %v2500, %v2657
    %v2659 = vtanh.pop %v2658
    %v2660 = vsub.f32 1.0, %v2655
    %v2661 = vmul.f32 %v2660, %v2659
    %v2662 = vmul.f32 %v2655, %v2497
    %v2663 = vadd.f32 %v2661, %v2662
    %v2664 = vld [vmem:[%s943] sm:$0xff]
    %v2665 = vld [vmem:[%s943 + $0x8] sm:$0xff]
    %v2666 = vld [vmem:[%s943 + $0x10] sm:$0xff]
    %2667 = vmatprep.subr.mxu0 %v2112
    %2668 = vmatpush1.msra.mxu0 %v2111
    %2669 = vmatprep.subr.mxu0 %v2115
    %2670 = vmatpush1.msra.mxu0 %v2114
    %2671 = vmatprep.subr.mxu0 %v2118
    %2672 = vmatpush1.msra.mxu0 %v2117
    %2673 = vmatprep.subr.mxu0 %v2121
    %2674 = vmatpush1.msra.mxu0 %v2120
    %2675 = vmatprep.subr.mxu0 %v2124
    %2676 = vmatpush1.msra.mxu0 %v2123
    %2677 = vmatprep.subr.mxu0 %v2127
    %2678 = vmatpush1.msra.mxu0 %v2126
    %2679 = vmatprep.subr.mxu0 %v2130
    %2680 = vmatpush1.msra.mxu0 %v2129
    %2681 = vmatprep.subr.mxu0 %v2133
    %2682 = vmatpush1.msra.mxu0 %v2132
    %2683 = vmatprep.subr.mxu0 %v2136
    %2684 = vmatpush1.msra.mxu0 %v2135
    %2685 = vmatprep.subr.mxu0 %v2139
    %2686 = vmatpush1.msra.mxu0 %v2138
    %2687 = vmatprep.subr.mxu0 %v2142
    %2688 = vmatpush1.msra.mxu0 %v2141
    %2689 = vmatprep.subr.mxu0 %v2145
    %2690 = vmatpush1.msra.mxu0 %v2144
    %2691 = vmatprep.subr.mxu0 %v2148
    %2692 = vmatpush1.msra.mxu0 %v2147
    %2693 = vmatprep.subr.mxu0 %v2151
    %2694 = vmatpush1.msra.mxu0 %v2150
    %2695 = vmatprep.subr.mxu0 %v2154
    %2696 = vmatpush1.msra.mxu0 %v2153
    %2697 = vmatprep.subr.mxu0 %v2157
    %2698 = vmatpush1.msra.mxu0 %v2156
    %2699 = vmatprep.subr.mxu0 0.0
    %2700 = vmatpush1.msra.mxu0 0.0
    %2701 = vmatprep.subr.mxu0 0.0
    %2702 = vmatpush1.msra.mxu0 0.0
    %2703 = vmatprep.subr.mxu0 0.0
    %2704 = vmatpush1.msra.mxu0 0.0
    %2705 = vmatprep.subr.mxu0 0.0
    %2706 = vmatpush1.msra.mxu0 0.0
    %2707 = vmatprep.subr.mxu0 0.0
    %2708 = vmatpush1.msra.mxu0 0.0
    %2709 = vmatprep.subr.mxu0 0.0
    %2710 = vmatpush1.msra.mxu0 0.0
    %2711 = vmatprep.subr.mxu0 0.0
    %2712 = vmatpush1.msra.mxu0 0.0
    %2713 = vmatprep.subr.mxu0 0.0
    %2714 = vmatpush1.msra.mxu0 0.0
    %2715 = vmatprep.subr.mxu0 0.0
    %2716 = vmatpush1.msra.mxu0 0.0
    %2717 = vmatprep.subr.mxu0 0.0
    %2718 = vmatpush1.msra.mxu0 0.0
    %2719 = vmatprep.subr.mxu0 0.0
    %2720 = vmatpush1.msra.mxu0 0.0
    %2721 = vmatprep.subr.mxu0 0.0
    %2722 = vmatpush1.msra.mxu0 0.0
    %2723 = vmatprep.subr.mxu0 0.0
    %2724 = vmatpush1.msra.mxu0 0.0
    %2725 = vmatprep.subr.mxu0 0.0
    %2726 = vmatpush1.msra.mxu0 0.0
    %2727 = vmatprep.subr.mxu0 0.0
    %2728 = vmatpush1.msra.mxu0 0.0
    %2729 = vmatprep.subr.mxu0 0.0
    %2730 = vmatpush1.msra.mxu0 0.0
    %2731 = vmatprep.mubr.f32.mxu0 0.0
    %2732 = vmatmul.mubr.f32.gmra.mrb[0].mxu0 %v2663
    %v2733 = vpop.f32.mrb[0].mxu0
    %v2734 = vadd.f32 0.0, %v2733
    %v2735 = vpop.f32.mrb[0].mxu0
    %v2736 = vadd.f32 0.0, %v2735
    %2737 = vdwg.mxu0
    %2738 = vmatprep.subr.mxu0 0.0
    %2739 = vmatpush1.msra.mxu0 %v2113
    %2740 = vmatprep.subr.mxu0 0.0
    %2741 = vmatpush1.msra.mxu0 %v2116
    %2742 = vmatprep.subr.mxu0 0.0
    %2743 = vmatpush1.msra.mxu0 %v2119
    %2744 = vmatprep.subr.mxu0 0.0
    %2745 = vmatpush1.msra.mxu0 %v2122
    %2746 = vmatprep.subr.mxu0 0.0
    %2747 = vmatpush1.msra.mxu0 %v2125
    %2748 = vmatprep.subr.mxu0 0.0
    %2749 = vmatpush1.msra.mxu0 %v2128
    %2750 = vmatprep.subr.mxu0 0.0
    %2751 = vmatpush1.msra.mxu0 %v2131
    %2752 = vmatprep.subr.mxu0 0.0
    %2753 = vmatpush1.msra.mxu0 %v2134
    %2754 = vmatprep.subr.mxu0 0.0
    %2755 = vmatpush1.msra.mxu0 %v2137
    %2756 = vmatprep.subr.mxu0 0.0
    %2757 = vmatpush1.msra.mxu0 %v2140
    %2758 = vmatprep.subr.mxu0 0.0
    %2759 = vmatpush1.msra.mxu0 %v2143
    %2760 = vmatprep.subr.mxu0 0.0
    %2761 = vmatpush1.msra.mxu0 %v2146
    %2762 = vmatprep.subr.mxu0 0.0
    %2763 = vmatpush1.msra.mxu0 %v2149
    %2764 = vmatprep.subr.mxu0 0.0
    %2765 = vmatpush1.msra.mxu0 %v2152
    %2766 = vmatprep.subr.mxu0 0.0
    %2767 = vmatpush1.msra.mxu0 %v2155
    %2768 = vmatprep.subr.mxu0 0.0
    %2769 = vmatpush1.msra.mxu0 %v2158
    %2770 = vmatprep.subr.mxu0 0.0
    %2771 = vmatpush1.msra.mxu0 0.0
    %2772 = vmatprep.subr.mxu0 0.0
    %2773 = vmatpush1.msra.mxu0 0.0
    %2774 = vmatprep.subr.mxu0 0.0
    %2775 = vmatpush1.msra.mxu0 0.0
    %2776 = vmatprep.subr.mxu0 0.0
    %2777 = vmatpush1.msra.mxu0 0.0
    %2778 = vmatprep.subr.mxu0 0.0
    %2779 = vmatpush1.msra.mxu0 0.0
    %2780 = vmatprep.subr.mxu0 0.0
    %2781 = vmatpush1.msra.mxu0 0.0
    %2782 = vmatprep.subr.mxu0 0.0
    %2783 = vmatpush1.msra.mxu0 0.0
    %2784 = vmatprep.subr.mxu0 0.0
    %2785 = vmatpush1.msra.mxu0 0.0
    %2786 = vmatprep.subr.mxu0 0.0
    %2787 = vmatpush1.msra.mxu0 0.0
    %2788 = vmatprep.subr.mxu0 0.0
    %2789 = vmatpush1.msra.mxu0 0.0
    %2790 = vmatprep.subr.mxu0 0.0
    %2791 = vmatpush1.msra.mxu0 0.0
    %2792 = vmatprep.subr.mxu0 0.0
    %2793 = vmatpush1.msra.mxu0 0.0
    %2794 = vmatprep.subr.mxu0 0.0
    %2795 = vmatpush1.msra.mxu0 0.0
    %2796 = vmatprep.subr.mxu0 0.0
    %2797 = vmatpush1.msra.mxu0 0.0
    %2798 = vmatprep.subr.mxu0 0.0
    %2799 = vmatpush1.msra.mxu0 0.0
    %2800 = vmatprep.subr.mxu0 0.0
    %2801 = vmatpush1.msra.mxu0 0.0
    %2802 = vmatprep.mubr.f32.mxu0 0.0
    %2803 = vmatmul.mubr.f32.gmra.mrb[0].mxu0 %v2663
    %v2804 = vpop.f32.mrb[0].mxu0
    %v2805 = vadd.f32 0.0, %v2804
    %v2806 = vpop.f32.mrb[0].mxu0
    %2807 = vdwg.mxu0
    %v2808 = vadd.f32 %v2664, %v2734
    %v2809 = vxor.u32 %v2808, 2147483648
    %v2810 = vmul.f32 %v2809, 1.442695
    %v2811 = vpow.pop %v2810
    %v2812 = vadd.f32 %v2811, 1.0
    %v2813 = vrcp.pop %v2812
    %v2814 = vmul.f32 1.0, %v2813
    %v2815 = vadd.f32 %v2665, %v2736
    %v2816 = vxor.u32 %v2815, 2147483648
    %v2817 = vmul.f32 %v2816, 1.442695
    %v2818 = vpow.pop %v2817
    %v2819 = vadd.f32 %v2818, 1.0
    %v2820 = vrcp.pop %v2819
    %v2821 = vmul.f32 1.0, %v2820
    %v2822 = vadd.f32 %v2805, %v2164
    %v2823 = vmul.f32 %v2814, %v2822
    %v2824 = vadd.f32 %v2666, %v2823
    %v2825 = vtanh.pop %v2824
    %v2826 = vsub.f32 1.0, %v2821
    %v2827 = vmul.f32 %v2826, %v2825
    %v2828 = vmul.f32 %v2821, %v2663
    %v2829 = vadd.f32 %v2827, %v2828
    %v2830 = vld [vmem:[%s1114] sm:$0xff]
    %v2831 = vld [vmem:[%s1114 + $0x8] sm:$0xff]
    %v2832 = vld [vmem:[%s1114 + $0x10] sm:$0xff]
    %2833 = vmatprep.subr.mxu0 %v2112
    %2834 = vmatpush1.msra.mxu0 %v2111
    %2835 = vmatprep.subr.mxu0 %v2115
    %2836 = vmatpush1.msra.mxu0 %v2114
    %2837 = vmatprep.subr.mxu0 %v2118
    %2838 = vmatpush1.msra.mxu0 %v2117
    %2839 = vmatprep.subr.mxu0 %v2121
    %2840 = vmatpush1.msra.mxu0 %v2120
    %2841 = vmatprep.subr.mxu0 %v2124
    %2842 = vmatpush1.msra.mxu0 %v2123
    %2843 = vmatprep.subr.mxu0 %v2127
    %2844 = vmatpush1.msra.mxu0 %v2126
    %2845 = vmatprep.subr.mxu0 %v2130
    %2846 = vmatpush1.msra.mxu0 %v2129
    %2847 = vmatprep.subr.mxu0 %v2133
    %2848 = vmatpush1.msra.mxu0 %v2132
    %2849 = vmatprep.subr.mxu0 %v2136
    %2850 = vmatpush1.msra.mxu0 %v2135
    %2851 = vmatprep.subr.mxu0 %v2139
    %2852 = vmatpush1.msra.mxu0 %v2138
    %2853 = vmatprep.subr.mxu0 %v2142
    %2854 = vmatpush1.msra.mxu0 %v2141
    %2855 = vmatprep.subr.mxu0 %v2145
    %2856 = vmatpush1.msra.mxu0 %v2144
    %2857 = vmatprep.subr.mxu0 %v2148
    %2858 = vmatpush1.msra.mxu0 %v2147
    %2859 = vmatprep.subr.mxu0 %v2151
    %2860 = vmatpush1.msra.mxu0 %v2150
    %2861 = vmatprep.subr.mxu0 %v2154
    %2862 = vmatpush1.msra.mxu0 %v2153
    %2863 = vmatprep.subr.mxu0 %v2157
    %2864 = vmatpush1.msra.mxu0 %v2156
    %2865 = vmatprep.subr.mxu0 0.0
    %2866 = vmatpush1.msra.mxu0 0.0
    %2867 = vmatprep.subr.mxu0 0.0
    %2868 = vmatpush1.msra.mxu0 0.0
    %2869 = vmatprep.subr.mxu0 0.0
    %2870 = vmatpush1.msra.mxu0 0.0
    %2871 = vmatprep.subr.mxu0 0.0
    %2872 = vmatpush1.msra.mxu0 0.0
    %2873 = vmatprep.subr.mxu0 0.0
    %2874 = vmatpush1.msra.mxu0 0.0
    %2875 = vmatprep.subr.mxu0 0.0
    %2876 = vmatpush1.msra.mxu0 0.0
    %2877 = vmatprep.subr.mxu0 0.0
    %2878 = vmatpush1.msra.mxu0 0.0
    %2879 = vmatprep.subr.mxu0 0.0
    %2880 = vmatpush1.msra.mxu0 0.0
    %2881 = vmatprep.subr.mxu0 0.0
    %2882 = vmatpush1.msra.mxu0 0.0
    %2883 = vmatprep.subr.mxu0 0.0
    %2884 = vmatpush1.msra.mxu0 0.0
    %2885 = vmatprep.subr.mxu0 0.0
    %2886 = vmatpush1.msra.mxu0 0.0
    %2887 = vmatprep.subr.mxu0 0.0
    %2888 = vmatpush1.msra.mxu0 0.0
    %2889 = vmatprep.subr.mxu0 0.0
    %2890 = vmatpush1.msra.mxu0 0.0
    %2891 = vmatprep.subr.mxu0 0.0
    %2892 = vmatpush1.msra.mxu0 0.0
    %2893 = vmatprep.subr.mxu0 0.0
    %2894 = vmatpush1.msra.mxu0 0.0
    %2895 = vmatprep.subr.mxu0 0.0
    %2896 = vmatpush1.msra.mxu0 0.0
    %2897 = vmatprep.mubr.f32.mxu0 0.0
    %2898 = vmatmul.mubr.f32.gmra.mrb[0].mxu0 %v2829
    %v2899 = vpop.f32.mrb[0].mxu0
    %v2900 = vadd.f32 0.0, %v2899
    %v2901 = vpop.f32.mrb[0].mxu0
    %v2902 = vadd.f32 0.0, %v2901
    %2903 = vdwg.mxu0
    %2904 = vmatprep.subr.mxu0 0.0
    %2905 = vmatpush1.msra.mxu0 %v2113
    %2906 = vmatprep.subr.mxu0 0.0
    %2907 = vmatpush1.msra.mxu0 %v2116
    %2908 = vmatprep.subr.mxu0 0.0
    %2909 = vmatpush1.msra.mxu0 %v2119
    %2910 = vmatprep.subr.mxu0 0.0
    %2911 = vmatpush1.msra.mxu0 %v2122
    %2912 = vmatprep.subr.mxu0 0.0
    %2913 = vmatpush1.msra.mxu0 %v2125
    %2914 = vmatprep.subr.mxu0 0.0
    %2915 = vmatpush1.msra.mxu0 %v2128
    %2916 = vmatprep.subr.mxu0 0.0
    %2917 = vmatpush1.msra.mxu0 %v2131
    %2918 = vmatprep.subr.mxu0 0.0
    %2919 = vmatpush1.msra.mxu0 %v2134
    %2920 = vmatprep.subr.mxu0 0.0
    %2921 = vmatpush1.msra.mxu0 %v2137
    %2922 = vmatprep.subr.mxu0 0.0
    %2923 = vmatpush1.msra.mxu0 %v2140
    %2924 = vmatprep.subr.mxu0 0.0
    %2925 = vmatpush1.msra.mxu0 %v2143
    %2926 = vmatprep.subr.mxu0 0.0
    %2927 = vmatpush1.msra.mxu0 %v2146
    %2928 = vmatprep.subr.mxu0 0.0
    %2929 = vmatpush1.msra.mxu0 %v2149
    %2930 = vmatprep.subr.mxu0 0.0
    %2931 = vmatpush1.msra.mxu0 %v2152
    %2932 = vmatprep.subr.mxu0 0.0
    %2933 = vmatpush1.msra.mxu0 %v2155
    %2934 = vmatprep.subr.mxu0 0.0
    %2935 = vmatpush1.msra.mxu0 %v2158
    %2936 = vmatprep.subr.mxu0 0.0
    %2937 = vmatpush1.msra.mxu0 0.0
    %2938 = vmatprep.subr.mxu0 0.0
    %2939 = vmatpush1.msra.mxu0 0.0
    %2940 = vmatprep.subr.mxu0 0.0
    %2941 = vmatpush1.msra.mxu0 0.0
    %2942 = vmatprep.subr.mxu0 0.0
    %2943 = vmatpush1.msra.mxu0 0.0
    %2944 = vmatprep.subr.mxu0 0.0
    %2945 = vmatpush1.msra.mxu0 0.0
    %2946 = vmatprep.subr.mxu0 0.0
    %2947 = vmatpush1.msra.mxu0 0.0
    %2948 = vmatprep.subr.mxu0 0.0
    %2949 = vmatpush1.msra.mxu0 0.0
    %2950 = vmatprep.subr.mxu0 0.0
    %2951 = vmatpush1.msra.mxu0 0.0
    %2952 = vmatprep.subr.mxu0 0.0
    %2953 = vmatpush1.msra.mxu0 0.0
    %2954 = vmatprep.subr.mxu0 0.0
    %2955 = vmatpush1.msra.mxu0 0.0
    %2956 = vmatprep.subr.mxu0 0.0
    %2957 = vmatpush1.msra.mxu0 0.0
    %2958 = vmatprep.subr.mxu0 0.0
    %2959 = vmatpush1.msra.mxu0 0.0
    %2960 = vmatprep.subr.mxu0 0.0
    %2961 = vmatpush1.msra.mxu0 0.0
    %2962 = vmatprep.subr.mxu0 0.0
    %2963 = vmatpush1.msra.mxu0 0.0
    %2964 = vmatprep.subr.mxu0 0.0
    %2965 = vmatpush1.msra.mxu0 0.0
    %2966 = vmatprep.subr.mxu0 0.0
    %2967 = vmatpush1.msra.mxu0 0.0
    %2968 = vmatprep.mubr.f32.mxu0 0.0
    %2969 = vmatmul.mubr.f32.gmra.mrb[0].mxu0 %v2829
    %v2970 = vpop.f32.mrb[0].mxu0
    %v2971 = vadd.f32 0.0, %v2970
    %v2972 = vpop.f32.mrb[0].mxu0
    %2973 = vdwg.mxu0
    %v2974 = vadd.f32 %v2830, %v2900
    %v2975 = vxor.u32 %v2974, 2147483648
    %v2976 = vmul.f32 %v2975, 1.442695
    %v2977 = vpow.pop %v2976
    %v2978 = vadd.f32 %v2977, 1.0
    %v2979 = vrcp.pop %v2978
    %v2980 = vmul.f32 1.0, %v2979
    %v2981 = vadd.f32 %v2831, %v2902
    %v2982 = vxor.u32 %v2981, 2147483648
    %v2983 = vmul.f32 %v2982, 1.442695
    %v2984 = vpow.pop %v2983
    %v2985 = vadd.f32 %v2984, 1.0
    %v2986 = vrcp.pop %v2985
    %v2987 = vmul.f32 1.0, %v2986
    %v2988 = vadd.f32 %v2971, %v2164
    %v2989 = vmul.f32 %v2980, %v2988
    %v2990 = vadd.f32 %v2832, %v2989
    %v2991 = vtanh.pop %v2990
    %v2992 = vsub.f32 1.0, %v2987
    %v2993 = vmul.f32 %v2992, %v2991
    %v2994 = vmul.f32 %v2987, %v2829
    %v2995 = vadd.f32 %v2993, %v2994
    %v2996 = vld [vmem:[%s1285] sm:$0xff]
    %v2997 = vld [vmem:[%s1285 + $0x8] sm:$0xff]
    %v2998 = vld [vmem:[%s1285 + $0x10] sm:$0xff]
    %2999 = vmatprep.subr.mxu0 %v2112
    %3000 = vmatpush1.msra.mxu0 %v2111
    %3001 = vmatprep.subr.mxu0 %v2115
    %3002 = vmatpush1.msra.mxu0 %v2114
    %3003 = vmatprep.subr.mxu0 %v2118
    %3004 = vmatpush1.msra.mxu0 %v2117
    %3005 = vmatprep.subr.mxu0 %v2121
    %3006 = vmatpush1.msra.mxu0 %v2120
    %3007 = vmatprep.subr.mxu0 %v2124
    %3008 = vmatpush1.msra.mxu0 %v2123
    %3009 = vmatprep.subr.mxu0 %v2127
    %3010 = vmatpush1.msra.mxu0 %v2126
    %3011 = vmatprep.subr.mxu0 %v2130
    %3012 = vmatpush1.msra.mxu0 %v2129
    %3013 = vmatprep.subr.mxu0 %v2133
    %3014 = vmatpush1.msra.mxu0 %v2132
    %3015 = vmatprep.subr.mxu0 %v2136
    %3016 = vmatpush1.msra.mxu0 %v2135
    %3017 = vmatprep.subr.mxu0 %v2139
    %3018 = vmatpush1.msra.mxu0 %v2138
    %3019 = vmatprep.subr.mxu0 %v2142
    %3020 = vmatpush1.msra.mxu0 %v2141
    %3021 = vmatprep.subr.mxu0 %v2145
    %3022 = vmatpush1.msra.mxu0 %v2144
    %3023 = vmatprep.subr.mxu0 %v2148
    %3024 = vmatpush1.msra.mxu0 %v2147
    %3025 = vmatprep.subr.mxu0 %v2151
    %3026 = vmatpush1.msra.mxu0 %v2150
    %3027 = vmatprep.subr.mxu0 %v2154
    %3028 = vmatpush1.msra.mxu0 %v2153
    %3029 = vmatprep.subr.mxu0 %v2157
    %3030 = vmatpush1.msra.mxu0 %v2156
    %3031 = vmatprep.subr.mxu0 0.0
    %3032 = vmatpush1.msra.mxu0 0.0
    %3033 = vmatprep.subr.mxu0 0.0
    %3034 = vmatpush1.msra.mxu0 0.0
    %3035 = vmatprep.subr.mxu0 0.0
    %3036 = vmatpush1.msra.mxu0 0.0
    %3037 = vmatprep.subr.mxu0 0.0
    %3038 = vmatpush1.msra.mxu0 0.0
    %3039 = vmatprep.subr.mxu0 0.0
    %3040 = vmatpush1.msra.mxu0 0.0
    %3041 = vmatprep.subr.mxu0 0.0
    %3042 = vmatpush1.msra.mxu0 0.0
    %3043 = vmatprep.subr.mxu0 0.0
    %3044 = vmatpush1.msra.mxu0 0.0
    %3045 = vmatprep.subr.mxu0 0.0
    %3046 = vmatpush1.msra.mxu0 0.0
    %3047 = vmatprep.subr.mxu0 0.0
    %3048 = vmatpush1.msra.mxu0 0.0
    %3049 = vmatprep.subr.mxu0 0.0
    %3050 = vmatpush1.msra.mxu0 0.0
    %3051 = vmatprep.subr.mxu0 0.0
    %3052 = vmatpush1.msra.mxu0 0.0
    %3053 = vmatprep.subr.mxu0 0.0
    %3054 = vmatpush1.msra.mxu0 0.0
    %3055 = vmatprep.subr.mxu0 0.0
    %3056 = vmatpush1.msra.mxu0 0.0
    %3057 = vmatprep.subr.mxu0 0.0
    %3058 = vmatpush1.msra.mxu0 0.0
    %3059 = vmatprep.subr.mxu0 0.0
    %3060 = vmatpush1.msra.mxu0 0.0
    %3061 = vmatprep.subr.mxu0 0.0
    %3062 = vmatpush1.msra.mxu0 0.0
    %3063 = vmatprep.mubr.f32.mxu0 0.0
    %3064 = vmatmul.mubr.f32.gmra.mrb[0].mxu0 %v2995
    %v3065 = vpop.f32.mrb[0].mxu0
    %v3066 = vadd.f32 0.0, %v3065
    %v3067 = vpop.f32.mrb[0].mxu0
    %v3068 = vadd.f32 0.0, %v3067
    %3069 = vdwg.mxu0
    %3070 = vmatprep.subr.mxu0 0.0
    %3071 = vmatpush1.msra.mxu0 %v2113
    %3072 = vmatprep.subr.mxu0 0.0
    %3073 = vmatpush1.msra.mxu0 %v2116
    %3074 = vmatprep.subr.mxu0 0.0
    %3075 = vmatpush1.msra.mxu0 %v2119
    %3076 = vmatprep.subr.mxu0 0.0
    %3077 = vmatpush1.msra.mxu0 %v2122
    %3078 = vmatprep.subr.mxu0 0.0
    %3079 = vmatpush1.msra.mxu0 %v2125
    %3080 = vmatprep.subr.mxu0 0.0
    %3081 = vmatpush1.msra.mxu0 %v2128
    %3082 = vmatprep.subr.mxu0 0.0
    %3083 = vmatpush1.msra.mxu0 %v2131
    %3084 = vmatprep.subr.mxu0 0.0
    %3085 = vmatpush1.msra.mxu0 %v2134
    %3086 = vmatprep.subr.mxu0 0.0
    %3087 = vmatpush1.msra.mxu0 %v2137
    %3088 = vmatprep.subr.mxu0 0.0
    %3089 = vmatpush1.msra.mxu0 %v2140
    %3090 = vmatprep.subr.mxu0 0.0
    %3091 = vmatpush1.msra.mxu0 %v2143
    %3092 = vmatprep.subr.mxu0 0.0
    %3093 = vmatpush1.msra.mxu0 %v2146
    %3094 = vmatprep.subr.mxu0 0.0
    %3095 = vmatpush1.msra.mxu0 %v2149
    %3096 = vmatprep.subr.mxu0 0.0
    %3097 = vmatpush1.msra.mxu0 %v2152
    %3098 = vmatprep.subr.mxu0 0.0
    %3099 = vmatpush1.msra.mxu0 %v2155
    %3100 = vmatprep.subr.mxu0 0.0
    %3101 = vmatpush1.msra.mxu0 %v2158
    %3102 = vmatprep.subr.mxu0 0.0
    %3103 = vmatpush1.msra.mxu0 0.0
    %3104 = vmatprep.subr.mxu0 0.0
    %3105 = vmatpush1.msra.mxu0 0.0
    %3106 = vmatprep.subr.mxu0 0.0
    %3107 = vmatpush1.msra.mxu0 0.0
    %3108 = vmatprep.subr.mxu0 0.0
    %3109 = vmatpush1.msra.mxu0 0.0
    %3110 = vmatprep.subr.mxu0 0.0
    %3111 = vmatpush1.msra.mxu0 0.0
    %3112 = vmatprep.subr.mxu0 0.0
    %3113 = vmatpush1.msra.mxu0 0.0
    %3114 = vmatprep.subr.mxu0 0.0
    %3115 = vmatpush1.msra.mxu0 0.0
    %3116 = vmatprep.subr.mxu0 0.0
    %3117 = vmatpush1.msra.mxu0 0.0
    %3118 = vmatprep.subr.mxu0 0.0
    %3119 = vmatpush1.msra.mxu0 0.0
    %3120 = vmatprep.subr.mxu0 0.0
    %3121 = vmatpush1.msra.mxu0 0.0
    %3122 = vmatprep.subr.mxu0 0.0
    %3123 = vmatpush1.msra.mxu0 0.0
    %3124 = vmatprep.subr.mxu0 0.0
    %3125 = vmatpush1.msra.mxu0 0.0
    %3126 = vmatprep.subr.mxu0 0.0
    %3127 = vmatpush1.msra.mxu0 0.0
    %3128 = vmatprep.subr.mxu0 0.0
    %3129 = vmatpush1.msra.mxu0 0.0
    %3130 = vmatprep.subr.mxu0 0.0
    %3131 = vmatpush1.msra.mxu0 0.0
    %3132 = vmatprep.subr.mxu0 0.0
    %3133 = vmatpush1.msra.mxu0 0.0
    %3134 = vmatprep.mubr.f32.mxu0 0.0
    %3135 = vmatmul.mubr.f32.gmra.mrb[0].mxu0 %v2995
    %v3136 = vpop.f32.mrb[0].mxu0
    %v3137 = vadd.f32 0.0, %v3136
    %v3138 = vpop.f32.mrb[0].mxu0
    %3139 = vdwg.mxu0
    %v3140 = vadd.f32 %v2996, %v3066
    %v3141 = vxor.u32 %v3140, 2147483648
    %v3142 = vmul.f32 %v3141, 1.442695
    %v3143 = vpow.pop %v3142
    %v3144 = vadd.f32 %v3143, 1.0
    %v3145 = vrcp.pop %v3144
    %v3146 = vmul.f32 1.0, %v3145
    %v3147 = vadd.f32 %v2997, %v3068
    %v3148 = vxor.u32 %v3147, 2147483648
    %v3149 = vmul.f32 %v3148, 1.442695
    %v3150 = vpow.pop %v3149
    %v3151 = vadd.f32 %v3150, 1.0
    %v3152 = vrcp.pop %v3151
    %v3153 = vmul.f32 1.0, %v3152
    %v3154 = vadd.f32 %v3137, %v2164
    %v3155 = vmul.f32 %v3146, %v3154
    %v3156 = vadd.f32 %v2998, %v3155
    %v3157 = vtanh.pop %v3156
    %v3158 = vsub.f32 1.0, %v3153
    %v3159 = vmul.f32 %v3158, %v3157
    %v3160 = vmul.f32 %v3153, %v2995
    %v3161 = vadd.f32 %v3159, %v3160
    %v3162 = vld [vmem:[%s1456] sm:$0xff]
    %v3163 = vld [vmem:[%s1456 + $0x8] sm:$0xff]
    %v3164 = vld [vmem:[%s1456 + $0x10] sm:$0xff]
    %3165 = vmatprep.subr.mxu0 %v2112
    %3166 = vmatpush1.msra.mxu0 %v2111
    %3167 = vmatprep.subr.mxu0 %v2115
    %3168 = vmatpush1.msra.mxu0 %v2114
    %3169 = vmatprep.subr.mxu0 %v2118
    %3170 = vmatpush1.msra.mxu0 %v2117
    %3171 = vmatprep.subr.mxu0 %v2121
    %3172 = vmatpush1.msra.mxu0 %v2120
    %3173 = vmatprep.subr.mxu0 %v2124
    %3174 = vmatpush1.msra.mxu0 %v2123
    %3175 = vmatprep.subr.mxu0 %v2127
    %3176 = vmatpush1.msra.mxu0 %v2126
    %3177 = vmatprep.subr.mxu0 %v2130
    %3178 = vmatpush1.msra.mxu0 %v2129
    %3179 = vmatprep.subr.mxu0 %v2133
    %3180 = vmatpush1.msra.mxu0 %v2132
    %3181 = vmatprep.subr.mxu0 %v2136
    %3182 = vmatpush1.msra.mxu0 %v2135
    %3183 = vmatprep.subr.mxu0 %v2139
    %3184 = vmatpush1.msra.mxu0 %v2138
    %3185 = vmatprep.subr.mxu0 %v2142
    %3186 = vmatpush1.msra.mxu0 %v2141
    %3187 = vmatprep.subr.mxu0 %v2145
    %3188 = vmatpush1.msra.mxu0 %v2144
    %3189 = vmatprep.subr.mxu0 %v2148
    %3190 = vmatpush1.msra.mxu0 %v2147
    %3191 = vmatprep.subr.mxu0 %v2151
    %3192 = vmatpush1.msra.mxu0 %v2150
    %3193 = vmatprep.subr.mxu0 %v2154
    %3194 = vmatpush1.msra.mxu0 %v2153
    %3195 = vmatprep.subr.mxu0 %v2157
    %3196 = vmatpush1.msra.mxu0 %v2156
    %3197 = vmatprep.subr.mxu0 0.0
    %3198 = vmatpush1.msra.mxu0 0.0
    %3199 = vmatprep.subr.mxu0 0.0
    %3200 = vmatpush1.msra.mxu0 0.0
    %3201 = vmatprep.subr.mxu0 0.0
    %3202 = vmatpush1.msra.mxu0 0.0
    %3203 = vmatprep.subr.mxu0 0.0
    %3204 = vmatpush1.msra.mxu0 0.0
    %3205 = vmatprep.subr.mxu0 0.0
    %3206 = vmatpush1.msra.mxu0 0.0
    %3207 = vmatprep.subr.mxu0 0.0
    %3208 = vmatpush1.msra.mxu0 0.0
    %3209 = vmatprep.subr.mxu0 0.0
    %3210 = vmatpush1.msra.mxu0 0.0
    %3211 = vmatprep.subr.mxu0 0.0
    %3212 = vmatpush1.msra.mxu0 0.0
    %3213 = vmatprep.subr.mxu0 0.0
    %3214 = vmatpush1.msra.mxu0 0.0
    %3215 = vmatprep.subr.mxu0 0.0
    %3216 = vmatpush1.msra.mxu0 0.0
    %3217 = vmatprep.subr.mxu0 0.0
    %3218 = vmatpush1.msra.mxu0 0.0
    %3219 = vmatprep.subr.mxu0 0.0
    %3220 = vmatpush1.msra.mxu0 0.0
    %3221 = vmatprep.subr.mxu0 0.0
    %3222 = vmatpush1.msra.mxu0 0.0
    %3223 = vmatprep.subr.mxu0 0.0
    %3224 = vmatpush1.msra.mxu0 0.0
    %3225 = vmatprep.subr.mxu0 0.0
    %3226 = vmatpush1.msra.mxu0 0.0
    %3227 = vmatprep.subr.mxu0 0.0
    %3228 = vmatpush1.msra.mxu0 0.0
    %3229 = vmatprep.mubr.f32.mxu0 0.0
    %3230 = vmatmul.mubr.f32.gmra.mrb[0].mxu0 %v3161
    %v3231 = vpop.f32.mrb[0].mxu0
    %v3232 = vadd.f32 0.0, %v3231
    %v3233 = vpop.f32.mrb[0].mxu0
    %v3234 = vadd.f32 0.0, %v3233
    %3235 = vdwg.mxu0
    %3236 = vmatprep.subr.mxu0 0.0
    %3237 = vmatpush1.msra.mxu0 %v2113
    %3238 = vmatprep.subr.mxu0 0.0
    %3239 = vmatpush1.msra.mxu0 %v2116
    %3240 = vmatprep.subr.mxu0 0.0
    %3241 = vmatpush1.msra.mxu0 %v2119
    %3242 = vmatprep.subr.mxu0 0.0
    %3243 = vmatpush1.msra.mxu0 %v2122
    %3244 = vmatprep.subr.mxu0 0.0
    %3245 = vmatpush1.msra.mxu0 %v2125
    %3246 = vmatprep.subr.mxu0 0.0
    %3247 = vmatpush1.msra.mxu0 %v2128
    %3248 = vmatprep.subr.mxu0 0.0
    %3249 = vmatpush1.msra.mxu0 %v2131
    %3250 = vmatprep.subr.mxu0 0.0
    %3251 = vmatpush1.msra.mxu0 %v2134
    %3252 = vmatprep.subr.mxu0 0.0
    %3253 = vmatpush1.msra.mxu0 %v2137
    %3254 = vmatprep.subr.mxu0 0.0
    %3255 = vmatpush1.msra.mxu0 %v2140
    %3256 = vmatprep.subr.mxu0 0.0
    %3257 = vmatpush1.msra.mxu0 %v2143
    %3258 = vmatprep.subr.mxu0 0.0
    %3259 = vmatpush1.msra.mxu0 %v2146
    %3260 = vmatprep.subr.mxu0 0.0
    %3261 = vmatpush1.msra.mxu0 %v2149
    %3262 = vmatprep.subr.mxu0 0.0
    %3263 = vmatpush1.msra.mxu0 %v2152
    %3264 = vmatprep.subr.mxu0 0.0
    %3265 = vmatpush1.msra.mxu0 %v2155
    %3266 = vmatprep.subr.mxu0 0.0
    %3267 = vmatpush1.msra.mxu0 %v2158
    %3268 = vmatprep.subr.mxu0 0.0
    %3269 = vmatpush1.msra.mxu0 0.0
    %3270 = vmatprep.subr.mxu0 0.0
    %3271 = vmatpush1.msra.mxu0 0.0
    %3272 = vmatprep.subr.mxu0 0.0
    %3273 = vmatpush1.msra.mxu0 0.0
    %3274 = vmatprep.subr.mxu0 0.0
    %3275 = vmatpush1.msra.mxu0 0.0
    %3276 = vmatprep.subr.mxu0 0.0
    %3277 = vmatpush1.msra.mxu0 0.0
    %3278 = vmatprep.subr.mxu0 0.0
    %3279 = vmatpush1.msra.mxu0 0.0
    %3280 = vmatprep.subr.mxu0 0.0
    %3281 = vmatpush1.msra.mxu0 0.0
    %3282 = vmatprep.subr.mxu0 0.0
    %3283 = vmatpush1.msra.mxu0 0.0
    %3284 = vmatprep.subr.mxu0 0.0
    %3285 = vmatpush1.msra.mxu0 0.0
    %3286 = vmatprep.subr.mxu0 0.0
    %3287 = vmatpush1.msra.mxu0 0.0
    %3288 = vmatprep.subr.mxu0 0.0
    %3289 = vmatpush1.msra.mxu0 0.0
    %3290 = vmatprep.subr.mxu0 0.0
    %3291 = vmatpush1.msra.mxu0 0.0
    %3292 = vmatprep.subr.mxu0 0.0
    %3293 = vmatpush1.msra.mxu0 0.0
    %3294 = vmatprep.subr.mxu0 0.0
    %3295 = vmatpush1.msra.mxu0 0.0
    %3296 = vmatprep.subr.mxu0 0.0
    %3297 = vmatpush1.msra.mxu0 0.0
    %3298 = vmatprep.subr.mxu0 0.0
    %3299 = vmatpush1.msra.mxu0 0.0
    %3300 = vmatprep.mubr.f32.mxu0 0.0
    %3301 = vmatmul.mubr.f32.gmra.mrb[0].mxu0 %v3161
    %v3302 = vpop.f32.mrb[0].mxu0
    %v3303 = vadd.f32 0.0, %v3302
    %v3304 = vpop.f32.mrb[0].mxu0
    %3305 = vdwg.mxu0
    %v3306 = vadd.f32 %v3162, %v3232
    %v3307 = vxor.u32 %v3306, 2147483648
    %v3308 = vmul.f32 %v3307, 1.442695
    %v3309 = vpow.pop %v3308
    %v3310 = vadd.f32 %v3309, 1.0
    %v3311 = vrcp.pop %v3310
    %v3312 = vmul.f32 1.0, %v3311
    %v3313 = vadd.f32 %v3163, %v3234
    %v3314 = vxor.u32 %v3313, 2147483648
    %v3315 = vmul.f32 %v3314, 1.442695
    %v3316 = vpow.pop %v3315
    %v3317 = vadd.f32 %v3316, 1.0
    %v3318 = vrcp.pop %v3317
    %v3319 = vmul.f32 1.0, %v3318
    %v3320 = vadd.f32 %v3303, %v2164
    %v3321 = vmul.f32 %v3312, %v3320
    %v3322 = vadd.f32 %v3164, %v3321
    %v3323 = vtanh.pop %v3322
    %v3324 = vsub.f32 1.0, %v3319
    %v3325 = vmul.f32 %v3324, %v3323
    %v3326 = vmul.f32 %v3319, %v3161
    %v3327 = vadd.f32 %v3325, %v3326
    %v3328 = vld [vmem:[%s1627] sm:$0xff]
    %v3329 = vld [vmem:[%s1627 + $0x8] sm:$0xff]
    %v3330 = vld [vmem:[%s1627 + $0x10] sm:$0xff]
    %3331 = vmatprep.subr.mxu0 %v2112
    %3332 = vmatpush1.msra.mxu0 %v2111
    %3333 = vmatprep.subr.mxu0 %v2115
    %3334 = vmatpush1.msra.mxu0 %v2114
    %3335 = vmatprep.subr.mxu0 %v2118
    %3336 = vmatpush1.msra.mxu0 %v2117
    %3337 = vmatprep.subr.mxu0 %v2121
    %3338 = vmatpush1.msra.mxu0 %v2120
    %3339 = vmatprep.subr.mxu0 %v2124
    %3340 = vmatpush1.msra.mxu0 %v2123
    %3341 = vmatprep.subr.mxu0 %v2127
    %3342 = vmatpush1.msra.mxu0 %v2126
    %3343 = vmatprep.subr.mxu0 %v2130
    %3344 = vmatpush1.msra.mxu0 %v2129
    %3345 = vmatprep.subr.mxu0 %v2133
    %3346 = vmatpush1.msra.mxu0 %v2132
    %3347 = vmatprep.subr.mxu0 %v2136
    %3348 = vmatpush1.msra.mxu0 %v2135
    %3349 = vmatprep.subr.mxu0 %v2139
    %3350 = vmatpush1.msra.mxu0 %v2138
    %3351 = vmatprep.subr.mxu0 %v2142
    %3352 = vmatpush1.msra.mxu0 %v2141
    %3353 = vmatprep.subr.mxu0 %v2145
    %3354 = vmatpush1.msra.mxu0 %v2144
    %3355 = vmatprep.subr.mxu0 %v2148
    %3356 = vmatpush1.msra.mxu0 %v2147
    %3357 = vmatprep.subr.mxu0 %v2151
    %3358 = vmatpush1.msra.mxu0 %v2150
    %3359 = vmatprep.subr.mxu0 %v2154
    %3360 = vmatpush1.msra.mxu0 %v2153
    %3361 = vmatprep.subr.mxu0 %v2157
    %3362 = vmatpush1.msra.mxu0 %v2156
    %3363 = vmatprep.subr.mxu0 0.0
    %3364 = vmatpush1.msra.mxu0 0.0
    %3365 = vmatprep.subr.mxu0 0.0
    %3366 = vmatpush1.msra.mxu0 0.0
    %3367 = vmatprep.subr.mxu0 0.0
    %3368 = vmatpush1.msra.mxu0 0.0
    %3369 = vmatprep.subr.mxu0 0.0
    %3370 = vmatpush1.msra.mxu0 0.0
    %3371 = vmatprep.subr.mxu0 0.0
    %3372 = vmatpush1.msra.mxu0 0.0
    %3373 = vmatprep.subr.mxu0 0.0
    %3374 = vmatpush1.msra.mxu0 0.0
    %3375 = vmatprep.subr.mxu0 0.0
    %3376 = vmatpush1.msra.mxu0 0.0
    %3377 = vmatprep.subr.mxu0 0.0
    %3378 = vmatpush1.msra.mxu0 0.0
    %3379 = vmatprep.subr.mxu0 0.0
    %3380 = vmatpush1.msra.mxu0 0.0
    %3381 = vmatprep.subr.mxu0 0.0
    %3382 = vmatpush1.msra.mxu0 0.0
    %3383 = vmatprep.subr.mxu0 0.0
    %3384 = vmatpush1.msra.mxu0 0.0
    %3385 = vmatprep.subr.mxu0 0.0
    %3386 = vmatpush1.msra.mxu0 0.0
    %3387 = vmatprep.subr.mxu0 0.0
    %3388 = vmatpush1.msra.mxu0 0.0
    %3389 = vmatprep.subr.mxu0 0.0
    %3390 = vmatpush1.msra.mxu0 0.0
    %3391 = vmatprep.subr.mxu0 0.0
    %3392 = vmatpush1.msra.mxu0 0.0
    %3393 = vmatprep.subr.mxu0 0.0
    %3394 = vmatpush1.msra.mxu0 0.0
    %3395 = vmatprep.mubr.f32.mxu0 0.0
    %3396 = vmatmul.mubr.f32.gmra.mrb[0].mxu0 %v3327
    %v3397 = vpop.f32.mrb[0].mxu0
    %v3398 = vadd.f32 0.0, %v3397
    %v3399 = vpop.f32.mrb[0].mxu0
    %v3400 = vadd.f32 0.0, %v3399
    %3401 = vdwg.mxu0
    %3402 = vmatprep.subr.mxu0 0.0
    %3403 = vmatpush1.msra.mxu0 %v2113
    %3404 = vmatprep.subr.mxu0 0.0
    %3405 = vmatpush1.msra.mxu0 %v2116
    %3406 = vmatprep.subr.mxu0 0.0
    %3407 = vmatpush1.msra.mxu0 %v2119
    %3408 = vmatprep.subr.mxu0 0.0
    %3409 = vmatpush1.msra.mxu0 %v2122
    %3410 = vmatprep.subr.mxu0 0.0
    %3411 = vmatpush1.msra.mxu0 %v2125
    %3412 = vmatprep.subr.mxu0 0.0
    %3413 = vmatpush1.msra.mxu0 %v2128
    %3414 = vmatprep.subr.mxu0 0.0
    %3415 = vmatpush1.msra.mxu0 %v2131
    %3416 = vmatprep.subr.mxu0 0.0
    %3417 = vmatpush1.msra.mxu0 %v2134
    %3418 = vmatprep.subr.mxu0 0.0
    %3419 = vmatpush1.msra.mxu0 %v2137
    %3420 = vmatprep.subr.mxu0 0.0
    %3421 = vmatpush1.msra.mxu0 %v2140
    %3422 = vmatprep.subr.mxu0 0.0
    %3423 = vmatpush1.msra.mxu0 %v2143
    %3424 = vmatprep.subr.mxu0 0.0
    %3425 = vmatpush1.msra.mxu0 %v2146
    %3426 = vmatprep.subr.mxu0 0.0
    %3427 = vmatpush1.msra.mxu0 %v2149
    %3428 = vmatprep.subr.mxu0 0.0
    %3429 = vmatpush1.msra.mxu0 %v2152
    %3430 = vmatprep.subr.mxu0 0.0
    %3431 = vmatpush1.msra.mxu0 %v2155
    %3432 = vmatprep.subr.mxu0 0.0
    %3433 = vmatpush1.msra.mxu0 %v2158
    %3434 = vmatprep.subr.mxu0 0.0
    %3435 = vmatpush1.msra.mxu0 0.0
    %3436 = vmatprep.subr.mxu0 0.0
    %3437 = vmatpush1.msra.mxu0 0.0
    %3438 = vmatprep.subr.mxu0 0.0
    %3439 = vmatpush1.msra.mxu0 0.0
    %3440 = vmatprep.subr.mxu0 0.0
    %3441 = vmatpush1.msra.mxu0 0.0
    %3442 = vmatprep.subr.mxu0 0.0
    %3443 = vmatpush1.msra.mxu0 0.0
    %3444 = vmatprep.subr.mxu0 0.0
    %3445 = vmatpush1.msra.mxu0 0.0
    %3446 = vmatprep.subr.mxu0 0.0
    %3447 = vmatpush1.msra.mxu0 0.0
    %3448 = vmatprep.subr.mxu0 0.0
    %3449 = vmatpush1.msra.mxu0 0.0
    %3450 = vmatprep.subr.mxu0 0.0
    %3451 = vmatpush1.msra.mxu0 0.0
    %3452 = vmatprep.subr.mxu0 0.0
    %3453 = vmatpush1.msra.mxu0 0.0
    %3454 = vmatprep.subr.mxu0 0.0
    %3455 = vmatpush1.msra.mxu0 0.0
    %3456 = vmatprep.subr.mxu0 0.0
    %3457 = vmatpush1.msra.mxu0 0.0
    %3458 = vmatprep.subr.mxu0 0.0
    %3459 = vmatpush1.msra.mxu0 0.0
    %3460 = vmatprep.subr.mxu0 0.0
    %3461 = vmatpush1.msra.mxu0 0.0
    %3462 = vmatprep.subr.mxu0 0.0
    %3463 = vmatpush1.msra.mxu0 0.0
    %3464 = vmatprep.subr.mxu0 0.0
    %3465 = vmatpush1.msra.mxu0 0.0
    %3466 = vmatprep.mubr.f32.mxu0 0.0
    %3467 = vmatmul.mubr.f32.gmra.mrb[0].mxu0 %v3327
    %v3468 = vpop.f32.mrb[0].mxu0
    %v3469 = vadd.f32 0.0, %v3468
    %v3470 = vpop.f32.mrb[0].mxu0
    %3471 = vdwg.mxu0
    %v3472 = vadd.f32 %v3328, %v3398
    %v3473 = vxor.u32 %v3472, 2147483648
    %v3474 = vmul.f32 %v3473, 1.442695
    %v3475 = vpow.pop %v3474
    %v3476 = vadd.f32 %v3475, 1.0
    %v3477 = vrcp.pop %v3476
    %v3478 = vmul.f32 1.0, %v3477
    %v3479 = vadd.f32 %v3329, %v3400
    %v3480 = vxor.u32 %v3479, 2147483648
    %v3481 = vmul.f32 %v3480, 1.442695
    %v3482 = vpow.pop %v3481
    %v3483 = vadd.f32 %v3482, 1.0
    %v3484 = vrcp.pop %v3483
    %v3485 = vmul.f32 1.0, %v3484
    %v3486 = vadd.f32 %v3469, %v2164
    %v3487 = vmul.f32 %v3478, %v3486
    %v3488 = vadd.f32 %v3330, %v3487
    %v3489 = vtanh.pop %v3488
    %v3490 = vsub.f32 1.0, %v3485
    %v3491 = vmul.f32 %v3490, %v3489
    %v3492 = vmul.f32 %v3485, %v3327
    %v3493 = vadd.f32 %v3491, %v3492
    %v3494 = vld [vmem:[%s9] sm:$0xff]
    %v3495 = vld [vmem:[%s9 + $0x8] sm:$0xff]
    %v3496 = vld [vmem:[%s9 + $0x10] sm:$0xff]
    %v3497 = vld [vmem:[%s9 + $0x18] sm:$0xff]
    %v3498 = vld [vmem:[%s9 + $0x20] sm:$0xff]
    %v3499 = vld [vmem:[%s9 + $0x28] sm:$0xff]
    %v3500 = vld [vmem:[%s9 + $0x30] sm:$0xff]
    %v3501 = vld [vmem:[%s9 + $0x38] sm:$0xff]
    %v3502 = vld [vmem:[%s9 + $0x40] sm:$0xff]
    %v3503 = vld [vmem:[%s9 + $0x48] sm:$0xff]
    %v3504 = vld [vmem:[%s9 + $0x50] sm:$0xff]
    %v3505 = vld [vmem:[%s9 + $0x58] sm:$0xff]
    %v3506 = vld [vmem:[%s9 + $0x60] sm:$0xff]
    %v3507 = vld [vmem:[%s9 + $0x68] sm:$0xff]
    %v3508 = vld [vmem:[%s9 + $0x70] sm:$0xff]
    %v3509 = vld [vmem:[%s9 + $0x78] sm:$0xff]
    %v3510 = vld [vmem:[%s10] sm:$0x1]
    %v3512 = vlaneseq
    %v3513 = vshrl.u32 %v3512, 7
    %v3514 = vsub.s32 0, %v3513
    %v3515 = vrot.slane %v3510, %v3514
    %3517 = vmatprep.subr.mxu0 0.0
    %3518 = vmatpush1.msra.mxu0 %v3494
    %3519 = vmatprep.subr.mxu0 0.0
    %3520 = vmatpush1.msra.mxu0 %v3495
    %3521 = vmatprep.subr.mxu0 0.0
    %3522 = vmatpush1.msra.mxu0 %v3496
    %3523 = vmatprep.subr.mxu0 0.0
    %3524 = vmatpush1.msra.mxu0 %v3497
    %3525 = vmatprep.subr.mxu0 0.0
    %3526 = vmatpush1.msra.mxu0 %v3498
    %3527 = vmatprep.subr.mxu0 0.0
    %3528 = vmatpush1.msra.mxu0 %v3499
    %3529 = vmatprep.subr.mxu0 0.0
    %3530 = vmatpush1.msra.mxu0 %v3500
    %3531 = vmatprep.subr.mxu0 0.0
    %3532 = vmatpush1.msra.mxu0 %v3501
    %3533 = vmatprep.subr.mxu0 0.0
    %3534 = vmatpush1.msra.mxu0 %v3502
    %3535 = vmatprep.subr.mxu0 0.0
    %3536 = vmatpush1.msra.mxu0 %v3503
    %3537 = vmatprep.subr.mxu0 0.0
    %3538 = vmatpush1.msra.mxu0 %v3504
    %3539 = vmatprep.subr.mxu0 0.0
    %3540 = vmatpush1.msra.mxu0 %v3505
    %3541 = vmatprep.subr.mxu0 0.0
    %3542 = vmatpush1.msra.mxu0 %v3506
    %3543 = vmatprep.subr.mxu0 0.0
    %3544 = vmatpush1.msra.mxu0 %v3507
    %3545 = vmatprep.subr.mxu0 0.0
    %3546 = vmatpush1.msra.mxu0 %v3508
    %3547 = vmatprep.subr.mxu0 0.0
    %3548 = vmatpush1.msra.mxu0 %v3509
    %3549 = vmatprep.subr.mxu0 0.0
    %3550 = vmatpush1.msra.mxu0 0.0
    %3551 = vmatprep.subr.mxu0 0.0
    %3552 = vmatpush1.msra.mxu0 0.0
    %3553 = vmatprep.subr.mxu0 0.0
    %3554 = vmatpush1.msra.mxu0 0.0
    %3555 = vmatprep.subr.mxu0 0.0
    %3556 = vmatpush1.msra.mxu0 0.0
    %3557 = vmatprep.subr.mxu0 0.0
    %3558 = vmatpush1.msra.mxu0 0.0
    %3559 = vmatprep.subr.mxu0 0.0
    %3560 = vmatpush1.msra.mxu0 0.0
    %3561 = vmatprep.subr.mxu0 0.0
    %3562 = vmatpush1.msra.mxu0 0.0
    %3563 = vmatprep.subr.mxu0 0.0
    %3564 = vmatpush1.msra.mxu0 0.0
    %3565 = vmatprep.subr.mxu0 0.0
    %3566 = vmatpush1.msra.mxu0 0.0
    %3567 = vmatprep.subr.mxu0 0.0
    %3568 = vmatpush1.msra.mxu0 0.0
    %3569 = vmatprep.subr.mxu0 0.0
    %3570 = vmatpush1.msra.mxu0 0.0
    %3571 = vmatprep.subr.mxu0 0.0
    %3572 = vmatpush1.msra.mxu0 0.0
    %3573 = vmatprep.subr.mxu0 0.0
    %3574 = vmatpush1.msra.mxu0 0.0
    %3575 = vmatprep.subr.mxu0 0.0
    %3576 = vmatpush1.msra.mxu0 0.0
    %3577 = vmatprep.subr.mxu0 0.0
    %3578 = vmatpush1.msra.mxu0 0.0
    %3579 = vmatprep.subr.mxu0 0.0
    %3580 = vmatpush1.msra.mxu0 0.0
    %3581 = vmatprep.mubr.f32.mxu0 0.0
    %3582 = vmatmul.mubr.f32.gmra.mrb[0].mxu0 %v3493
    %v3583 = vpop.f32.mrb[0].mxu0
    %v3584 = vadd.f32 %v3515, %v3583
    %v3585 = vpop.f32.mrb[0].mxu0
    %3586 = vdwg.mxu0
    %vm3587 = vcmask 39936
    %v3588 = vsel %vm3587, %v3584, -inf
    %3589 = vmax.xlane.f32.xlu0 %v3588
    %v3590 = vpop.xlane.xlu0 %3589
    %v3591 = vsub.f32 %v3584, %v3590
    %v3592 = vmul.f32 %v3591, 1.442695
    %v3593 = vpow.pop %v3592
    %v3594 = vsel %vm3587, %v3593, 0.0
    %3595 = vadd.xlane.f32.xlu0 %v3594
    %v3596 = vpop.xlane.xlu0 %3595
    %v3597 = vrcp.pop %v3596
    %v3598 = vmul.f32 %v3593, %v3597
    %3599 = vst.msk [vmem:[%s11] sm:$0xff] %vm3587, %v3598
    // Predicated region
    $region58: #{baseline_gru_forward.1} parent=1 // pred_check
      _
    $region59: #{baseline_gru_forward.1} parent=1 // pred_check_branch
      %3601 = sbr.rel (0) target = $region61
    $region60: #{baseline_gru_forward.1} parent=1 // pred_region
      _
    $region61: #{baseline_gru_forward.1} parent=1 // pred_fallthru
      _
    // Predicated region
    $region62: #{baseline_gru_forward.1} parent=1 // pred_check
      _
    $region63: #{baseline_gru_forward.1} parent=1 // pred_check_branch
      %3603 = sbr.rel (0) target = $region65
    $region64: #{baseline_gru_forward.1} parent=1 // pred_region
      _
    $region65: #{baseline_gru_forward.1} parent=1 // pred_fallthru
      _
    %3604 = vsyncpa [#allocation6], 1
    %3605 = vsyncpa [#allocation8], 1

</llo_original>
